<compile_context>
chip_gen: v5e
topology: v5e:2x2
jax: 0.10.0
libtpu: 0.0.40
codegen_flags: <defaults>
</compile_context>

<pallas_src>
import functools
import math

import jax
import jax.numpy as jnp
from jax import lax
from jax.experimental import pallas as pl
from jax.experimental.pallas import tpu as pltpu


def mhca_kernel(q_ref, kv_ref, posq_ref, poskv_ref,
                wq_ref, bq_ref, wk_ref, bk_ref, wv_ref, bv_ref,
                wf_ref, bf_ref, out_ref, comb_ref,
                *, num_heads, dim_per_head):
    """One grid step == one (batch, query-tile).  kv/pos are full per batch."""
    d = dim_per_head
    scale = 1.0 / math.sqrt(d)

    # Positional encoding is broadcast over batch (matches the in-place `+=`
    # in the PyTorch forward).  Cast MXU inputs to bf16, accumulate in f32.
    qf = (q_ref[0] + posq_ref[...]).astype(jnp.bfloat16)     # (TQ, C)
    kvf = (kv_ref[0] + poskv_ref[...]).astype(jnp.bfloat16)  # (HW, C)

    # Fused block-diagonal projections: one full-width matmul per Q/K/V instead
    # of num_heads tiny per-head matmuls.  Weights are pre-transposed (in, out).
    q_all = jnp.dot(qf, wq_ref[...], preferred_element_type=jnp.float32) + bq_ref[...]
    k_all = jnp.dot(kvf, wk_ref[...], preferred_element_type=jnp.float32) + bk_ref[...]
    v_all = jnp.dot(kvf, wv_ref[...], preferred_element_type=jnp.float32) + bv_ref[...]

    for h in range(num_heads):                       # static unrolled head loop
        q = q_all[:, h * d:(h + 1) * d].astype(jnp.bfloat16)   # (TQ, d)
        k = k_all[:, h * d:(h + 1) * d].astype(jnp.bfloat16)   # (HW, d)
        v = v_all[:, h * d:(h + 1) * d].astype(jnp.bfloat16)   # (HW, d)

        # q @ k^T without materializing a transposed k tile.
        s = lax.dot_general(q, k, dimension_numbers=(((1,), (1,)), ((), ())),
                            preferred_element_type=jnp.float32) * scale  # (TQ, HW)
        s = s - jnp.max(s, axis=-1, keepdims=True)
        p = jnp.exp(s)
        inv = pl.reciprocal(jnp.sum(p, axis=-1, keepdims=True), approx=True)
        attn = (p * inv).astype(jnp.bfloat16)

        # Write this head's output directly into the combined scratch slab.
        comb_ref[:, h * d:(h + 1) * d] = jnp.dot(
            attn, v, preferred_element_type=jnp.float32)

    combined = comb_ref[...].astype(jnp.bfloat16)                        # (TQ, C)
    out_ref[0] = (jnp.dot(combined, wf_ref[...],
                          preferred_element_type=jnp.float32) + bf_ref[...])


def pack_params(params, num_heads):
    """Host-side packing: block-diagonal, pre-transposed, bf16 weights."""
    nh, _, d = params["wq"].shape
    C = nh * d

    def block_diag_t(w):  # (nh, d, d) nn.Linear weights (out,in) -> (C, C) (in,out)
        return jax.scipy.linalg.block_diag(*[w[h].T for h in range(nh)])

    return {
        "wq": block_diag_t(params["wq"]).astype(jnp.bfloat16),
        "wk": block_diag_t(params["wk"]).astype(jnp.bfloat16),
        "wv": block_diag_t(params["wv"]).astype(jnp.bfloat16),
        "bq": params["bq"].reshape(1, C).astype(jnp.float32),
        "bk": params["bk"].reshape(1, C).astype(jnp.float32),
        "bv": params["bv"].reshape(1, C).astype(jnp.float32),
        "wf": params["wf"].T.astype(jnp.bfloat16),       # (in, out)
        "bf": params["bf"].reshape(1, C).astype(jnp.float32),
        "pos": params["pos"].astype(jnp.float32),
    }


def multi_head_cross_attention(query_features, key_value_features, params,
                               *, num_heads, height, width, q_tile=128):
    B, C, H, W = query_features.shape
    assert H == height and W == width
    HW = H * W
    d = C // num_heads
    tq = min(q_tile, HW)
    assert HW % tq == 0

    # Same memory reinterpretation as torch `.view(B, HW, -1)` on contiguous NCHW.
    qf = query_features.reshape(B, HW, C)
    kvf = key_value_features.reshape(B, HW, C)

    packed = pack_params(params, num_heads)
    kernel = functools.partial(mhca_kernel, num_heads=num_heads, dim_per_head=d)

    out = pl.pallas_call(
        kernel,
        out_shape=jax.ShapeDtypeStruct((B, HW, C), jnp.float32),
        grid=(B, HW // tq),
        in_specs=[
            pl.BlockSpec((1, tq, C), lambda b, qi: (b, qi, 0)),   # query tile
            pl.BlockSpec((1, HW, C), lambda b, qi: (b, 0, 0)),    # full key/value
            pl.BlockSpec((tq, C), lambda b, qi: (qi, 0)),         # pos (query rows)
            pl.BlockSpec((HW, C), lambda b, qi: (0, 0)),          # pos (all rows, kv)
            pl.BlockSpec((C, C), lambda b, qi: (0, 0)),           # Wq block-diag (bf16)
            pl.BlockSpec((1, C), lambda b, qi: (0, 0)),           # bq
            pl.BlockSpec((C, C), lambda b, qi: (0, 0)),           # Wk block-diag (bf16)
            pl.BlockSpec((1, C), lambda b, qi: (0, 0)),           # bk
            pl.BlockSpec((C, C), lambda b, qi: (0, 0)),           # Wv block-diag (bf16)
            pl.BlockSpec((1, C), lambda b, qi: (0, 0)),           # bv
            pl.BlockSpec((C, C), lambda b, qi: (0, 0)),           # Wf^T (bf16)
            pl.BlockSpec((1, C), lambda b, qi: (0, 0)),           # bf
        ],
        out_specs=pl.BlockSpec((1, tq, C), lambda b, qi: (b, qi, 0)),
        scratch_shapes=[pltpu.VMEM((tq, C), jnp.float32)],        # combined heads
        compiler_params=pltpu.CompilerParams(
            dimension_semantics=("parallel", "parallel")),
    )(qf, kvf, packed["pos"], packed["pos"],
      packed["wq"], packed["bq"], packed["wk"], packed["bk"],
      packed["wv"], packed["bv"], packed["wf"], packed["bf"])

    # Same memory reinterpretation as torch `.view(B, -1, H, W)`.
    return out.reshape(B, C, H, W)


def init_params(key, channels, num_heads, height, width):
    """Deterministic synthetic parameters matching the module's shapes."""
    d = channels // num_heads
    ks = jax.random.split(key, 9)
    return {
        "wq": 0.1 * jax.random.normal(ks[0], (num_heads, d, d), jnp.float32),
        "bq": 0.1 * jax.random.normal(ks[1], (num_heads, 1, d), jnp.float32),
        "wk": 0.1 * jax.random.normal(ks[2], (num_heads, d, d), jnp.float32),
        "bk": 0.1 * jax.random.normal(ks[3], (num_heads, 1, d), jnp.float32),
        "wv": 0.1 * jax.random.normal(ks[4], (num_heads, d, d), jnp.float32),
        "bv": 0.1 * jax.random.normal(ks[5], (num_heads, 1, d), jnp.float32),
        "wf": 0.1 * jax.random.normal(ks[6], (channels, channels), jnp.float32),
        "bf": 0.1 * jax.random.normal(ks[7], (1, channels), jnp.float32),
        "pos": jax.random.normal(ks[8], (height * width, channels), jnp.float32),
    }


def reference_jax(query_features, key_value_features, params,
                  *, num_heads, height, width):
    """Pure-JAX f32 reference replicating the PyTorch forward, for validation."""
    B, C, H, W = query_features.shape
    HW = H * W
    d = C // num_heads
    qf = query_features.reshape(B, HW, C) + params["pos"]
    kvf = key_value_features.reshape(B, HW, C) + params["pos"]
    heads = []
    for h in range(num_heads):
        qs = qf[:, :, h * d:(h + 1) * d]
        ks = kvf[:, :, h * d:(h + 1) * d]
        q = qs @ params["wq"][h].T + params["bq"][h]
        k = ks @ params["wk"][h].T + params["bk"][h]
        v = ks @ params["wv"][h].T + params["bv"][h]
        s = (q @ jnp.swapaxes(k, -2, -1)) / math.sqrt(d)
        attn = jax.nn.softmax(s, axis=-1)
        heads.append(attn @ v)
    combined = jnp.concatenate(heads, axis=-1)
    out = combined @ params["wf"].T + params["bf"]
    return out.reshape(B, C, H, W)


if __name__ == "__main__":
    batch, channels, num_heads, height, width = 2, 32, 4, 16, 16

    key = jax.random.PRNGKey(0)
    k_q, k_kv, k_p = jax.random.split(key, 3)
    query = jax.random.normal(k_q, (batch, channels, height, width), jnp.float32)
    keyval = jax.random.normal(k_kv, (batch, channels, height, width), jnp.float32)
    params = init_params(k_p, channels, num_heads, height, width)

    out = multi_head_cross_attention(query, keyval, params,
                                     num_heads=num_heads, height=height, width=width)
    out = jax.block_until_ready(out)

    ref = reference_jax(query, keyval, params,
                        num_heads=num_heads, height=height, width=width)
    assert out.shape == (batch, channels, height, width)
    # bf16 MXU inputs (f32 accumulation) + approx reciprocal -> loosened tolerance.
    assert jnp.allclose(out, ref, atol=2e-2, rtol=2e-2), "mismatch vs JAX reference"

    print("KERNEL_OK")
</pallas_src>

<mosaic_0001>
module attributes {stable_mosaic.version = 11 : i64} {
  func.func @mhca_kernel(%arg0: i32, %arg1: i32, %arg2: memref<1x128x32xf32, #tpu.memory_space<vmem>>, %arg3: memref<1x256x32xf32, #tpu.memory_space<vmem>>, %arg4: memref<128x32xf32, #tpu.memory_space<vmem>>, %arg5: memref<256x32xf32, #tpu.memory_space<vmem>>, %arg6: memref<32x32xbf16, #tpu.memory_space<vmem>>, %arg7: memref<1x32xf32, #tpu.memory_space<vmem>>, %arg8: memref<32x32xbf16, #tpu.memory_space<vmem>>, %arg9: memref<1x32xf32, #tpu.memory_space<vmem>>, %arg10: memref<32x32xbf16, #tpu.memory_space<vmem>>, %arg11: memref<1x32xf32, #tpu.memory_space<vmem>>, %arg12: memref<32x32xbf16, #tpu.memory_space<vmem>>, %arg13: memref<1x32xf32, #tpu.memory_space<vmem>>, %arg14: memref<1x128x32xf32, #tpu.memory_space<vmem>>, %arg15: memref<128x32xf32, #tpu.memory_space<vmem>>) attributes {dimension_semantics = [#tpu.dimension_semantics<parallel>, #tpu.dimension_semantics<parallel>], iteration_bounds = array<i64: 2, 2>, scalar_prefetch = 0 : i64, scratch_operands = 1 : i64, tpu.core_type = #tpu.core_type<tc>, window_params = [{transform_indices = @transform_0, window_bounds = array<i64: 1, 128, 32>}, {transform_indices = @transform_1, window_bounds = array<i64: 1, 256, 32>}, {transform_indices = @transform_2, window_bounds = array<i64: 128, 32>}, {pipeline_mode = #tpu.pipeline_mode<synchronous>, transform_indices = @transform_3, window_bounds = array<i64: 256, 32>}, {pipeline_mode = #tpu.pipeline_mode<synchronous>, transform_indices = @transform_4, window_bounds = array<i64: 32, 32>}, {pipeline_mode = #tpu.pipeline_mode<synchronous>, transform_indices = @transform_5, window_bounds = array<i64: 1, 32>}, {pipeline_mode = #tpu.pipeline_mode<synchronous>, transform_indices = @transform_6, window_bounds = array<i64: 32, 32>}, {pipeline_mode = #tpu.pipeline_mode<synchronous>, transform_indices = @transform_7, window_bounds = array<i64: 1, 32>}, {pipeline_mode = #tpu.pipeline_mode<synchronous>, transform_indices = @transform_8, window_bounds = array<i64: 32, 32>}, {pipeline_mode = #tpu.pipeline_mode<synchronous>, transform_indices = @transform_9, window_bounds = array<i64: 1, 32>}, {pipeline_mode = #tpu.pipeline_mode<synchronous>, transform_indices = @transform_10, window_bounds = array<i64: 32, 32>}, {pipeline_mode = #tpu.pipeline_mode<synchronous>, transform_indices = @transform_11, window_bounds = array<i64: 1, 32>}, {transform_indices = @transform_12, window_bounds = array<i64: 1, 128, 32>}]} {
    %c0 = arith.constant 0 : index
    %c0_0 = arith.constant 0 : index
    %c0_1 = arith.constant 0 : index
    %0 = vector.load %arg2[%c0, %c0_0, %c0_1] : memref<1x128x32xf32, #tpu.memory_space<vmem>>, vector<1x128x32xf32>
    %1 = vector.shape_cast %0 : vector<1x128x32xf32> to vector<128x32xf32>
    %c0_2 = arith.constant 0 : index
    %c0_3 = arith.constant 0 : index
    %2 = vector.load %arg4[%c0_2, %c0_3] : memref<128x32xf32, #tpu.memory_space<vmem>>, vector<128x32xf32>
    %3 = arith.addf %1, %2 : vector<128x32xf32>
    %4 = arith.truncf %3 : vector<128x32xf32> to vector<128x32xbf16>
    %c0_4 = arith.constant 0 : index
    %c0_5 = arith.constant 0 : index
    %c0_6 = arith.constant 0 : index
    %5 = vector.load %arg3[%c0_4, %c0_5, %c0_6] : memref<1x256x32xf32, #tpu.memory_space<vmem>>, vector<1x256x32xf32>
    %6 = vector.shape_cast %5 : vector<1x256x32xf32> to vector<256x32xf32>
    %c0_7 = arith.constant 0 : index
    %c0_8 = arith.constant 0 : index
    %7 = vector.load %arg5[%c0_7, %c0_8] : memref<256x32xf32, #tpu.memory_space<vmem>>, vector<256x32xf32>
    %8 = arith.addf %6, %7 : vector<256x32xf32>
    %9 = arith.truncf %8 : vector<256x32xf32> to vector<256x32xbf16>
    %c0_9 = arith.constant 0 : index
    %c0_10 = arith.constant 0 : index
    %10 = vector.load %arg6[%c0_9, %c0_10] : memref<32x32xbf16, #tpu.memory_space<vmem>>, vector<32x32xbf16>
    %cst = arith.constant dense<0.000000e+00> : vector<128x32xf32>
    %11 = tpu.matmul %4, %10, %cst {dimension_numbers = #tpu.dot_dimension_numbers<[1], [0], [0], [1], [0, 0, 1, 1], [], []>} : vector<128x32xbf16>, vector<32x32xbf16>, vector<128x32xf32> -> vector<128x32xf32>
    %c0_11 = arith.constant 0 : index
    %c0_12 = arith.constant 0 : index
    %12 = vector.load %arg7[%c0_11, %c0_12] : memref<1x32xf32, #tpu.memory_space<vmem>>, vector<1x32xf32>
    %13 = vector.broadcast %12 : vector<1x32xf32> to vector<128x32xf32>
    %14 = arith.addf %11, %13 : vector<128x32xf32>
    %c0_13 = arith.constant 0 : index
    %c0_14 = arith.constant 0 : index
    %15 = vector.load %arg8[%c0_13, %c0_14] : memref<32x32xbf16, #tpu.memory_space<vmem>>, vector<32x32xbf16>
    %cst_15 = arith.constant dense<0.000000e+00> : vector<256x32xf32>
    %16 = tpu.matmul %9, %15, %cst_15 {dimension_numbers = #tpu.dot_dimension_numbers<[1], [0], [0], [1], [0, 0, 1, 1], [], []>} : vector<256x32xbf16>, vector<32x32xbf16>, vector<256x32xf32> -> vector<256x32xf32>
    %c0_16 = arith.constant 0 : index
    %c0_17 = arith.constant 0 : index
    %17 = vector.load %arg9[%c0_16, %c0_17] : memref<1x32xf32, #tpu.memory_space<vmem>>, vector<1x32xf32>
    %18 = vector.broadcast %17 : vector<1x32xf32> to vector<256x32xf32>
    %19 = arith.addf %16, %18 : vector<256x32xf32>
    %c0_18 = arith.constant 0 : index
    %c0_19 = arith.constant 0 : index
    %20 = vector.load %arg10[%c0_18, %c0_19] : memref<32x32xbf16, #tpu.memory_space<vmem>>, vector<32x32xbf16>
    %cst_20 = arith.constant dense<0.000000e+00> : vector<256x32xf32>
    %21 = tpu.matmul %9, %20, %cst_20 {dimension_numbers = #tpu.dot_dimension_numbers<[1], [0], [0], [1], [0, 0, 1, 1], [], []>} : vector<256x32xbf16>, vector<32x32xbf16>, vector<256x32xf32> -> vector<256x32xf32>
    %c0_21 = arith.constant 0 : index
    %c0_22 = arith.constant 0 : index
    %22 = vector.load %arg11[%c0_21, %c0_22] : memref<1x32xf32, #tpu.memory_space<vmem>>, vector<1x32xf32>
    %23 = vector.broadcast %22 : vector<1x32xf32> to vector<256x32xf32>
    %24 = arith.addf %21, %23 : vector<256x32xf32>
    %25 = vector.extract_strided_slice %14 {offsets = [0, 0], sizes = [128, 8], strides = [1, 1]} : vector<128x32xf32> to vector<128x8xf32>
    %26 = arith.truncf %25 : vector<128x8xf32> to vector<128x8xbf16>
    %27 = vector.extract_strided_slice %19 {offsets = [0, 0], sizes = [256, 8], strides = [1, 1]} : vector<256x32xf32> to vector<256x8xf32>
    %28 = arith.truncf %27 : vector<256x8xf32> to vector<256x8xbf16>
    %29 = vector.extract_strided_slice %24 {offsets = [0, 0], sizes = [256, 8], strides = [1, 1]} : vector<256x32xf32> to vector<256x8xf32>
    %30 = arith.truncf %29 : vector<256x8xf32> to vector<256x8xbf16>
    %cst_23 = arith.constant dense<0.000000e+00> : vector<128x256xf32>
    %31 = tpu.matmul %26, %28, %cst_23 {dimension_numbers = #tpu.dot_dimension_numbers<[1], [1], [0], [0], [0, 0, 1, 0], [], []>} : vector<128x8xbf16>, vector<256x8xbf16>, vector<128x256xf32> -> vector<128x256xf32>
    %cst_24 = arith.constant 0.353553385 : f32
    %32 = vector.broadcast %cst_24 : f32 to vector<128x256xf32>
    %33 = arith.mulf %31, %32 : vector<128x256xf32>
    %cst_25 = arith.constant dense<0xFF800000> : vector<128xf32>
    %34 = vector.multi_reduction <maximumf>, %33, %cst_25 [1] : vector<128x256xf32> to vector<128xf32>
    %35 = vector.shape_cast %34 : vector<128xf32> to vector<128x1xf32>
    %36 = vector.broadcast %35 : vector<128x1xf32> to vector<128x256xf32>
    %37 = arith.subf %33, %36 : vector<128x256xf32>
    %38 = math.exp %37 : vector<128x256xf32>
    %cst_26 = arith.constant dense<0.000000e+00> : vector<128xf32>
    %39 = vector.multi_reduction <add>, %38, %cst_26 [1] : vector<128x256xf32> to vector<128xf32>
    %40 = vector.shape_cast %39 : vector<128xf32> to vector<128x1xf32>
    %41 = tpu.reciprocal %40 {approx = true} : vector<128x1xf32> -> vector<128x1xf32>
    %42 = vector.broadcast %41 : vector<128x1xf32> to vector<128x256xf32>
    %43 = arith.mulf %38, %42 : vector<128x256xf32>
    %44 = arith.truncf %43 : vector<128x256xf32> to vector<128x256xbf16>
    %cst_27 = arith.constant dense<0.000000e+00> : vector<128x8xf32>
    %45 = tpu.matmul %44, %30, %cst_27 {dimension_numbers = #tpu.dot_dimension_numbers<[1], [0], [0], [1], [0, 0, 1, 1], [], []>} : vector<128x256xbf16>, vector<256x8xbf16>, vector<128x8xf32> -> vector<128x8xf32>
    %c0_28 = arith.constant 0 : index
    %c0_29 = arith.constant 0 : index
    %46 = vector.load %arg15[%c0_28, %c0_29] : memref<128x32xf32, #tpu.memory_space<vmem>>, vector<128x8xf32>
    tpu.vector_store %arg15[%c0_28, %c0_29], %45 {strides = array<i32>} : memref<128x32xf32, #tpu.memory_space<vmem>>, vector<128x8xf32>,
    %47 = vector.extract_strided_slice %14 {offsets = [0, 8], sizes = [128, 8], strides = [1, 1]} : vector<128x32xf32> to vector<128x8xf32>
    %48 = arith.truncf %47 : vector<128x8xf32> to vector<128x8xbf16>
    %49 = vector.extract_strided_slice %19 {offsets = [0, 8], sizes = [256, 8], strides = [1, 1]} : vector<256x32xf32> to vector<256x8xf32>
    %50 = arith.truncf %49 : vector<256x8xf32> to vector<256x8xbf16>
    %51 = vector.extract_strided_slice %24 {offsets = [0, 8], sizes = [256, 8], strides = [1, 1]} : vector<256x32xf32> to vector<256x8xf32>
    %52 = arith.truncf %51 : vector<256x8xf32> to vector<256x8xbf16>
    %cst_30 = arith.constant dense<0.000000e+00> : vector<128x256xf32>
    %53 = tpu.matmul %48, %50, %cst_30 {dimension_numbers = #tpu.dot_dimension_numbers<[1], [1], [0], [0], [0, 0, 1, 0], [], []>} : vector<128x8xbf16>, vector<256x8xbf16>, vector<128x256xf32> -> vector<128x256xf32>
    %cst_31 = arith.constant 0.353553385 : f32
    %54 = vector.broadcast %cst_31 : f32 to vector<128x256xf32>
    %55 = arith.mulf %53, %54 : vector<128x256xf32>
    %cst_32 = arith.constant dense<0xFF800000> : vector<128xf32>
    %56 = vector.multi_reduction <maximumf>, %55, %cst_32 [1] : vector<128x256xf32> to vector<128xf32>
    %57 = vector.shape_cast %56 : vector<128xf32> to vector<128x1xf32>
    %58 = vector.broadcast %57 : vector<128x1xf32> to vector<128x256xf32>
    %59 = arith.subf %55, %58 : vector<128x256xf32>
    %60 = math.exp %59 : vector<128x256xf32>
    %cst_33 = arith.constant dense<0.000000e+00> : vector<128xf32>
    %61 = vector.multi_reduction <add>, %60, %cst_33 [1] : vector<128x256xf32> to vector<128xf32>
    %62 = vector.shape_cast %61 : vector<128xf32> to vector<128x1xf32>
    %63 = tpu.reciprocal %62 {approx = true} : vector<128x1xf32> -> vector<128x1xf32>
    %64 = vector.broadcast %63 : vector<128x1xf32> to vector<128x256xf32>
    %65 = arith.mulf %60, %64 : vector<128x256xf32>
    %66 = arith.truncf %65 : vector<128x256xf32> to vector<128x256xbf16>
    %cst_34 = arith.constant dense<0.000000e+00> : vector<128x8xf32>
    %67 = tpu.matmul %66, %52, %cst_34 {dimension_numbers = #tpu.dot_dimension_numbers<[1], [0], [0], [1], [0, 0, 1, 1], [], []>} : vector<128x256xbf16>, vector<256x8xbf16>, vector<128x8xf32> -> vector<128x8xf32>
    %c0_35 = arith.constant 0 : index
    %c8 = arith.constant 8 : index
    %68 = vector.load %arg15[%c0_35, %c8] : memref<128x32xf32, #tpu.memory_space<vmem>>, vector<128x8xf32>
    tpu.vector_store %arg15[%c0_35, %c8], %67 {strides = array<i32>} : memref<128x32xf32, #tpu.memory_space<vmem>>, vector<128x8xf32>,
    %69 = vector.extract_strided_slice %14 {offsets = [0, 16], sizes = [128, 8], strides = [1, 1]} : vector<128x32xf32> to vector<128x8xf32>
    %70 = arith.truncf %69 : vector<128x8xf32> to vector<128x8xbf16>
    %71 = vector.extract_strided_slice %19 {offsets = [0, 16], sizes = [256, 8], strides = [1, 1]} : vector<256x32xf32> to vector<256x8xf32>
    %72 = arith.truncf %71 : vector<256x8xf32> to vector<256x8xbf16>
    %73 = vector.extract_strided_slice %24 {offsets = [0, 16], sizes = [256, 8], strides = [1, 1]} : vector<256x32xf32> to vector<256x8xf32>
    %74 = arith.truncf %73 : vector<256x8xf32> to vector<256x8xbf16>
    %cst_36 = arith.constant dense<0.000000e+00> : vector<128x256xf32>
    %75 = tpu.matmul %70, %72, %cst_36 {dimension_numbers = #tpu.dot_dimension_numbers<[1], [1], [0], [0], [0, 0, 1, 0], [], []>} : vector<128x8xbf16>, vector<256x8xbf16>, vector<128x256xf32> -> vector<128x256xf32>
    %cst_37 = arith.constant 0.353553385 : f32
    %76 = vector.broadcast %cst_37 : f32 to vector<128x256xf32>
    %77 = arith.mulf %75, %76 : vector<128x256xf32>
    %cst_38 = arith.constant dense<0xFF800000> : vector<128xf32>
    %78 = vector.multi_reduction <maximumf>, %77, %cst_38 [1] : vector<128x256xf32> to vector<128xf32>
    %79 = vector.shape_cast %78 : vector<128xf32> to vector<128x1xf32>
    %80 = vector.broadcast %79 : vector<128x1xf32> to vector<128x256xf32>
    %81 = arith.subf %77, %80 : vector<128x256xf32>
    %82 = math.exp %81 : vector<128x256xf32>
    %cst_39 = arith.constant dense<0.000000e+00> : vector<128xf32>
    %83 = vector.multi_reduction <add>, %82, %cst_39 [1] : vector<128x256xf32> to vector<128xf32>
    %84 = vector.shape_cast %83 : vector<128xf32> to vector<128x1xf32>
    %85 = tpu.reciprocal %84 {approx = true} : vector<128x1xf32> -> vector<128x1xf32>
    %86 = vector.broadcast %85 : vector<128x1xf32> to vector<128x256xf32>
    %87 = arith.mulf %82, %86 : vector<128x256xf32>
    %88 = arith.truncf %87 : vector<128x256xf32> to vector<128x256xbf16>
    %cst_40 = arith.constant dense<0.000000e+00> : vector<128x8xf32>
    %89 = tpu.matmul %88, %74, %cst_40 {dimension_numbers = #tpu.dot_dimension_numbers<[1], [0], [0], [1], [0, 0, 1, 1], [], []>} : vector<128x256xbf16>, vector<256x8xbf16>, vector<128x8xf32> -> vector<128x8xf32>
    %c0_41 = arith.constant 0 : index
    %c16 = arith.constant 16 : index
    %90 = vector.load %arg15[%c0_41, %c16] : memref<128x32xf32, #tpu.memory_space<vmem>>, vector<128x8xf32>
    tpu.vector_store %arg15[%c0_41, %c16], %89 {strides = array<i32>} : memref<128x32xf32, #tpu.memory_space<vmem>>, vector<128x8xf32>,
    %91 = vector.extract_strided_slice %14 {offsets = [0, 24], sizes = [128, 8], strides = [1, 1]} : vector<128x32xf32> to vector<128x8xf32>
    %92 = arith.truncf %91 : vector<128x8xf32> to vector<128x8xbf16>
    %93 = vector.extract_strided_slice %19 {offsets = [0, 24], sizes = [256, 8], strides = [1, 1]} : vector<256x32xf32> to vector<256x8xf32>
    %94 = arith.truncf %93 : vector<256x8xf32> to vector<256x8xbf16>
    %95 = vector.extract_strided_slice %24 {offsets = [0, 24], sizes = [256, 8], strides = [1, 1]} : vector<256x32xf32> to vector<256x8xf32>
    %96 = arith.truncf %95 : vector<256x8xf32> to vector<256x8xbf16>
    %cst_42 = arith.constant dense<0.000000e+00> : vector<128x256xf32>
    %97 = tpu.matmul %92, %94, %cst_42 {dimension_numbers = #tpu.dot_dimension_numbers<[1], [1], [0], [0], [0, 0, 1, 0], [], []>} : vector<128x8xbf16>, vector<256x8xbf16>, vector<128x256xf32> -> vector<128x256xf32>
    %cst_43 = arith.constant 0.353553385 : f32
    %98 = vector.broadcast %cst_43 : f32 to vector<128x256xf32>
    %99 = arith.mulf %97, %98 : vector<128x256xf32>
    %cst_44 = arith.constant dense<0xFF800000> : vector<128xf32>
    %100 = vector.multi_reduction <maximumf>, %99, %cst_44 [1] : vector<128x256xf32> to vector<128xf32>
    %101 = vector.shape_cast %100 : vector<128xf32> to vector<128x1xf32>
    %102 = vector.broadcast %101 : vector<128x1xf32> to vector<128x256xf32>
    %103 = arith.subf %99, %102 : vector<128x256xf32>
    %104 = math.exp %103 : vector<128x256xf32>
    %cst_45 = arith.constant dense<0.000000e+00> : vector<128xf32>
    %105 = vector.multi_reduction <add>, %104, %cst_45 [1] : vector<128x256xf32> to vector<128xf32>
    %106 = vector.shape_cast %105 : vector<128xf32> to vector<128x1xf32>
    %107 = tpu.reciprocal %106 {approx = true} : vector<128x1xf32> -> vector<128x1xf32>
    %108 = vector.broadcast %107 : vector<128x1xf32> to vector<128x256xf32>
    %109 = arith.mulf %104, %108 : vector<128x256xf32>
    %110 = arith.truncf %109 : vector<128x256xf32> to vector<128x256xbf16>
    %cst_46 = arith.constant dense<0.000000e+00> : vector<128x8xf32>
    %111 = tpu.matmul %110, %96, %cst_46 {dimension_numbers = #tpu.dot_dimension_numbers<[1], [0], [0], [1], [0, 0, 1, 1], [], []>} : vector<128x256xbf16>, vector<256x8xbf16>, vector<128x8xf32> -> vector<128x8xf32>
    %c0_47 = arith.constant 0 : index
    %c24 = arith.constant 24 : index
    %112 = vector.load %arg15[%c0_47, %c24] : memref<128x32xf32, #tpu.memory_space<vmem>>, vector<128x8xf32>
    tpu.vector_store %arg15[%c0_47, %c24], %111 {strides = array<i32>} : memref<128x32xf32, #tpu.memory_space<vmem>>, vector<128x8xf32>,
    %c0_48 = arith.constant 0 : index
    %c0_49 = arith.constant 0 : index
    %113 = vector.load %arg15[%c0_48, %c0_49] : memref<128x32xf32, #tpu.memory_space<vmem>>, vector<128x32xf32>
    %114 = arith.truncf %113 : vector<128x32xf32> to vector<128x32xbf16>
    %c0_50 = arith.constant 0 : index
    %c0_51 = arith.constant 0 : index
    %115 = vector.load %arg12[%c0_50, %c0_51] : memref<32x32xbf16, #tpu.memory_space<vmem>>, vector<32x32xbf16>
    %cst_52 = arith.constant dense<0.000000e+00> : vector<128x32xf32>
    %116 = tpu.matmul %114, %115, %cst_52 {dimension_numbers = #tpu.dot_dimension_numbers<[1], [0], [0], [1], [0, 0, 1, 1], [], []>} : vector<128x32xbf16>, vector<32x32xbf16>, vector<128x32xf32> -> vector<128x32xf32>
    %c0_53 = arith.constant 0 : index
    %c0_54 = arith.constant 0 : index
    %117 = vector.load %arg13[%c0_53, %c0_54] : memref<1x32xf32, #tpu.memory_space<vmem>>, vector<1x32xf32>
    %118 = vector.broadcast %117 : vector<1x32xf32> to vector<128x32xf32>
    %119 = arith.addf %116, %118 : vector<128x32xf32>
    %c0_55 = arith.constant 0 : index
    %c0_56 = arith.constant 0 : index
    %c0_57 = arith.constant 0 : index
    %120 = vector.load %arg14[%c0_55, %c0_56, %c0_57] : memref<1x128x32xf32, #tpu.memory_space<vmem>>, vector<1x128x32xf32>
    %121 = vector.shape_cast %120 : vector<1x128x32xf32> to vector<128x32xf32>
    %122 = vector.shape_cast %119 : vector<128x32xf32> to vector<1x128x32xf32>
    tpu.vector_store %arg14[%c0_55, %c0_56, %c0_57], %122 {strides = array<i32>} : memref<1x128x32xf32, #tpu.memory_space<vmem>>, vector<1x128x32xf32>,
    return
  }
  func.func @transform_0(%arg0: i32, %arg1: i32) -> (i32, i32, i32) {
    %c0_i32 = arith.constant 0 : i32
    %c0_i32_0 = arith.constant 0 : i32
    return %arg0, %arg1, %c0_i32 : i32, i32, i32
  }
  func.func @transform_1(%arg0: i32, %arg1: i32) -> (i32, i32, i32) {
    %c0_i32 = arith.constant 0 : i32
    %c0_i32_0 = arith.constant 0 : i32
    %c0_i32_1 = arith.constant 0 : i32
    return %arg0, %c0_i32, %c0_i32_0 : i32, i32, i32
  }
  func.func @transform_2(%arg0: i32, %arg1: i32) -> (i32, i32) {
    %c0_i32 = arith.constant 0 : i32
    %c0_i32_0 = arith.constant 0 : i32
    return %arg1, %c0_i32 : i32, i32
  }
  func.func @transform_3(%arg0: i32, %arg1: i32) -> (i32, i32) {
    %c0_i32 = arith.constant 0 : i32
    %c0_i32_0 = arith.constant 0 : i32
    %c0_i32_1 = arith.constant 0 : i32
    return %c0_i32, %c0_i32_0 : i32, i32
  }
  func.func @transform_4(%arg0: i32, %arg1: i32) -> (i32, i32) {
    %c0_i32 = arith.constant 0 : i32
    %c0_i32_0 = arith.constant 0 : i32
    %c0_i32_1 = arith.constant 0 : i32
    return %c0_i32, %c0_i32_0 : i32, i32
  }
  func.func @transform_5(%arg0: i32, %arg1: i32) -> (i32, i32) {
    %c0_i32 = arith.constant 0 : i32
    %c0_i32_0 = arith.constant 0 : i32
    %c0_i32_1 = arith.constant 0 : i32
    return %c0_i32, %c0_i32_0 : i32, i32
  }
  func.func @transform_6(%arg0: i32, %arg1: i32) -> (i32, i32) {
    %c0_i32 = arith.constant 0 : i32
    %c0_i32_0 = arith.constant 0 : i32
    %c0_i32_1 = arith.constant 0 : i32
    return %c0_i32, %c0_i32_0 : i32, i32
  }
  func.func @transform_7(%arg0: i32, %arg1: i32) -> (i32, i32) {
    %c0_i32 = arith.constant 0 : i32
    %c0_i32_0 = arith.constant 0 : i32
    %c0_i32_1 = arith.constant 0 : i32
    return %c0_i32, %c0_i32_0 : i32, i32
  }
  func.func @transform_8(%arg0: i32, %arg1: i32) -> (i32, i32) {
    %c0_i32 = arith.constant 0 : i32
    %c0_i32_0 = arith.constant 0 : i32
    %c0_i32_1 = arith.constant 0 : i32
    return %c0_i32, %c0_i32_0 : i32, i32
  }
  func.func @transform_9(%arg0: i32, %arg1: i32) -> (i32, i32) {
    %c0_i32 = arith.constant 0 : i32
    %c0_i32_0 = arith.constant 0 : i32
    %c0_i32_1 = arith.constant 0 : i32
    return %c0_i32, %c0_i32_0 : i32, i32
  }
  func.func @transform_10(%arg0: i32, %arg1: i32) -> (i32, i32) {
    %c0_i32 = arith.constant 0 : i32
    %c0_i32_0 = arith.constant 0 : i32
    %c0_i32_1 = arith.constant 0 : i32
    return %c0_i32, %c0_i32_0 : i32, i32
  }
  func.func @transform_11(%arg0: i32, %arg1: i32) -> (i32, i32) {
    %c0_i32 = arith.constant 0 : i32
    %c0_i32_0 = arith.constant 0 : i32
    %c0_i32_1 = arith.constant 0 : i32
    return %c0_i32, %c0_i32_0 : i32, i32
  }
  func.func @transform_12(%arg0: i32, %arg1: i32) -> (i32, i32, i32) {
    %c0_i32 = arith.constant 0 : i32
    %c0_i32_0 = arith.constant 0 : i32
    return %arg0, %arg1, %c0_i32 : i32, i32, i32
  }
}

</mosaic_0001>

<llo_original>
// kernel: tpu_custom_call.1
$region0: #{tpu_custom_call.1}
  #allocation0 [shape = 'u32[]', space=smem, size = 0x4, offset = 0x4, fixed_abs, tag = 'smem constant byte address 0x4 - core index']
  #allocation1 [shape = 'u32[72,128]{1,0:T(1,128)}', space=vmem, size = 0x9000, scoped, tag = 'internal scratch']
  #allocation2 [shape = 'f32[128,32]{1,0:T(8,128)}', space=vmem, size = 0x10000, scoped, tag = 'scratch operand']
  %s0 = inlined_call_operand.vmem [shape: f32[2,256,32], index: 0, kind: input, shape index: {}]
  %s1 = inlined_call_operand.vmem [shape: f32[2,256,32], index: 1, kind: input, shape index: {}]
  %s2 = inlined_call_operand.vmem [shape: f32[256,32], index: 2, kind: input, shape index: {}]
  %s3 = inlined_call_operand.vmem [shape: f32[256,32], index: 3, kind: input, shape index: {}]
  %s4 = inlined_call_operand.vmem [shape: bf16[32,32], index: 4, kind: input, shape index: {}]
  %s5 = inlined_call_operand.vmem [shape: f32[1,32], index: 5, kind: input, shape index: {}]
  %s6 = inlined_call_operand.vmem [shape: bf16[32,32], index: 6, kind: input, shape index: {}]
  %s7 = inlined_call_operand.vmem [shape: f32[1,32], index: 7, kind: input, shape index: {}]
  %s8 = inlined_call_operand.vmem [shape: bf16[32,32], index: 8, kind: input, shape index: {}]
  %s9 = inlined_call_operand.vmem [shape: f32[1,32], index: 9, kind: input, shape index: {}]
  %s10 = inlined_call_operand.vmem [shape: bf16[32,32], index: 10, kind: input, shape index: {}]
  %s11 = inlined_call_operand.vmem [shape: f32[1,32], index: 11, kind: input, shape index: {}]
  %s12 = inlined_call_operand.vmem [shape: f32[2,256,32], index: 12, kind: output, shape index: {}]
  %s13 = sld [smem:[#allocation0]]
  $region81: #{tpu_custom_call.1} parent=0
    _
  %s15 = ssub.s32 1, %s13
  %s16 = scalar_select 0, %s15, %s13
  loop: start=0, step=1, limit=6
  $region2: #{tpu_custom_call.1} parent=0 // loop_pre_header
    _
  $region3: #{tpu_custom_call.1} parent=0 // loop_header
    %s18 = sphi 0, %s22
    %p19 = scmp.ge.s32.totalorder %s18, 6
    %s25 = sphi 0, %s37
    %s26 = sphi 0, %s33
    %s27 = sphi 0, %s25
    %s28 = sphi 0, %s26
    %s29 = sphi 0, %s27
    %s30 = sphi 0, %s28
    %s42 = sphi 0, %s44
    %s45 = sphi 0, %s42
    %s46 = sphi 0, %s45
    %s62 = sphi 0, %s46
    %s68 = sphi 0, %s70
    %s71 = sphi 0, %s68
    %s72 = sphi 0, %s71
    %s88 = sphi 0, %s72
    %s94 = sphi 0, %s96
    %s97 = sphi 0, %s94
    %s98 = sphi 0, %s97
    %s114 = sphi 0, %s98
    %s118 = sphi 0, %s118
    %s120 = sphi 0, %s118
    %s121 = sphi 0, %s120
    %s135 = sphi 0, %s121
    %s139 = sphi 0, %s139
    %s141 = sphi 0, %s139
    %s142 = sphi 0, %s141
    %s156 = sphi 0, %s142
    %s160 = sphi 0, %s160
    %s162 = sphi 0, %s160
    %s163 = sphi 0, %s162
    %s177 = sphi 0, %s163
    %s181 = sphi 0, %s181
    %s183 = sphi 0, %s181
    %s184 = sphi 0, %s183
    %s198 = sphi 0, %s184
    %s202 = sphi 0, %s202
    %s204 = sphi 0, %s202
    %s205 = sphi 0, %s204
    %s219 = sphi 0, %s205
    %s223 = sphi 0, %s223
    %s225 = sphi 0, %s223
    %s226 = sphi 0, %s225
    %s240 = sphi 0, %s226
    %s244 = sphi 0, %s244
    %s246 = sphi 0, %s244
    %s247 = sphi 0, %s246
    %s261 = sphi 0, %s247
    %s265 = sphi 0, %s265
    %s267 = sphi 0, %s265
    %s268 = sphi 0, %s267
    %s282 = sphi 0, %s268
    %s286 = sphi 0, %s286
    %s288 = sphi 0, %s286
    %s289 = sphi 0, %s288
    %s303 = sphi 0, %s289
    %s311 = sphi 0, %s313
    %s314 = sphi 0, %s311
    %s315 = sphi 0, %s314
    %s331 = sphi 0, %s315
  $region4: #{tpu_custom_call.1} parent=0 // loop_header_branch
    %21 = sbr.rel (%p19) target = $region8
  $region5: #{tpu_custom_call.1} parent=0 // loop_body
    %s23 = ssub.s32 %s18, 1
    %s24 = ssub.s32 %s18, 2
    %s31 = sadd.s32 1, %s26
    %p32 = scmp.ge.s32.totalorder %s31, 2
    %s33 = scalar_select %p32, 0, %s31
    %s34 = sadd.s32 1, %s25
    %s35 = scalar_select %p32, %s34, %s25
    %p36 = scmp.ge.s32.totalorder %s35, 2
    %s37 = scalar_select %p36, 0, %s35
    %s38 = ssub.s32 %s25, %s37
    %s39 = ssub.s32 %s26, %s33
    %s40 = sor.u32 %s38, %s39
    %p41 = scmp.eq.s32.totalorder %s40, 0
    %s43 = sadd.s32 %s42, 1
    %s44 = scalar_select %p41, %s42, %s43
    %p47 = pneg %p41
    %p48 = scmp.eq.s32.totalorder %s18, 3
    %p49 = por %p47, %p48
    %p50 = scmp.ne.s32.totalorder %s42, %s45
    %p51 = scmp.eq.s32.totalorder %s18, 0
    %p52 = por %p50, %p51
    %p53 = scmp.ne.s32.totalorder %s42, %s45
    %p54 = scmp.eq.s32.totalorder %s23, 3
    %p55 = por %p53, %p54
    %p56 = scmp.ne.s32.totalorder %s45, %s46
    %p57 = scmp.eq.s32.totalorder %s23, 0
    %p58 = por %p56, %p57
    %p59 = scmp.ne.s32.totalorder %s45, %s46
    %p60 = scmp.eq.s32.totalorder %s24, 3
    %p61 = por %p59, %p60
    %p63 = scmp.ne.s32.totalorder %s46, %s62
    %p64 = scmp.eq.s32.totalorder %s24, 0
    %p65 = por %p63, %p64
    %s66 = ssub.s32 %s25, %s37
    %p67 = scmp.eq.s32.totalorder %s66, 0
    %s69 = sadd.s32 %s68, 1
    %s70 = scalar_select %p67, %s68, %s69
    %p73 = pneg %p67
    %p74 = scmp.eq.s32.totalorder %s18, 3
    %p75 = por %p73, %p74
    %p76 = scmp.ne.s32.totalorder %s68, %s71
    %p77 = scmp.eq.s32.totalorder %s18, 0
    %p78 = por %p76, %p77
    %p79 = scmp.ne.s32.totalorder %s68, %s71
    %p80 = scmp.eq.s32.totalorder %s23, 3
    %p81 = por %p79, %p80
    %p82 = scmp.ne.s32.totalorder %s71, %s72
    %p83 = scmp.eq.s32.totalorder %s23, 0
    %p84 = por %p82, %p83
    %p85 = scmp.ne.s32.totalorder %s71, %s72
    %p86 = scmp.eq.s32.totalorder %s24, 3
    %p87 = por %p85, %p86
    %p89 = scmp.ne.s32.totalorder %s72, %s88
    %p90 = scmp.eq.s32.totalorder %s24, 0
    %p91 = por %p89, %p90
    %s92 = ssub.s32 %s26, %s33
    %p93 = scmp.eq.s32.totalorder %s92, 0
    %s95 = sadd.s32 %s94, 1
    %s96 = scalar_select %p93, %s94, %s95
    %p99 = pneg %p93
    %p100 = scmp.eq.s32.totalorder %s18, 3
    %p101 = por %p99, %p100
    %p102 = scmp.ne.s32.totalorder %s94, %s97
    %p103 = scmp.eq.s32.totalorder %s18, 0
    %p104 = por %p102, %p103
    %p105 = scmp.ne.s32.totalorder %s94, %s97
    %p106 = scmp.eq.s32.totalorder %s23, 3
    %p107 = por %p105, %p106
    %p108 = scmp.ne.s32.totalorder %s97, %s98
    %p109 = scmp.eq.s32.totalorder %s23, 0
    %p110 = por %p108, %p109
    %p111 = scmp.ne.s32.totalorder %s97, %s98
    %p112 = scmp.eq.s32.totalorder %s24, 3
    %p113 = por %p111, %p112
    %p115 = scmp.ne.s32.totalorder %s98, %s114
    %p116 = scmp.eq.s32.totalorder %s24, 0
    %p117 = por %p115, %p116
    %s119 = sadd.s32 %s118, 1
    %p122 = scmp.eq.s32.totalorder %s18, 3
    %p123 = scmp.ne.s32.totalorder %s118, %s120
    %p124 = scmp.eq.s32.totalorder %s18, 0
    %p125 = por %p123, %p124
    %p126 = scmp.ne.s32.totalorder %s118, %s120
    %p127 = scmp.eq.s32.totalorder %s23, 3
    %p128 = por %p126, %p127
    %p129 = scmp.ne.s32.totalorder %s120, %s121
    %p130 = scmp.eq.s32.totalorder %s23, 0
    %p131 = por %p129, %p130
    %p132 = scmp.ne.s32.totalorder %s120, %s121
    %p133 = scmp.eq.s32.totalorder %s24, 3
    %p134 = por %p132, %p133
    %p136 = scmp.ne.s32.totalorder %s121, %s135
    %p137 = scmp.eq.s32.totalorder %s24, 0
    %p138 = por %p136, %p137
    %s140 = sadd.s32 %s139, 1
    %p143 = scmp.eq.s32.totalorder %s18, 3
    %p144 = scmp.ne.s32.totalorder %s139, %s141
    %p145 = scmp.eq.s32.totalorder %s18, 0
    %p146 = por %p144, %p145
    %p147 = scmp.ne.s32.totalorder %s139, %s141
    %p148 = scmp.eq.s32.totalorder %s23, 3
    %p149 = por %p147, %p148
    %p150 = scmp.ne.s32.totalorder %s141, %s142
    %p151 = scmp.eq.s32.totalorder %s23, 0
    %p152 = por %p150, %p151
    %p153 = scmp.ne.s32.totalorder %s141, %s142
    %p154 = scmp.eq.s32.totalorder %s24, 3
    %p155 = por %p153, %p154
    %p157 = scmp.ne.s32.totalorder %s142, %s156
    %p158 = scmp.eq.s32.totalorder %s24, 0
    %p159 = por %p157, %p158
    %s161 = sadd.s32 %s160, 1
    %p164 = scmp.eq.s32.totalorder %s18, 3
    %p165 = scmp.ne.s32.totalorder %s160, %s162
    %p166 = scmp.eq.s32.totalorder %s18, 0
    %p167 = por %p165, %p166
    %p168 = scmp.ne.s32.totalorder %s160, %s162
    %p169 = scmp.eq.s32.totalorder %s23, 3
    %p170 = por %p168, %p169
    %p171 = scmp.ne.s32.totalorder %s162, %s163
    %p172 = scmp.eq.s32.totalorder %s23, 0
    %p173 = por %p171, %p172
    %p174 = scmp.ne.s32.totalorder %s162, %s163
    %p175 = scmp.eq.s32.totalorder %s24, 3
    %p176 = por %p174, %p175
    %p178 = scmp.ne.s32.totalorder %s163, %s177
    %p179 = scmp.eq.s32.totalorder %s24, 0
    %p180 = por %p178, %p179
    %s182 = sadd.s32 %s181, 1
    %p185 = scmp.eq.s32.totalorder %s18, 3
    %p186 = scmp.ne.s32.totalorder %s181, %s183
    %p187 = scmp.eq.s32.totalorder %s18, 0
    %p188 = por %p186, %p187
    %p189 = scmp.ne.s32.totalorder %s181, %s183
    %p190 = scmp.eq.s32.totalorder %s23, 3
    %p191 = por %p189, %p190
    %p192 = scmp.ne.s32.totalorder %s183, %s184
    %p193 = scmp.eq.s32.totalorder %s23, 0
    %p194 = por %p192, %p193
    %p195 = scmp.ne.s32.totalorder %s183, %s184
    %p196 = scmp.eq.s32.totalorder %s24, 3
    %p197 = por %p195, %p196
    %p199 = scmp.ne.s32.totalorder %s184, %s198
    %p200 = scmp.eq.s32.totalorder %s24, 0
    %p201 = por %p199, %p200
    %s203 = sadd.s32 %s202, 1
    %p206 = scmp.eq.s32.totalorder %s18, 3
    %p207 = scmp.ne.s32.totalorder %s202, %s204
    %p208 = scmp.eq.s32.totalorder %s18, 0
    %p209 = por %p207, %p208
    %p210 = scmp.ne.s32.totalorder %s202, %s204
    %p211 = scmp.eq.s32.totalorder %s23, 3
    %p212 = por %p210, %p211
    %p213 = scmp.ne.s32.totalorder %s204, %s205
    %p214 = scmp.eq.s32.totalorder %s23, 0
    %p215 = por %p213, %p214
    %p216 = scmp.ne.s32.totalorder %s204, %s205
    %p217 = scmp.eq.s32.totalorder %s24, 3
    %p218 = por %p216, %p217
    %p220 = scmp.ne.s32.totalorder %s205, %s219
    %p221 = scmp.eq.s32.totalorder %s24, 0
    %p222 = por %p220, %p221
    %s224 = sadd.s32 %s223, 1
    %p227 = scmp.eq.s32.totalorder %s18, 3
    %p228 = scmp.ne.s32.totalorder %s223, %s225
    %p229 = scmp.eq.s32.totalorder %s18, 0
    %p230 = por %p228, %p229
    %p231 = scmp.ne.s32.totalorder %s223, %s225
    %p232 = scmp.eq.s32.totalorder %s23, 3
    %p233 = por %p231, %p232
    %p234 = scmp.ne.s32.totalorder %s225, %s226
    %p235 = scmp.eq.s32.totalorder %s23, 0
    %p236 = por %p234, %p235
    %p237 = scmp.ne.s32.totalorder %s225, %s226
    %p238 = scmp.eq.s32.totalorder %s24, 3
    %p239 = por %p237, %p238
    %p241 = scmp.ne.s32.totalorder %s226, %s240
    %p242 = scmp.eq.s32.totalorder %s24, 0
    %p243 = por %p241, %p242
    %s245 = sadd.s32 %s244, 1
    %p248 = scmp.eq.s32.totalorder %s18, 3
    %p249 = scmp.ne.s32.totalorder %s244, %s246
    %p250 = scmp.eq.s32.totalorder %s18, 0
    %p251 = por %p249, %p250
    %p252 = scmp.ne.s32.totalorder %s244, %s246
    %p253 = scmp.eq.s32.totalorder %s23, 3
    %p254 = por %p252, %p253
    %p255 = scmp.ne.s32.totalorder %s246, %s247
    %p256 = scmp.eq.s32.totalorder %s23, 0
    %p257 = por %p255, %p256
    %p258 = scmp.ne.s32.totalorder %s246, %s247
    %p259 = scmp.eq.s32.totalorder %s24, 3
    %p260 = por %p258, %p259
    %p262 = scmp.ne.s32.totalorder %s247, %s261
    %p263 = scmp.eq.s32.totalorder %s24, 0
    %p264 = por %p262, %p263
    %s266 = sadd.s32 %s265, 1
    %p269 = scmp.eq.s32.totalorder %s18, 3
    %p270 = scmp.ne.s32.totalorder %s265, %s267
    %p271 = scmp.eq.s32.totalorder %s18, 0
    %p272 = por %p270, %p271
    %p273 = scmp.ne.s32.totalorder %s265, %s267
    %p274 = scmp.eq.s32.totalorder %s23, 3
    %p275 = por %p273, %p274
    %p276 = scmp.ne.s32.totalorder %s267, %s268
    %p277 = scmp.eq.s32.totalorder %s23, 0
    %p278 = por %p276, %p277
    %p279 = scmp.ne.s32.totalorder %s267, %s268
    %p280 = scmp.eq.s32.totalorder %s24, 3
    %p281 = por %p279, %p280
    %p283 = scmp.ne.s32.totalorder %s268, %s282
    %p284 = scmp.eq.s32.totalorder %s24, 0
    %p285 = por %p283, %p284
    %s287 = sadd.s32 %s286, 1
    %p290 = scmp.eq.s32.totalorder %s18, 3
    %p291 = scmp.ne.s32.totalorder %s286, %s288
    %p292 = scmp.eq.s32.totalorder %s18, 0
    %p293 = por %p291, %p292
    %p294 = scmp.ne.s32.totalorder %s286, %s288
    %p295 = scmp.eq.s32.totalorder %s23, 3
    %p296 = por %p294, %p295
    %p297 = scmp.ne.s32.totalorder %s288, %s289
    %p298 = scmp.eq.s32.totalorder %s23, 0
    %p299 = por %p297, %p298
    %p300 = scmp.ne.s32.totalorder %s288, %s289
    %p301 = scmp.eq.s32.totalorder %s24, 3
    %p302 = por %p300, %p301
    %p304 = scmp.ne.s32.totalorder %s289, %s303
    %p305 = scmp.eq.s32.totalorder %s24, 0
    %p306 = por %p304, %p305
    %s307 = ssub.s32 %s25, %s37
    %s308 = ssub.s32 %s26, %s33
    %s309 = sor.u32 %s307, %s308
    %p310 = scmp.eq.s32.totalorder %s309, 0
    %s312 = sadd.s32 %s311, 1
    %s313 = scalar_select %p310, %s311, %s312
    %p316 = pneg %p310
    %p317 = scmp.eq.s32.totalorder %s18, 3
    %p318 = por %p316, %p317
    %p319 = scmp.ne.s32.totalorder %s311, %s314
    %p320 = scmp.eq.s32.totalorder %s18, 0
    %p321 = por %p319, %p320
    %p322 = scmp.ne.s32.totalorder %s311, %s314
    %p323 = scmp.eq.s32.totalorder %s23, 3
    %p324 = por %p322, %p323
    %p325 = scmp.ne.s32.totalorder %s314, %s315
    %p326 = scmp.eq.s32.totalorder %s23, 0
    %p327 = por %p325, %p326
    %p328 = scmp.ne.s32.totalorder %s314, %s315
    %p329 = scmp.eq.s32.totalorder %s24, 3
    %p330 = por %p328, %p329
    %p332 = scmp.ne.s32.totalorder %s315, %s331
    %p333 = scmp.eq.s32.totalorder %s24, 0
    %p334 = por %p332, %p333
    %p335 = scmp.le.s32.totalorder 1, %s18
    %p336 = scmp.lt.s32.totalorder %s18, 5
    %p337 = pnand %p335, %p336
    %p338 = pneg %p337
    // Predicated region
    $region9: #{tpu_custom_call.1} parent=5 // pred_check
      _
    $region10: #{tpu_custom_call.1} parent=5 // pred_check_branch
      %340 = sbr.rel (%p337) target = $region12
    $region11: #{tpu_custom_call.1} parent=5 // pred_region
      %s341 = ssub.s32 %s18, 1
      // Predicated region
      $region13: #{tpu_custom_call.1} parent=11 // pred_check
        %p342 = pneg %p131
      $region14: #{tpu_custom_call.1} parent=11 // pred_check_branch
        %344 = sbr.rel (%p342) target = $region16
      $region15: #{tpu_custom_call.1} parent=11 // pred_region
        _
      $region16: #{tpu_custom_call.1} parent=11 // pred_fallthru
        _
      // Predicated region
      $region17: #{tpu_custom_call.1} parent=11 // pred_check
        %p345 = pneg %p152
      $region18: #{tpu_custom_call.1} parent=11 // pred_check_branch
        %347 = sbr.rel (%p345) target = $region20
      $region19: #{tpu_custom_call.1} parent=11 // pred_region
        _
      $region20: #{tpu_custom_call.1} parent=11 // pred_fallthru
        _
      // Predicated region
      $region21: #{tpu_custom_call.1} parent=11 // pred_check
        %p348 = pneg %p173
      $region22: #{tpu_custom_call.1} parent=11 // pred_check_branch
        %350 = sbr.rel (%p348) target = $region24
      $region23: #{tpu_custom_call.1} parent=11 // pred_region
        _
      $region24: #{tpu_custom_call.1} parent=11 // pred_fallthru
        _
      // Predicated region
      $region25: #{tpu_custom_call.1} parent=11 // pred_check
        %p351 = pneg %p194
      $region26: #{tpu_custom_call.1} parent=11 // pred_check_branch
        %353 = sbr.rel (%p351) target = $region28
      $region27: #{tpu_custom_call.1} parent=11 // pred_region
        _
      $region28: #{tpu_custom_call.1} parent=11 // pred_fallthru
        _
      // Predicated region
      $region29: #{tpu_custom_call.1} parent=11 // pred_check
        %p354 = pneg %p215
      $region30: #{tpu_custom_call.1} parent=11 // pred_check_branch
        %356 = sbr.rel (%p354) target = $region32
      $region31: #{tpu_custom_call.1} parent=11 // pred_region
        _
      $region32: #{tpu_custom_call.1} parent=11 // pred_fallthru
        _
      // Predicated region
      $region33: #{tpu_custom_call.1} parent=11 // pred_check
        %p357 = pneg %p236
      $region34: #{tpu_custom_call.1} parent=11 // pred_check_branch
        %359 = sbr.rel (%p357) target = $region36
      $region35: #{tpu_custom_call.1} parent=11 // pred_region
        _
      $region36: #{tpu_custom_call.1} parent=11 // pred_fallthru
        _
      // Predicated region
      $region37: #{tpu_custom_call.1} parent=11 // pred_check
        %p360 = pneg %p257
      $region38: #{tpu_custom_call.1} parent=11 // pred_check_branch
        %362 = sbr.rel (%p360) target = $region40
      $region39: #{tpu_custom_call.1} parent=11 // pred_region
        _
      $region40: #{tpu_custom_call.1} parent=11 // pred_fallthru
        _
      // Predicated region
      $region41: #{tpu_custom_call.1} parent=11 // pred_check
        %p363 = pneg %p278
      $region42: #{tpu_custom_call.1} parent=11 // pred_check_branch
        %365 = sbr.rel (%p363) target = $region44
      $region43: #{tpu_custom_call.1} parent=11 // pred_region
        _
      $region44: #{tpu_custom_call.1} parent=11 // pred_fallthru
        _
      // Predicated region
      $region45: #{tpu_custom_call.1} parent=11 // pred_check
        %p366 = pneg %p299
      $region46: #{tpu_custom_call.1} parent=11 // pred_check_branch
        %368 = sbr.rel (%p366) target = $region48
      $region47: #{tpu_custom_call.1} parent=11 // pred_region
        _
      $region48: #{tpu_custom_call.1} parent=11 // pred_fallthru
        _
    $region12: #{tpu_custom_call.1} parent=5 // pred_fallthru
      _
    %p369 = scmp.lt.s32.totalorder %s18, 4
    // Predicated region
    $region49: #{tpu_custom_call.1} parent=5 // pred_check
      %p370 = pneg %p369
    $region50: #{tpu_custom_call.1} parent=5 // pred_check_branch
      %372 = sbr.rel (%p370) target = $region52
    $region51: #{tpu_custom_call.1} parent=5 // pred_region
      // Predicated region
      $region53: #{tpu_custom_call.1} parent=51 // pred_check
        %p373 = pneg %p52
      $region54: #{tpu_custom_call.1} parent=51 // pred_check_branch
        %375 = sbr.rel (%p373) target = $region56
      $region55: #{tpu_custom_call.1} parent=51 // pred_region
        %s376 = smul.u32 16, %s26
        %p377 = scmp.lt.s32.totalorder %s25, 1
        %s378 = scalar_select %p377, %s25, 1
        %p379 = scmp.lt.s32.totalorder %s376, 31
        %s380 = scalar_select %p379, %s376, 31
        %s381 = smul.addr %s378, 32
        %s382 = sadd.s32 %s380, %s381
        %s383 = smul.addr %s382, 8
        %s384 = scalar_lea.vmem %s0, %s383
        %s385 = smul.u32 16, %s26
      $region56: #{tpu_custom_call.1} parent=51 // pred_fallthru
        _
      // Predicated region
      $region57: #{tpu_custom_call.1} parent=51 // pred_check
        %p386 = pneg %p78
      $region58: #{tpu_custom_call.1} parent=51 // pred_check_branch
        %388 = sbr.rel (%p386) target = $region60
      $region59: #{tpu_custom_call.1} parent=51 // pred_region
        %p389 = scmp.lt.s32.totalorder %s25, 1
        %s390 = scalar_select %p389, %s25, 1
        %s391 = smul.addr %s390, 32
        %s392 = smul.addr %s391, 8
        %s393 = scalar_lea.vmem %s1, %s392
      $region60: #{tpu_custom_call.1} parent=51 // pred_fallthru
        _
      // Predicated region
      $region61: #{tpu_custom_call.1} parent=51 // pred_check
        %p394 = pneg %p104
      $region62: #{tpu_custom_call.1} parent=51 // pred_check_branch
        %396 = sbr.rel (%p394) target = $region64
      $region63: #{tpu_custom_call.1} parent=51 // pred_region
        %s397 = smul.u32 16, %s26
        %p398 = scmp.lt.s32.totalorder %s397, 31
        %s399 = scalar_select %p398, %s397, 31
        %s400 = smul.addr %s399, 8
        %s401 = scalar_lea.vmem %s2, %s400
        %s402 = smul.u32 16, %s26
      $region64: #{tpu_custom_call.1} parent=51 // pred_fallthru
        _
    $region52: #{tpu_custom_call.1} parent=5 // pred_fallthru
      _
    %p403 = scmp.le.s32.totalorder 1, %s18
    %p404 = scmp.lt.s32.totalorder %s18, 5
    %p405 = pnand %p403, %p404
    %p406 = pneg %p405
    // Predicated region
    $region65: #{tpu_custom_call.1} parent=5 // pred_check
      _
    $region66: #{tpu_custom_call.1} parent=5 // pred_check_branch
      %408 = sbr.rel (%p405) target = $region68
    $region67: #{tpu_custom_call.1} parent=5 // pred_region
      %s409 = ssub.s32 %s18, 1
      %s410 = smul.u32 16, %s28
      %p411 = scmp.lt.s32.totalorder %s27, 1
      %s412 = scalar_select %p411, %s27, 1
      %p413 = scmp.lt.s32.totalorder %s410, 31
      %s414 = scalar_select %p413, %s410, 31
      %s415 = smul.addr %s412, 32
      %s416 = sadd.s32 %s414, %s415
      %s417 = smul.addr %s416, 8
      %s418 = scalar_lea.vmem %s0, %s417
      %p419 = pneg %p58
      %p420 = pneg %p55
      %p421 = scmp.lt.s32.totalorder %s27, 1
      %s422 = scalar_select %p421, %s27, 1
      %s423 = smul.addr %s422, 32
      %s424 = smul.addr %s423, 8
      %s425 = scalar_lea.vmem %s1, %s424
      %p426 = pneg %p84
      %p427 = pneg %p81
      %s428 = smul.u32 16, %s28
      %p429 = scmp.lt.s32.totalorder %s428, 31
      %s430 = scalar_select %p429, %s428, 31
      %s431 = smul.addr %s430, 8
      %s432 = scalar_lea.vmem %s2, %s431
      %p433 = pneg %p110
      %p434 = pneg %p107
      %p435 = pneg %p131
      %p436 = pneg %p128
      %p437 = pneg %p152
      %p438 = pneg %p149
      %p439 = pneg %p173
      %p440 = pneg %p170
      %p441 = pneg %p194
      %p442 = pneg %p191
      %p443 = pneg %p215
      %p444 = pneg %p212
      %p445 = pneg %p236
      %p446 = pneg %p233
      %p447 = pneg %p257
      %p448 = pneg %p254
      %p449 = pneg %p278
      %p450 = pneg %p275
      %p451 = pneg %p299
      %p452 = pneg %p296
      %p453 = pneg %p327
      %p454 = pneg %p324
      %s455 = smul.u32 16, %s28
      %p456 = scmp.lt.s32.totalorder %s27, 1
      %s457 = scalar_select %p456, %s27, 1
      %p458 = scmp.lt.s32.totalorder %s455, 31
      %s459 = scalar_select %p458, %s455, 31
      %s460 = smul.addr %s457, 32
      %s461 = sadd.s32 %s459, %s460
      %s462 = smul.addr %s461, 8
      %s463 = scalar_lea.vmem %s12, %s462
      %s464 = smul.u32 16, %s28
      %p465 = scmp.lt.s32.totalorder %s27, 1
      %s466 = scalar_select %p465, %s27, 1
      %p467 = scmp.lt.s32.totalorder %s464, 31
      %s468 = scalar_select %p467, %s464, 31
      %s469 = smul.addr %s466, 32
      %s470 = sadd.s32 %s468, %s469
      %s471 = smul.addr %s470, 8
      %s472 = scalar_lea.vmem %s0, %s471
      %s473 = smul.u32 16, %s28
      %p474 = scmp.lt.s32.totalorder %s27, 1
      %s475 = scalar_select %p474, %s27, 1
      %s476 = smul.addr %s475, 32
      %s477 = smul.addr %s476, 8
      %s478 = scalar_lea.vmem %s1, %s477
      %s479 = smul.u32 16, %s28
      %p480 = scmp.lt.s32.totalorder %s479, 31
      %s481 = scalar_select %p480, %s479, 31
      %s482 = smul.addr %s481, 8
      %s483 = scalar_lea.vmem %s2, %s482
      %s484 = smul.u32 16, %s28
      %s485 = smul.u32 16, %s28
      %p486 = scmp.lt.s32.totalorder %s27, 1
      %s487 = scalar_select %p486, %s27, 1
      %p488 = scmp.lt.s32.totalorder %s485, 31
      %s489 = scalar_select %p488, %s485, 31
      %s490 = smul.addr %s487, 32
      %s491 = sadd.s32 %s489, %s490
      %s492 = smul.addr %s491, 8
      %s493 = scalar_lea.vmem %s12, %s492
      %s494 = smul.u32 16, %s28
      %v496 = vld [vmem:[%s472] sm:$0xff]
      %v497 = vld [vmem:[%s472 + $0x8] sm:$0xff]
      %v498 = vld [vmem:[%s472 + $0x10] sm:$0xff]
      %v499 = vld [vmem:[%s472 + $0x18] sm:$0xff]
      %v500 = vld [vmem:[%s472 + $0x20] sm:$0xff]
      %v501 = vld [vmem:[%s472 + $0x28] sm:$0xff]
      %v502 = vld [vmem:[%s472 + $0x30] sm:$0xff]
      %v503 = vld [vmem:[%s472 + $0x38] sm:$0xff]
      %v504 = vld [vmem:[%s472 + $0x40] sm:$0xff]
      %v505 = vld [vmem:[%s472 + $0x48] sm:$0xff]
      %v506 = vld [vmem:[%s472 + $0x50] sm:$0xff]
      %v507 = vld [vmem:[%s472 + $0x58] sm:$0xff]
      %v508 = vld [vmem:[%s472 + $0x60] sm:$0xff]
      %v509 = vld [vmem:[%s472 + $0x68] sm:$0xff]
      %v510 = vld [vmem:[%s472 + $0x70] sm:$0xff]
      %v511 = vld [vmem:[%s472 + $0x78] sm:$0xff]
      %v512 = vld [vmem:[%s483] sm:$0xff]
      %v513 = vld [vmem:[%s483 + $0x8] sm:$0xff]
      %v514 = vld [vmem:[%s483 + $0x10] sm:$0xff]
      %v515 = vld [vmem:[%s483 + $0x18] sm:$0xff]
      %v516 = vld [vmem:[%s483 + $0x20] sm:$0xff]
      %v517 = vld [vmem:[%s483 + $0x28] sm:$0xff]
      %v518 = vld [vmem:[%s483 + $0x30] sm:$0xff]
      %v519 = vld [vmem:[%s483 + $0x38] sm:$0xff]
      %v520 = vld [vmem:[%s483 + $0x40] sm:$0xff]
      %v521 = vld [vmem:[%s483 + $0x48] sm:$0xff]
      %v522 = vld [vmem:[%s483 + $0x50] sm:$0xff]
      %v523 = vld [vmem:[%s483 + $0x58] sm:$0xff]
      %v524 = vld [vmem:[%s483 + $0x60] sm:$0xff]
      %v525 = vld [vmem:[%s483 + $0x68] sm:$0xff]
      %v526 = vld [vmem:[%s483 + $0x70] sm:$0xff]
      %v527 = vld [vmem:[%s483 + $0x78] sm:$0xff]
      %v528 = vadd.f32 %v496, %v512
      %v529 = vadd.f32 %v497, %v513
      %v530 = vadd.f32 %v498, %v514
      %v531 = vadd.f32 %v499, %v515
      %v532 = vadd.f32 %v500, %v516
      %v533 = vadd.f32 %v501, %v517
      %v534 = vadd.f32 %v502, %v518
      %v535 = vadd.f32 %v503, %v519
      %v536 = vadd.f32 %v504, %v520
      %v537 = vadd.f32 %v505, %v521
      %v538 = vadd.f32 %v506, %v522
      %v539 = vadd.f32 %v507, %v523
      %v540 = vadd.f32 %v508, %v524
      %v541 = vadd.f32 %v509, %v525
      %v542 = vadd.f32 %v510, %v526
      %v543 = vadd.f32 %v511, %v527
      %v544 = vpack.c.bf16 %v529, %v528
      %v545 = vpack.c.bf16 %v531, %v530
      %v546 = vpack.c.bf16 %v533, %v532
      %v547 = vpack.c.bf16 %v535, %v534
      %v548 = vpack.c.bf16 %v537, %v536
      %v549 = vpack.c.bf16 %v539, %v538
      %v550 = vpack.c.bf16 %v541, %v540
      %v551 = vpack.c.bf16 %v543, %v542
      %v552 = vld [vmem:[%s478] sm:$0xff]
      %v553 = vld [vmem:[%s478 + $0x8] sm:$0xff]
      %v554 = vld [vmem:[%s478 + $0x10] sm:$0xff]
      %v555 = vld [vmem:[%s478 + $0x18] sm:$0xff]
      %v556 = vld [vmem:[%s478 + $0x20] sm:$0xff]
      %v557 = vld [vmem:[%s478 + $0x28] sm:$0xff]
      %v558 = vld [vmem:[%s478 + $0x30] sm:$0xff]
      %v559 = vld [vmem:[%s478 + $0x38] sm:$0xff]
      %v560 = vld [vmem:[%s478 + $0x40] sm:$0xff]
      %v561 = vld [vmem:[%s478 + $0x48] sm:$0xff]
      %v562 = vld [vmem:[%s478 + $0x50] sm:$0xff]
      %v563 = vld [vmem:[%s478 + $0x58] sm:$0xff]
      %v564 = vld [vmem:[%s478 + $0x60] sm:$0xff]
      %v565 = vld [vmem:[%s478 + $0x68] sm:$0xff]
      %v566 = vld [vmem:[%s478 + $0x70] sm:$0xff]
      %v567 = vld [vmem:[%s478 + $0x78] sm:$0xff]
      %v568 = vld [vmem:[%s478 + $0x80] sm:$0xff]
      %v569 = vld [vmem:[%s478 + $0x88] sm:$0xff]
      %v570 = vld [vmem:[%s478 + $0x90] sm:$0xff]
      %v571 = vld [vmem:[%s478 + $0x98] sm:$0xff]
      %v572 = vld [vmem:[%s478 + $0xa0] sm:$0xff]
      %v573 = vld [vmem:[%s478 + $0xa8] sm:$0xff]
      %v574 = vld [vmem:[%s478 + $0xb0] sm:$0xff]
      %v575 = vld [vmem:[%s478 + $0xb8] sm:$0xff]
      %v576 = vld [vmem:[%s478 + $0xc0] sm:$0xff]
      %v577 = vld [vmem:[%s478 + $0xc8] sm:$0xff]
      %v578 = vld [vmem:[%s478 + $0xd0] sm:$0xff]
      %v579 = vld [vmem:[%s478 + $0xd8] sm:$0xff]
      %v580 = vld [vmem:[%s478 + $0xe0] sm:$0xff]
      %v581 = vld [vmem:[%s478 + $0xe8] sm:$0xff]
      %v582 = vld [vmem:[%s478 + $0xf0] sm:$0xff]
      %v583 = vld [vmem:[%s478 + $0xf8] sm:$0xff]
      %v584 = vld [vmem:[%s3] sm:$0xff]
      %v585 = vld [vmem:[%s3 + $0x8] sm:$0xff]
      %v586 = vld [vmem:[%s3 + $0x10] sm:$0xff]
      %v587 = vld [vmem:[%s3 + $0x18] sm:$0xff]
      %v588 = vld [vmem:[%s3 + $0x20] sm:$0xff]
      %v589 = vld [vmem:[%s3 + $0x28] sm:$0xff]
      %v590 = vld [vmem:[%s3 + $0x30] sm:$0xff]
      %v591 = vld [vmem:[%s3 + $0x38] sm:$0xff]
      %v592 = vld [vmem:[%s3 + $0x40] sm:$0xff]
      %v593 = vld [vmem:[%s3 + $0x48] sm:$0xff]
      %v594 = vld [vmem:[%s3 + $0x50] sm:$0xff]
      %v595 = vld [vmem:[%s3 + $0x58] sm:$0xff]
      %v596 = vld [vmem:[%s3 + $0x60] sm:$0xff]
      %v597 = vld [vmem:[%s3 + $0x68] sm:$0xff]
      %v598 = vld [vmem:[%s3 + $0x70] sm:$0xff]
      %v599 = vld [vmem:[%s3 + $0x78] sm:$0xff]
      %v600 = vld [vmem:[%s3 + $0x80] sm:$0xff]
      %v601 = vld [vmem:[%s3 + $0x88] sm:$0xff]
      %v602 = vld [vmem:[%s3 + $0x90] sm:$0xff]
      %v603 = vld [vmem:[%s3 + $0x98] sm:$0xff]
      %v604 = vld [vmem:[%s3 + $0xa0] sm:$0xff]
      %v605 = vld [vmem:[%s3 + $0xa8] sm:$0xff]
      %v606 = vld [vmem:[%s3 + $0xb0] sm:$0xff]
      %v607 = vld [vmem:[%s3 + $0xb8] sm:$0xff]
      %v608 = vld [vmem:[%s3 + $0xc0] sm:$0xff]
      %v609 = vld [vmem:[%s3 + $0xc8] sm:$0xff]
      %v610 = vld [vmem:[%s3 + $0xd0] sm:$0xff]
      %v611 = vld [vmem:[%s3 + $0xd8] sm:$0xff]
      %v612 = vld [vmem:[%s3 + $0xe0] sm:$0xff]
      %v613 = vld [vmem:[%s3 + $0xe8] sm:$0xff]
      %v614 = vld [vmem:[%s3 + $0xf0] sm:$0xff]
      %v615 = vld [vmem:[%s3 + $0xf8] sm:$0xff]
      %v616 = vadd.f32 %v552, %v584
      %v617 = vadd.f32 %v553, %v585
      %v618 = vadd.f32 %v554, %v586
      %v619 = vadd.f32 %v555, %v587
      %v620 = vadd.f32 %v556, %v588
      %v621 = vadd.f32 %v557, %v589
      %v622 = vadd.f32 %v558, %v590
      %v623 = vadd.f32 %v559, %v591
      %v624 = vadd.f32 %v560, %v592
      %v625 = vadd.f32 %v561, %v593
      %v626 = vadd.f32 %v562, %v594
      %v627 = vadd.f32 %v563, %v595
      %v628 = vadd.f32 %v564, %v596
      %v629 = vadd.f32 %v565, %v597
      %v630 = vadd.f32 %v566, %v598
      %v631 = vadd.f32 %v567, %v599
      %v632 = vadd.f32 %v568, %v600
      %v633 = vadd.f32 %v569, %v601
      %v634 = vadd.f32 %v570, %v602
      %v635 = vadd.f32 %v571, %v603
      %v636 = vadd.f32 %v572, %v604
      %v637 = vadd.f32 %v573, %v605
      %v638 = vadd.f32 %v574, %v606
      %v639 = vadd.f32 %v575, %v607
      %v640 = vadd.f32 %v576, %v608
      %v641 = vadd.f32 %v577, %v609
      %v642 = vadd.f32 %v578, %v610
      %v643 = vadd.f32 %v579, %v611
      %v644 = vadd.f32 %v580, %v612
      %v645 = vadd.f32 %v581, %v613
      %v646 = vadd.f32 %v582, %v614
      %v647 = vadd.f32 %v583, %v615
      %v648 = vpack.c.bf16 %v617, %v616
      %v649 = vpack.c.bf16 %v619, %v618
      %v650 = vpack.c.bf16 %v621, %v620
      %v651 = vpack.c.bf16 %v623, %v622
      %v652 = vpack.c.bf16 %v625, %v624
      %v653 = vpack.c.bf16 %v627, %v626
      %v654 = vpack.c.bf16 %v629, %v628
      %v655 = vpack.c.bf16 %v631, %v630
      %v656 = vpack.c.bf16 %v633, %v632
      %v657 = vpack.c.bf16 %v635, %v634
      %v658 = vpack.c.bf16 %v637, %v636
      %v659 = vpack.c.bf16 %v639, %v638
      %v660 = vpack.c.bf16 %v641, %v640
      %v661 = vpack.c.bf16 %v643, %v642
      %v662 = vpack.c.bf16 %v645, %v644
      %v663 = vpack.c.bf16 %v647, %v646
      %v664 = vld [vmem:[%s4] sm:$0xf]
      %v665 = vld [vmem:[%s4 + $0x4] sm:$0xf]
      %v666 = vld [vmem:[%s4 + $0x8] sm:$0xf]
      %v667 = vld [vmem:[%s4 + $0xc] sm:$0xf]
      %v668 = vld [vmem:[%s5] sm:$0x1]
      %v670 = vperm.slane %v668, 0
      %v676 = vunpack.c.l.b16 %v664
      %v677 = vunpack.c.l.b16 %v665
      %v678 = vunpack.c.l.b16 %v666
      %v679 = vunpack.c.l.b16 %v667
      %v680 = vpack.c.b16 %v677, %v676
      %v681 = vpack.c.b16 %v679, %v678
      %vm684 = vcmask 261120
      %v686 = vsel %vm684, %v544, 0
      %v689 = vsel %vm684, %v545, 0
      %v692 = vsel %vm684, %v546, 0
      %v695 = vsel %vm684, %v547, 0
      %v698 = vsel %vm684, %v548, 0
      %v701 = vsel %vm684, %v549, 0
      %v704 = vsel %vm684, %v550, 0
      %v707 = vsel %vm684, %v551, 0
      %709 = vmatpush.bf16.msra.mxu0 0
      %710 = vmatpush.bf16.msra.mxu0 0
      %711 = vmatpush.bf16.msra.mxu0 0
      %712 = vmatpush.bf16.msra.mxu0 0
      %713 = vmatpush.bf16.msra.mxu0 0
      %714 = vmatpush.bf16.msra.mxu0 0
      %715 = vmatpush.bf16.msra.mxu0 %v681
      %716 = vmatpush.bf16.msra.mxu0 %v680
      %717 = vmatmul.bf16.gmra.mxu0 %v686
      %v718 = vpop.f32.mrf.mxu0
      %v719 = vadd.f32 %v670, %v718
      %v720 = vpop.f32.mrf.mxu0
      %v721 = vadd.f32 %v670, %v720
      %722 = vmatmul.bf16.gmra.mxu0 %v689
      %v723 = vpop.f32.mrf.mxu0
      %v724 = vadd.f32 %v670, %v723
      %v725 = vpop.f32.mrf.mxu0
      %v726 = vadd.f32 %v670, %v725
      %727 = vmatmul.bf16.gmra.mxu0 %v692
      %v728 = vpop.f32.mrf.mxu0
      %v729 = vadd.f32 %v670, %v728
      %v730 = vpop.f32.mrf.mxu0
      %v731 = vadd.f32 %v670, %v730
      %732 = vmatmul.bf16.gmra.mxu0 %v695
      %v733 = vpop.f32.mrf.mxu0
      %v734 = vadd.f32 %v670, %v733
      %v735 = vpop.f32.mrf.mxu0
      %v736 = vadd.f32 %v670, %v735
      %737 = vmatmul.bf16.gmra.mxu0 %v698
      %v738 = vpop.f32.mrf.mxu0
      %v739 = vadd.f32 %v670, %v738
      %v740 = vpop.f32.mrf.mxu0
      %v741 = vadd.f32 %v670, %v740
      %742 = vmatmul.bf16.gmra.mxu0 %v701
      %v743 = vpop.f32.mrf.mxu0
      %v744 = vadd.f32 %v670, %v743
      %v745 = vpop.f32.mrf.mxu0
      %v746 = vadd.f32 %v670, %v745
      %747 = vmatmul.bf16.gmra.mxu0 %v704
      %v748 = vpop.f32.mrf.mxu0
      %v749 = vadd.f32 %v670, %v748
      %v750 = vpop.f32.mrf.mxu0
      %v751 = vadd.f32 %v670, %v750
      %752 = vmatmul.bf16.gmra.mxu0 %v707
      %v753 = vpop.f32.mrf.mxu0
      %v754 = vadd.f32 %v670, %v753
      %v755 = vpop.f32.mrf.mxu0
      %v756 = vadd.f32 %v670, %v755
      %757 = vdwg.mxu0
      %v758 = vld [vmem:[%s6] sm:$0xf]
      %v759 = vld [vmem:[%s6 + $0x4] sm:$0xf]
      %v760 = vld [vmem:[%s6 + $0x8] sm:$0xf]
      %v761 = vld [vmem:[%s6 + $0xc] sm:$0xf]
      %v762 = vld [vmem:[%s7] sm:$0x1]
      %v764 = vperm.slane %v762, 0
      %v770 = vunpack.c.l.b16 %v758
      %v771 = vunpack.c.l.b16 %v759
      %v772 = vunpack.c.l.b16 %v760
      %v773 = vunpack.c.l.b16 %v761
      %v774 = vpack.c.b16 %v771, %v770
      %v775 = vpack.c.b16 %v773, %v772
      %v779 = vsel %vm684, %v648, 0
      %v782 = vsel %vm684, %v649, 0
      %v785 = vsel %vm684, %v650, 0
      %v788 = vsel %vm684, %v651, 0
      %v791 = vsel %vm684, %v652, 0
      %v794 = vsel %vm684, %v653, 0
      %v797 = vsel %vm684, %v654, 0
      %v800 = vsel %vm684, %v655, 0
      %v803 = vsel %vm684, %v656, 0
      %v806 = vsel %vm684, %v657, 0
      %v809 = vsel %vm684, %v658, 0
      %v812 = vsel %vm684, %v659, 0
      %v815 = vsel %vm684, %v660, 0
      %v818 = vsel %vm684, %v661, 0
      %v821 = vsel %vm684, %v662, 0
      %v824 = vsel %vm684, %v663, 0
      %826 = vmatpush.bf16.msra.mxu0 0
      %827 = vmatpush.bf16.msra.mxu0 0
      %828 = vmatpush.bf16.msra.mxu0 0
      %829 = vmatpush.bf16.msra.mxu0 0
      %830 = vmatpush.bf16.msra.mxu0 0
      %831 = vmatpush.bf16.msra.mxu0 0
      %832 = vmatpush.bf16.msra.mxu0 %v775
      %833 = vmatpush.bf16.msra.mxu0 %v774
      %834 = vmatmul.bf16.gmra.mxu0 %v779
      %v835 = vpop.f32.mrf.mxu0
      %v836 = vadd.f32 %v764, %v835
      %v837 = vpop.f32.mrf.mxu0
      %v838 = vadd.f32 %v764, %v837
      %839 = vmatmul.bf16.gmra.mxu0 %v782
      %v840 = vpop.f32.mrf.mxu0
      %v841 = vadd.f32 %v764, %v840
      %v842 = vpop.f32.mrf.mxu0
      %v843 = vadd.f32 %v764, %v842
      %844 = vmatmul.bf16.gmra.mxu0 %v785
      %v845 = vpop.f32.mrf.mxu0
      %v846 = vadd.f32 %v764, %v845
      %v847 = vpop.f32.mrf.mxu0
      %v848 = vadd.f32 %v764, %v847
      %849 = vmatmul.bf16.gmra.mxu0 %v788
      %v850 = vpop.f32.mrf.mxu0
      %v851 = vadd.f32 %v764, %v850
      %v852 = vpop.f32.mrf.mxu0
      %v853 = vadd.f32 %v764, %v852
      %854 = vmatmul.bf16.gmra.mxu0 %v791
      %v855 = vpop.f32.mrf.mxu0
      %v856 = vadd.f32 %v764, %v855
      %v857 = vpop.f32.mrf.mxu0
      %v858 = vadd.f32 %v764, %v857
      %859 = vmatmul.bf16.gmra.mxu0 %v794
      %v860 = vpop.f32.mrf.mxu0
      %v861 = vadd.f32 %v764, %v860
      %v862 = vpop.f32.mrf.mxu0
      %v863 = vadd.f32 %v764, %v862
      %864 = vmatmul.bf16.gmra.mxu0 %v797
      %v865 = vpop.f32.mrf.mxu0
      %v866 = vadd.f32 %v764, %v865
      %v867 = vpop.f32.mrf.mxu0
      %v868 = vadd.f32 %v764, %v867
      %869 = vmatmul.bf16.gmra.mxu0 %v800
      %v870 = vpop.f32.mrf.mxu0
      %v871 = vadd.f32 %v764, %v870
      %v872 = vpop.f32.mrf.mxu0
      %v873 = vadd.f32 %v764, %v872
      %874 = vmatmul.bf16.gmra.mxu0 %v803
      %v875 = vpop.f32.mrf.mxu0
      %v876 = vadd.f32 %v764, %v875
      %v877 = vpop.f32.mrf.mxu0
      %v878 = vadd.f32 %v764, %v877
      %879 = vmatmul.bf16.gmra.mxu0 %v806
      %v880 = vpop.f32.mrf.mxu0
      %v881 = vadd.f32 %v764, %v880
      %v882 = vpop.f32.mrf.mxu0
      %v883 = vadd.f32 %v764, %v882
      %884 = vmatmul.bf16.gmra.mxu0 %v809
      %v885 = vpop.f32.mrf.mxu0
      %v886 = vadd.f32 %v764, %v885
      %v887 = vpop.f32.mrf.mxu0
      %v888 = vadd.f32 %v764, %v887
      %889 = vmatmul.bf16.gmra.mxu0 %v812
      %v890 = vpop.f32.mrf.mxu0
      %v891 = vadd.f32 %v764, %v890
      %v892 = vpop.f32.mrf.mxu0
      %v893 = vadd.f32 %v764, %v892
      %894 = vmatmul.bf16.gmra.mxu0 %v815
      %v895 = vpop.f32.mrf.mxu0
      %v896 = vadd.f32 %v764, %v895
      %v897 = vpop.f32.mrf.mxu0
      %v898 = vadd.f32 %v764, %v897
      %899 = vmatmul.bf16.gmra.mxu0 %v818
      %v900 = vpop.f32.mrf.mxu0
      %v901 = vadd.f32 %v764, %v900
      %v902 = vpop.f32.mrf.mxu0
      %v903 = vadd.f32 %v764, %v902
      %904 = vmatmul.bf16.gmra.mxu0 %v821
      %v905 = vpop.f32.mrf.mxu0
      %v906 = vadd.f32 %v764, %v905
      %v907 = vpop.f32.mrf.mxu0
      %v908 = vadd.f32 %v764, %v907
      %909 = vmatmul.bf16.gmra.mxu0 %v824
      %v910 = vpop.f32.mrf.mxu0
      %v911 = vadd.f32 %v764, %v910
      %v912 = vpop.f32.mrf.mxu0
      %v913 = vadd.f32 %v764, %v912
      %914 = vdwg.mxu0
      %v915 = vld [vmem:[%s8] sm:$0xf]
      %v916 = vld [vmem:[%s8 + $0x4] sm:$0xf]
      %v917 = vld [vmem:[%s8 + $0x8] sm:$0xf]
      %v918 = vld [vmem:[%s8 + $0xc] sm:$0xf]
      %v919 = vld [vmem:[%s9] sm:$0x1]
      %v921 = vperm.slane %v919, 0
      %v927 = vunpack.c.l.b16 %v915
      %v928 = vunpack.c.l.b16 %v916
      %v929 = vunpack.c.l.b16 %v917
      %v930 = vunpack.c.l.b16 %v918
      %v931 = vpack.c.b16 %v928, %v927
      %v932 = vpack.c.b16 %v930, %v929
      %935 = vmatpush.bf16.msra.mxu0 0
      %936 = vmatpush.bf16.msra.mxu0 0
      %937 = vmatpush.bf16.msra.mxu0 0
      %938 = vmatpush.bf16.msra.mxu0 0
      %939 = vmatpush.bf16.msra.mxu0 0
      %940 = vmatpush.bf16.msra.mxu0 0
      %941 = vmatpush.bf16.msra.mxu0 %v932
      %942 = vmatpush.bf16.msra.mxu0 %v931
      %943 = vmatmul.bf16.gmra.mxu0 %v779
      %v944 = vpop.f32.mrf.mxu0
      %v945 = vadd.f32 %v921, %v944
      %v946 = vpop.f32.mrf.mxu0
      %v947 = vadd.f32 %v921, %v946
      %948 = vmatmul.bf16.gmra.mxu0 %v782
      %v949 = vpop.f32.mrf.mxu0
      %v950 = vadd.f32 %v921, %v949
      %v951 = vpop.f32.mrf.mxu0
      %v952 = vadd.f32 %v921, %v951
      %953 = vmatmul.bf16.gmra.mxu0 %v785
      %v954 = vpop.f32.mrf.mxu0
      %v955 = vadd.f32 %v921, %v954
      %v956 = vpop.f32.mrf.mxu0
      %v957 = vadd.f32 %v921, %v956
      %958 = vmatmul.bf16.gmra.mxu0 %v788
      %v959 = vpop.f32.mrf.mxu0
      %v960 = vadd.f32 %v921, %v959
      %v961 = vpop.f32.mrf.mxu0
      %v962 = vadd.f32 %v921, %v961
      %963 = vmatmul.bf16.gmra.mxu0 %v791
      %v964 = vpop.f32.mrf.mxu0
      %v965 = vadd.f32 %v921, %v964
      %v966 = vpop.f32.mrf.mxu0
      %v967 = vadd.f32 %v921, %v966
      %968 = vmatmul.bf16.gmra.mxu0 %v794
      %v969 = vpop.f32.mrf.mxu0
      %v970 = vadd.f32 %v921, %v969
      %v971 = vpop.f32.mrf.mxu0
      %v972 = vadd.f32 %v921, %v971
      %973 = vmatmul.bf16.gmra.mxu0 %v797
      %v974 = vpop.f32.mrf.mxu0
      %v975 = vadd.f32 %v921, %v974
      %v976 = vpop.f32.mrf.mxu0
      %v977 = vadd.f32 %v921, %v976
      %978 = vmatmul.bf16.gmra.mxu0 %v800
      %v979 = vpop.f32.mrf.mxu0
      %v980 = vadd.f32 %v921, %v979
      %v981 = vpop.f32.mrf.mxu0
      %v982 = vadd.f32 %v921, %v981
      %983 = vmatmul.bf16.gmra.mxu0 %v803
      %v984 = vpop.f32.mrf.mxu0
      %v985 = vadd.f32 %v921, %v984
      %v986 = vpop.f32.mrf.mxu0
      %v987 = vadd.f32 %v921, %v986
      %988 = vmatmul.bf16.gmra.mxu0 %v806
      %v989 = vpop.f32.mrf.mxu0
      %v990 = vadd.f32 %v921, %v989
      %v991 = vpop.f32.mrf.mxu0
      %v992 = vadd.f32 %v921, %v991
      %993 = vmatmul.bf16.gmra.mxu0 %v809
      %v994 = vpop.f32.mrf.mxu0
      %v995 = vadd.f32 %v921, %v994
      %v996 = vpop.f32.mrf.mxu0
      %v997 = vadd.f32 %v921, %v996
      %998 = vmatmul.bf16.gmra.mxu0 %v812
      %v999 = vpop.f32.mrf.mxu0
      %v1000 = vadd.f32 %v921, %v999
      %v1001 = vpop.f32.mrf.mxu0
      %v1002 = vadd.f32 %v921, %v1001
      %1003 = vmatmul.bf16.gmra.mxu0 %v815
      %v1004 = vpop.f32.mrf.mxu0
      %v1005 = vadd.f32 %v921, %v1004
      %v1006 = vpop.f32.mrf.mxu0
      %v1007 = vadd.f32 %v921, %v1006
      %1008 = vmatmul.bf16.gmra.mxu0 %v818
      %v1009 = vpop.f32.mrf.mxu0
      %v1010 = vadd.f32 %v921, %v1009
      %v1011 = vpop.f32.mrf.mxu0
      %v1012 = vadd.f32 %v921, %v1011
      %1013 = vmatmul.bf16.gmra.mxu0 %v821
      %v1014 = vpop.f32.mrf.mxu0
      %v1015 = vadd.f32 %v921, %v1014
      %v1016 = vpop.f32.mrf.mxu0
      %v1017 = vadd.f32 %v921, %v1016
      %1018 = vmatmul.bf16.gmra.mxu0 %v824
      %v1019 = vpop.f32.mrf.mxu0
      %v1020 = vadd.f32 %v921, %v1019
      %v1021 = vpop.f32.mrf.mxu0
      %v1022 = vadd.f32 %v921, %v1021
      %1023 = vdwg.mxu0
      %v1024 = vpack.c.bf16 %v721, %v719
      %v1025 = vpack.c.bf16 %v726, %v724
      %v1026 = vpack.c.bf16 %v731, %v729
      %v1027 = vpack.c.bf16 %v736, %v734
      %v1028 = vpack.c.bf16 %v741, %v739
      %v1029 = vpack.c.bf16 %v746, %v744
      %v1030 = vpack.c.bf16 %v751, %v749
      %v1031 = vpack.c.bf16 %v756, %v754
      %v1032 = vpack.c.bf16 %v838, %v836
      %v1033 = vpack.c.bf16 %v843, %v841
      %v1034 = vpack.c.bf16 %v848, %v846
      %v1035 = vpack.c.bf16 %v853, %v851
      %v1036 = vpack.c.bf16 %v858, %v856
      %v1037 = vpack.c.bf16 %v863, %v861
      %v1038 = vpack.c.bf16 %v868, %v866
      %v1039 = vpack.c.bf16 %v873, %v871
      %v1040 = vpack.c.bf16 %v878, %v876
      %v1041 = vpack.c.bf16 %v883, %v881
      %v1042 = vpack.c.bf16 %v888, %v886
      %v1043 = vpack.c.bf16 %v893, %v891
      %v1044 = vpack.c.bf16 %v898, %v896
      %v1045 = vpack.c.bf16 %v903, %v901
      %v1046 = vpack.c.bf16 %v908, %v906
      %v1047 = vpack.c.bf16 %v913, %v911
      %v1048 = vpack.c.bf16 %v947, %v945
      %v1049 = vpack.c.bf16 %v952, %v950
      %v1050 = vpack.c.bf16 %v957, %v955
      %v1051 = vpack.c.bf16 %v962, %v960
      %v1052 = vpack.c.bf16 %v967, %v965
      %v1053 = vpack.c.bf16 %v972, %v970
      %v1054 = vpack.c.bf16 %v977, %v975
      %v1055 = vpack.c.bf16 %v982, %v980
      %v1056 = vpack.c.bf16 %v987, %v985
      %v1057 = vpack.c.bf16 %v992, %v990
      %v1058 = vpack.c.bf16 %v997, %v995
      %v1059 = vpack.c.bf16 %v1002, %v1000
      %v1060 = vpack.c.bf16 %v1007, %v1005
      %v1061 = vpack.c.bf16 %v1012, %v1010
      %v1062 = vpack.c.bf16 %v1017, %v1015
      %v1063 = vpack.c.bf16 %v1022, %v1020
      %vm1064 = vcmask 64512
      %v1066 = vsel %vm1064, %v1024, 0
      %v1069 = vsel %vm1064, %v1025, 0
      %v1072 = vsel %vm1064, %v1026, 0
      %v1075 = vsel %vm1064, %v1027, 0
      %v1078 = vsel %vm1064, %v1028, 0
      %v1081 = vsel %vm1064, %v1029, 0
      %v1084 = vsel %vm1064, %v1030, 0
      %v1087 = vsel %vm1064, %v1031, 0
      %v1090 = vsel %vm1064, %v1032, 0
      %v1093 = vsel %vm1064, %v1033, 0
      %v1096 = vsel %vm1064, %v1034, 0
      %v1099 = vsel %vm1064, %v1035, 0
      %v1102 = vsel %vm1064, %v1036, 0
      %v1105 = vsel %vm1064, %v1037, 0
      %v1108 = vsel %vm1064, %v1038, 0
      %v1111 = vsel %vm1064, %v1039, 0
      %v1114 = vsel %vm1064, %v1040, 0
      %v1117 = vsel %vm1064, %v1041, 0
      %v1120 = vsel %vm1064, %v1042, 0
      %v1123 = vsel %vm1064, %v1043, 0
      %v1126 = vsel %vm1064, %v1044, 0
      %v1129 = vsel %vm1064, %v1045, 0
      %v1132 = vsel %vm1064, %v1046, 0
      %v1135 = vsel %vm1064, %v1047, 0
      %1137 = vmatpush.bf16.xpose.msra.mxu0 %v1111
      %1138 = vmatpush.bf16.xpose.msra.mxu0 %v1108
      %1139 = vmatpush.bf16.xpose.msra.mxu0 %v1105
      %1140 = vmatpush.bf16.xpose.msra.mxu0 %v1102
      %1141 = vmatpush.bf16.xpose.msra.mxu0 %v1099
      %1142 = vmatpush.bf16.xpose.msra.mxu0 %v1096
      %1143 = vmatpush.bf16.xpose.msra.mxu0 %v1093
      %1144 = vmatpush.bf16.xpose.msra.mxu0 %v1090
      %1145 = vmatmul.bf16.gmra.mxu0 %v1066
      %v1146 = vpop.f32.mrf.mxu0
      %v1147 = vadd.f32 0.0, %v1146
      %v1148 = vpop.f32.mrf.mxu0
      %v1149 = vadd.f32 0.0, %v1148
      %1150 = vmatmul.bf16.gmra.mxu0 %v1069
      %v1151 = vpop.f32.mrf.mxu0
      %v1152 = vadd.f32 0.0, %v1151
      %v1153 = vpop.f32.mrf.mxu0
      %v1154 = vadd.f32 0.0, %v1153
      %1155 = vmatmul.bf16.gmra.mxu0 %v1072
      %v1156 = vpop.f32.mrf.mxu0
      %v1157 = vadd.f32 0.0, %v1156
      %v1158 = vpop.f32.mrf.mxu0
      %v1159 = vadd.f32 0.0, %v1158
      %1160 = vmatmul.bf16.gmra.mxu0 %v1075
      %v1161 = vpop.f32.mrf.mxu0
      %v1162 = vadd.f32 0.0, %v1161
      %v1163 = vpop.f32.mrf.mxu0
      %v1164 = vadd.f32 0.0, %v1163
      %1165 = vmatmul.bf16.gmra.mxu0 %v1078
      %v1166 = vpop.f32.mrf.mxu0
      %v1167 = vadd.f32 0.0, %v1166
      %v1168 = vpop.f32.mrf.mxu0
      %v1169 = vadd.f32 0.0, %v1168
      %1170 = vmatmul.bf16.gmra.mxu0 %v1081
      %v1171 = vpop.f32.mrf.mxu0
      %v1172 = vadd.f32 0.0, %v1171
      %v1173 = vpop.f32.mrf.mxu0
      %v1174 = vadd.f32 0.0, %v1173
      %1175 = vmatmul.bf16.gmra.mxu0 %v1084
      %v1176 = vpop.f32.mrf.mxu0
      %v1177 = vadd.f32 0.0, %v1176
      %v1178 = vpop.f32.mrf.mxu0
      %v1179 = vadd.f32 0.0, %v1178
      %1180 = vmatmul.bf16.gmra.mxu0 %v1087
      %v1181 = vpop.f32.mrf.mxu0
      %v1182 = vadd.f32 0.0, %v1181
      %v1183 = vpop.f32.mrf.mxu0
      %v1184 = vadd.f32 0.0, %v1183
      %1185 = vdwg.mxu0
      %1186 = vmatpush.bf16.xpose.msra.mxu0 %v1135
      %1187 = vmatpush.bf16.xpose.msra.mxu0 %v1132
      %1188 = vmatpush.bf16.xpose.msra.mxu0 %v1129
      %1189 = vmatpush.bf16.xpose.msra.mxu0 %v1126
      %1190 = vmatpush.bf16.xpose.msra.mxu0 %v1123
      %1191 = vmatpush.bf16.xpose.msra.mxu0 %v1120
      %1192 = vmatpush.bf16.xpose.msra.mxu0 %v1117
      %1193 = vmatpush.bf16.xpose.msra.mxu0 %v1114
      %1194 = vmatmul.bf16.gmra.mxu0 %v1066
      %v1195 = vpop.f32.mrf.mxu0
      %v1196 = vadd.f32 0.0, %v1195
      %v1197 = vpop.f32.mrf.mxu0
      %v1198 = vadd.f32 0.0, %v1197
      %1199 = vmatmul.bf16.gmra.mxu0 %v1069
      %v1200 = vpop.f32.mrf.mxu0
      %v1201 = vadd.f32 0.0, %v1200
      %v1202 = vpop.f32.mrf.mxu0
      %v1203 = vadd.f32 0.0, %v1202
      %1204 = vmatmul.bf16.gmra.mxu0 %v1072
      %v1205 = vpop.f32.mrf.mxu0
      %v1206 = vadd.f32 0.0, %v1205
      %v1207 = vpop.f32.mrf.mxu0
      %v1208 = vadd.f32 0.0, %v1207
      %1209 = vmatmul.bf16.gmra.mxu0 %v1075
      %v1210 = vpop.f32.mrf.mxu0
      %v1211 = vadd.f32 0.0, %v1210
      %v1212 = vpop.f32.mrf.mxu0
      %v1213 = vadd.f32 0.0, %v1212
      %1214 = vmatmul.bf16.gmra.mxu0 %v1078
      %v1215 = vpop.f32.mrf.mxu0
      %v1216 = vadd.f32 0.0, %v1215
      %v1217 = vpop.f32.mrf.mxu0
      %v1218 = vadd.f32 0.0, %v1217
      %1219 = vmatmul.bf16.gmra.mxu0 %v1081
      %v1220 = vpop.f32.mrf.mxu0
      %v1221 = vadd.f32 0.0, %v1220
      %v1222 = vpop.f32.mrf.mxu0
      %v1223 = vadd.f32 0.0, %v1222
      %1224 = vmatmul.bf16.gmra.mxu0 %v1084
      %v1225 = vpop.f32.mrf.mxu0
      %v1226 = vadd.f32 0.0, %v1225
      %v1227 = vpop.f32.mrf.mxu0
      %v1228 = vadd.f32 0.0, %v1227
      %1229 = vmatmul.bf16.gmra.mxu0 %v1087
      %v1230 = vpop.f32.mrf.mxu0
      %v1231 = vadd.f32 0.0, %v1230
      %v1232 = vpop.f32.mrf.mxu0
      %v1233 = vadd.f32 0.0, %v1232
      %1234 = vdwg.mxu0
      %v1235 = vmul.f32 %v1147, 0.35355338
      %v1236 = vmul.f32 %v1196, 0.35355338
      %v1237 = vmul.f32 %v1149, 0.35355338
      %v1238 = vmul.f32 %v1198, 0.35355338
      %v1239 = vmul.f32 %v1152, 0.35355338
      %v1240 = vmul.f32 %v1201, 0.35355338
      %v1241 = vmul.f32 %v1154, 0.35355338
      %v1242 = vmul.f32 %v1203, 0.35355338
      %v1243 = vmul.f32 %v1157, 0.35355338
      %v1244 = vmul.f32 %v1206, 0.35355338
      %v1245 = vmul.f32 %v1159, 0.35355338
      %v1246 = vmul.f32 %v1208, 0.35355338
      %v1247 = vmul.f32 %v1162, 0.35355338
      %v1248 = vmul.f32 %v1211, 0.35355338
      %v1249 = vmul.f32 %v1164, 0.35355338
      %v1250 = vmul.f32 %v1213, 0.35355338
      %v1251 = vmul.f32 %v1167, 0.35355338
      %v1252 = vmul.f32 %v1216, 0.35355338
      %v1253 = vmul.f32 %v1169, 0.35355338
      %v1254 = vmul.f32 %v1218, 0.35355338
      %v1255 = vmul.f32 %v1172, 0.35355338
      %v1256 = vmul.f32 %v1221, 0.35355338
      %v1257 = vmul.f32 %v1174, 0.35355338
      %v1258 = vmul.f32 %v1223, 0.35355338
      %v1259 = vmul.f32 %v1177, 0.35355338
      %v1260 = vmul.f32 %v1226, 0.35355338
      %v1261 = vmul.f32 %v1179, 0.35355338
      %v1262 = vmul.f32 %v1228, 0.35355338
      %v1263 = vmul.f32 %v1182, 0.35355338
      %v1264 = vmul.f32 %v1231, 0.35355338
      %v1265 = vmul.f32 %v1184, 0.35355338
      %v1266 = vmul.f32 %v1233, 0.35355338
      %v1267 = vmax.f32 %v1235, %v1236
      %1268 = vmax.xlane.f32.xlu0 %v1267
      %v1269 = vpop.xlane.xlu0 %1268
      %v1270 = vmax.f32 %v1237, %v1238
      %1271 = vmax.xlane.f32.xlu0 %v1270
      %v1272 = vpop.xlane.xlu0 %1271
      %v1273 = vmax.f32 %v1239, %v1240
      %1274 = vmax.xlane.f32.xlu0 %v1273
      %v1275 = vpop.xlane.xlu0 %1274
      %v1276 = vmax.f32 %v1241, %v1242
      %1277 = vmax.xlane.f32.xlu0 %v1276
      %v1278 = vpop.xlane.xlu0 %1277
      %v1279 = vmax.f32 %v1243, %v1244
      %1280 = vmax.xlane.f32.xlu0 %v1279
      %v1281 = vpop.xlane.xlu0 %1280
      %v1282 = vmax.f32 %v1245, %v1246
      %1283 = vmax.xlane.f32.xlu0 %v1282
      %v1284 = vpop.xlane.xlu0 %1283
      %v1285 = vmax.f32 %v1247, %v1248
      %1286 = vmax.xlane.f32.xlu0 %v1285
      %v1287 = vpop.xlane.xlu0 %1286
      %v1288 = vmax.f32 %v1249, %v1250
      %1289 = vmax.xlane.f32.xlu0 %v1288
      %v1290 = vpop.xlane.xlu0 %1289
      %v1291 = vmax.f32 %v1251, %v1252
      %1292 = vmax.xlane.f32.xlu0 %v1291
      %v1293 = vpop.xlane.xlu0 %1292
      %v1294 = vmax.f32 %v1253, %v1254
      %1295 = vmax.xlane.f32.xlu0 %v1294
      %v1296 = vpop.xlane.xlu0 %1295
      %v1297 = vmax.f32 %v1255, %v1256
      %1298 = vmax.xlane.f32.xlu0 %v1297
      %v1299 = vpop.xlane.xlu0 %1298
      %v1300 = vmax.f32 %v1257, %v1258
      %1301 = vmax.xlane.f32.xlu0 %v1300
      %v1302 = vpop.xlane.xlu0 %1301
      %v1303 = vmax.f32 %v1259, %v1260
      %1304 = vmax.xlane.f32.xlu0 %v1303
      %v1305 = vpop.xlane.xlu0 %1304
      %v1306 = vmax.f32 %v1261, %v1262
      %1307 = vmax.xlane.f32.xlu0 %v1306
      %v1308 = vpop.xlane.xlu0 %1307
      %v1309 = vmax.f32 %v1263, %v1264
      %1310 = vmax.xlane.f32.xlu0 %v1309
      %v1311 = vpop.xlane.xlu0 %1310
      %v1312 = vmax.f32 %v1265, %v1266
      %1313 = vmax.xlane.f32.xlu0 %v1312
      %v1314 = vpop.xlane.xlu0 %1313
      %v1315 = vsub.f32 %v1235, %v1269
      %v1316 = vsub.f32 %v1236, %v1269
      %v1317 = vsub.f32 %v1237, %v1272
      %v1318 = vsub.f32 %v1238, %v1272
      %v1319 = vsub.f32 %v1239, %v1275
      %v1320 = vsub.f32 %v1240, %v1275
      %v1321 = vsub.f32 %v1241, %v1278
      %v1322 = vsub.f32 %v1242, %v1278
      %v1323 = vsub.f32 %v1243, %v1281
      %v1324 = vsub.f32 %v1244, %v1281
      %v1325 = vsub.f32 %v1245, %v1284
      %v1326 = vsub.f32 %v1246, %v1284
      %v1327 = vsub.f32 %v1247, %v1287
      %v1328 = vsub.f32 %v1248, %v1287
      %v1329 = vsub.f32 %v1249, %v1290
      %v1330 = vsub.f32 %v1250, %v1290
      %v1331 = vsub.f32 %v1251, %v1293
      %v1332 = vsub.f32 %v1252, %v1293
      %v1333 = vsub.f32 %v1253, %v1296
      %v1334 = vsub.f32 %v1254, %v1296
      %v1335 = vsub.f32 %v1255, %v1299
      %v1336 = vsub.f32 %v1256, %v1299
      %v1337 = vsub.f32 %v1257, %v1302
      %v1338 = vsub.f32 %v1258, %v1302
      %v1339 = vsub.f32 %v1259, %v1305
      %v1340 = vsub.f32 %v1260, %v1305
      %v1341 = vsub.f32 %v1261, %v1308
      %v1342 = vsub.f32 %v1262, %v1308
      %v1343 = vsub.f32 %v1263, %v1311
      %v1344 = vsub.f32 %v1264, %v1311
      %v1345 = vsub.f32 %v1265, %v1314
      %v1346 = vsub.f32 %v1266, %v1314
      %v1347 = vmul.f32 %v1315, 1.442695
      %v1348 = vpow.pop %v1347
      %v1349 = vmul.f32 %v1316, 1.442695
      %v1350 = vpow.pop %v1349
      %v1351 = vmul.f32 %v1317, 1.442695
      %v1352 = vpow.pop %v1351
      %v1353 = vmul.f32 %v1318, 1.442695
      %v1354 = vpow.pop %v1353
      %v1355 = vmul.f32 %v1319, 1.442695
      %v1356 = vpow.pop %v1355
      %v1357 = vmul.f32 %v1320, 1.442695
      %v1358 = vpow.pop %v1357
      %v1359 = vmul.f32 %v1321, 1.442695
      %v1360 = vpow.pop %v1359
      %v1361 = vmul.f32 %v1322, 1.442695
      %v1362 = vpow.pop %v1361
      %v1363 = vmul.f32 %v1323, 1.442695
      %v1364 = vpow.pop %v1363
      %v1365 = vmul.f32 %v1324, 1.442695
      %v1366 = vpow.pop %v1365
      %v1367 = vmul.f32 %v1325, 1.442695
      %v1368 = vpow.pop %v1367
      %v1369 = vmul.f32 %v1326, 1.442695
      %v1370 = vpow.pop %v1369
      %v1371 = vmul.f32 %v1327, 1.442695
      %v1372 = vpow.pop %v1371
      %v1373 = vmul.f32 %v1328, 1.442695
      %v1374 = vpow.pop %v1373
      %v1375 = vmul.f32 %v1329, 1.442695
      %v1376 = vpow.pop %v1375
      %v1377 = vmul.f32 %v1330, 1.442695
      %v1378 = vpow.pop %v1377
      %v1379 = vmul.f32 %v1331, 1.442695
      %v1380 = vpow.pop %v1379
      %v1381 = vmul.f32 %v1332, 1.442695
      %v1382 = vpow.pop %v1381
      %v1383 = vmul.f32 %v1333, 1.442695
      %v1384 = vpow.pop %v1383
      %v1385 = vmul.f32 %v1334, 1.442695
      %v1386 = vpow.pop %v1385
      %v1387 = vmul.f32 %v1335, 1.442695
      %v1388 = vpow.pop %v1387
      %v1389 = vmul.f32 %v1336, 1.442695
      %v1390 = vpow.pop %v1389
      %v1391 = vmul.f32 %v1337, 1.442695
      %v1392 = vpow.pop %v1391
      %v1393 = vmul.f32 %v1338, 1.442695
      %v1394 = vpow.pop %v1393
      %v1395 = vmul.f32 %v1339, 1.442695
      %v1396 = vpow.pop %v1395
      %v1397 = vmul.f32 %v1340, 1.442695
      %v1398 = vpow.pop %v1397
      %v1399 = vmul.f32 %v1341, 1.442695
      %v1400 = vpow.pop %v1399
      %v1401 = vmul.f32 %v1342, 1.442695
      %v1402 = vpow.pop %v1401
      %v1403 = vmul.f32 %v1343, 1.442695
      %v1404 = vpow.pop %v1403
      %v1405 = vmul.f32 %v1344, 1.442695
      %v1406 = vpow.pop %v1405
      %v1407 = vmul.f32 %v1345, 1.442695
      %v1408 = vpow.pop %v1407
      %v1409 = vmul.f32 %v1346, 1.442695
      %v1410 = vpow.pop %v1409
      %v1411 = vadd.f32 %v1348, %v1350
      %1412 = vadd.xlane.f32.xlu0 %v1411
      %v1413 = vpop.xlane.xlu0 %1412
      %v1414 = vadd.f32 %v1352, %v1354
      %1415 = vadd.xlane.f32.xlu0 %v1414
      %v1416 = vpop.xlane.xlu0 %1415
      %v1417 = vadd.f32 %v1356, %v1358
      %1418 = vadd.xlane.f32.xlu0 %v1417
      %v1419 = vpop.xlane.xlu0 %1418
      %v1420 = vadd.f32 %v1360, %v1362
      %1421 = vadd.xlane.f32.xlu0 %v1420
      %v1422 = vpop.xlane.xlu0 %1421
      %v1423 = vadd.f32 %v1364, %v1366
      %1424 = vadd.xlane.f32.xlu0 %v1423
      %v1425 = vpop.xlane.xlu0 %1424
      %v1426 = vadd.f32 %v1368, %v1370
      %1427 = vadd.xlane.f32.xlu0 %v1426
      %v1428 = vpop.xlane.xlu0 %1427
      %v1429 = vadd.f32 %v1372, %v1374
      %1430 = vadd.xlane.f32.xlu0 %v1429
      %v1431 = vpop.xlane.xlu0 %1430
      %v1432 = vadd.f32 %v1376, %v1378
      %1433 = vadd.xlane.f32.xlu0 %v1432
      %v1434 = vpop.xlane.xlu0 %1433
      %v1435 = vadd.f32 %v1380, %v1382
      %1436 = vadd.xlane.f32.xlu0 %v1435
      %v1437 = vpop.xlane.xlu0 %1436
      %v1438 = vadd.f32 %v1384, %v1386
      %1439 = vadd.xlane.f32.xlu0 %v1438
      %v1440 = vpop.xlane.xlu0 %1439
      %v1441 = vadd.f32 %v1388, %v1390
      %1442 = vadd.xlane.f32.xlu0 %v1441
      %v1443 = vpop.xlane.xlu0 %1442
      %v1444 = vadd.f32 %v1392, %v1394
      %1445 = vadd.xlane.f32.xlu0 %v1444
      %v1446 = vpop.xlane.xlu0 %1445
      %v1447 = vadd.f32 %v1396, %v1398
      %1448 = vadd.xlane.f32.xlu0 %v1447
      %v1449 = vpop.xlane.xlu0 %1448
      %v1450 = vadd.f32 %v1400, %v1402
      %1451 = vadd.xlane.f32.xlu0 %v1450
      %v1452 = vpop.xlane.xlu0 %1451
      %v1453 = vadd.f32 %v1404, %v1406
      %1454 = vadd.xlane.f32.xlu0 %v1453
      %v1455 = vpop.xlane.xlu0 %1454
      %v1456 = vadd.f32 %v1408, %v1410
      %1457 = vadd.xlane.f32.xlu0 %v1456
      %v1458 = vpop.xlane.xlu0 %1457
      %v1459 = vrcp.pop %v1413
      %v1460 = vrcp.pop %v1416
      %v1461 = vrcp.pop %v1419
      %v1462 = vrcp.pop %v1422
      %v1463 = vrcp.pop %v1425
      %v1464 = vrcp.pop %v1428
      %v1465 = vrcp.pop %v1431
      %v1466 = vrcp.pop %v1434
      %v1467 = vrcp.pop %v1437
      %v1468 = vrcp.pop %v1440
      %v1469 = vrcp.pop %v1443
      %v1470 = vrcp.pop %v1446
      %v1471 = vrcp.pop %v1449
      %v1472 = vrcp.pop %v1452
      %v1473 = vrcp.pop %v1455
      %v1474 = vrcp.pop %v1458
      %v1475 = vmul.f32 %v1348, %v1459
      %v1476 = vmul.f32 %v1350, %v1459
      %v1477 = vmul.f32 %v1352, %v1460
      %v1478 = vmul.f32 %v1354, %v1460
      %v1479 = vmul.f32 %v1356, %v1461
      %v1480 = vmul.f32 %v1358, %v1461
      %v1481 = vmul.f32 %v1360, %v1462
      %v1482 = vmul.f32 %v1362, %v1462
      %v1483 = vmul.f32 %v1364, %v1463
      %v1484 = vmul.f32 %v1366, %v1463
      %v1485 = vmul.f32 %v1368, %v1464
      %v1486 = vmul.f32 %v1370, %v1464
      %v1487 = vmul.f32 %v1372, %v1465
      %v1488 = vmul.f32 %v1374, %v1465
      %v1489 = vmul.f32 %v1376, %v1466
      %v1490 = vmul.f32 %v1378, %v1466
      %v1491 = vmul.f32 %v1380, %v1467
      %v1492 = vmul.f32 %v1382, %v1467
      %v1493 = vmul.f32 %v1384, %v1468
      %v1494 = vmul.f32 %v1386, %v1468
      %v1495 = vmul.f32 %v1388, %v1469
      %v1496 = vmul.f32 %v1390, %v1469
      %v1497 = vmul.f32 %v1392, %v1470
      %v1498 = vmul.f32 %v1394, %v1470
      %v1499 = vmul.f32 %v1396, %v1471
      %v1500 = vmul.f32 %v1398, %v1471
      %v1501 = vmul.f32 %v1400, %v1472
      %v1502 = vmul.f32 %v1402, %v1472
      %v1503 = vmul.f32 %v1404, %v1473
      %v1504 = vmul.f32 %v1406, %v1473
      %v1505 = vmul.f32 %v1408, %v1474
      %v1506 = vmul.f32 %v1410, %v1474
      %v1507 = vpack.c.bf16 %v1477, %v1475
      %v1508 = vpack.c.bf16 %v1478, %v1476
      %v1509 = vpack.c.bf16 %v1481, %v1479
      %v1510 = vpack.c.bf16 %v1482, %v1480
      %v1511 = vpack.c.bf16 %v1485, %v1483
      %v1512 = vpack.c.bf16 %v1486, %v1484
      %v1513 = vpack.c.bf16 %v1489, %v1487
      %v1514 = vpack.c.bf16 %v1490, %v1488
      %v1515 = vpack.c.bf16 %v1493, %v1491
      %v1516 = vpack.c.bf16 %v1494, %v1492
      %v1517 = vpack.c.bf16 %v1497, %v1495
      %v1518 = vpack.c.bf16 %v1498, %v1496
      %v1519 = vpack.c.bf16 %v1501, %v1499
      %v1520 = vpack.c.bf16 %v1502, %v1500
      %v1521 = vpack.c.bf16 %v1505, %v1503
      %v1522 = vpack.c.bf16 %v1506, %v1504
      %1523 = vmatpush.bf16.msra.mxu0 %v1055
      %1524 = vmatpush.bf16.msra.mxu0 %v1054
      %1525 = vmatpush.bf16.msra.mxu0 %v1053
      %1526 = vmatpush.bf16.msra.mxu0 %v1052
      %1527 = vmatpush.bf16.msra.mxu0 %v1051
      %1528 = vmatpush.bf16.msra.mxu0 %v1050
      %1529 = vmatpush.bf16.msra.mxu0 %v1049
      %1530 = vmatpush.bf16.msra.mxu0 %v1048
      %1531 = vmatmul.bf16.gmra.mxu0 %v1507
      %v1532 = vpop.f32.mrf.mxu0
      %v1533 = vadd.f32 0.0, %v1532
      %v1534 = vpop.f32.mrf.mxu0
      %v1535 = vadd.f32 0.0, %v1534
      %1536 = vmatmul.bf16.gmra.mxu0 %v1509
      %v1537 = vpop.f32.mrf.mxu0
      %v1538 = vadd.f32 0.0, %v1537
      %v1539 = vpop.f32.mrf.mxu0
      %v1540 = vadd.f32 0.0, %v1539
      %1541 = vmatmul.bf16.gmra.mxu0 %v1511
      %v1542 = vpop.f32.mrf.mxu0
      %v1543 = vadd.f32 0.0, %v1542
      %v1544 = vpop.f32.mrf.mxu0
      %v1545 = vadd.f32 0.0, %v1544
      %1546 = vmatmul.bf16.gmra.mxu0 %v1513
      %v1547 = vpop.f32.mrf.mxu0
      %v1548 = vadd.f32 0.0, %v1547
      %v1549 = vpop.f32.mrf.mxu0
      %v1550 = vadd.f32 0.0, %v1549
      %1551 = vmatmul.bf16.gmra.mxu0 %v1515
      %v1552 = vpop.f32.mrf.mxu0
      %v1553 = vadd.f32 0.0, %v1552
      %v1554 = vpop.f32.mrf.mxu0
      %v1555 = vadd.f32 0.0, %v1554
      %1556 = vmatmul.bf16.gmra.mxu0 %v1517
      %v1557 = vpop.f32.mrf.mxu0
      %v1558 = vadd.f32 0.0, %v1557
      %v1559 = vpop.f32.mrf.mxu0
      %v1560 = vadd.f32 0.0, %v1559
      %1561 = vmatmul.bf16.gmra.mxu0 %v1519
      %v1562 = vpop.f32.mrf.mxu0
      %v1563 = vadd.f32 0.0, %v1562
      %v1564 = vpop.f32.mrf.mxu0
      %v1565 = vadd.f32 0.0, %v1564
      %1566 = vmatmul.bf16.gmra.mxu0 %v1521
      %v1567 = vpop.f32.mrf.mxu0
      %v1568 = vadd.f32 0.0, %v1567
      %v1569 = vpop.f32.mrf.mxu0
      %v1570 = vadd.f32 0.0, %v1569
      %1571 = vdwg.mxu0
      %1572 = vmatpush.bf16.msra.mxu0 %v1063
      %1573 = vmatpush.bf16.msra.mxu0 %v1062
      %1574 = vmatpush.bf16.msra.mxu0 %v1061
      %1575 = vmatpush.bf16.msra.mxu0 %v1060
      %1576 = vmatpush.bf16.msra.mxu0 %v1059
      %1577 = vmatpush.bf16.msra.mxu0 %v1058
      %1578 = vmatpush.bf16.msra.mxu0 %v1057
      %1579 = vmatpush.bf16.msra.mxu0 %v1056
      %1580 = vmatmul.bf16.gmra.mxu0 %v1508
      %v1581 = vpop.f32.mrf.mxu0
      %v1582 = vadd.f32 %v1533, %v1581
      %v1583 = vpop.f32.mrf.mxu0
      %v1584 = vadd.f32 %v1535, %v1583
      %1585 = vmatmul.bf16.gmra.mxu0 %v1510
      %v1586 = vpop.f32.mrf.mxu0
      %v1587 = vadd.f32 %v1538, %v1586
      %v1588 = vpop.f32.mrf.mxu0
      %v1589 = vadd.f32 %v1540, %v1588
      %1590 = vmatmul.bf16.gmra.mxu0 %v1512
      %v1591 = vpop.f32.mrf.mxu0
      %v1592 = vadd.f32 %v1543, %v1591
      %v1593 = vpop.f32.mrf.mxu0
      %v1594 = vadd.f32 %v1545, %v1593
      %1595 = vmatmul.bf16.gmra.mxu0 %v1514
      %v1596 = vpop.f32.mrf.mxu0
      %v1597 = vadd.f32 %v1548, %v1596
      %v1598 = vpop.f32.mrf.mxu0
      %v1599 = vadd.f32 %v1550, %v1598
      %1600 = vmatmul.bf16.gmra.mxu0 %v1516
      %v1601 = vpop.f32.mrf.mxu0
      %v1602 = vadd.f32 %v1553, %v1601
      %v1603 = vpop.f32.mrf.mxu0
      %v1604 = vadd.f32 %v1555, %v1603
      %1605 = vmatmul.bf16.gmra.mxu0 %v1518
      %v1606 = vpop.f32.mrf.mxu0
      %v1607 = vadd.f32 %v1558, %v1606
      %v1608 = vpop.f32.mrf.mxu0
      %v1609 = vadd.f32 %v1560, %v1608
      %1610 = vmatmul.bf16.gmra.mxu0 %v1520
      %v1611 = vpop.f32.mrf.mxu0
      %v1612 = vadd.f32 %v1563, %v1611
      %v1613 = vpop.f32.mrf.mxu0
      %v1614 = vadd.f32 %v1565, %v1613
      %1615 = vmatmul.bf16.gmra.mxu0 %v1522
      %v1616 = vpop.f32.mrf.mxu0
      %v1617 = vadd.f32 %v1568, %v1616
      %v1618 = vpop.f32.mrf.mxu0
      %v1619 = vadd.f32 %v1570, %v1618
      %1620 = vdwg.mxu0
      %1621 = vst.msk [vmem:[#allocation2] sm:$0xff] %vm1064, %v1582
      %1622 = vst.msk [vmem:[#allocation2 + $0x8] sm:$0xff] %vm1064, %v1584
      %1623 = vst.msk [vmem:[#allocation2 + $0x10] sm:$0xff] %vm1064, %v1587
      %1624 = vst.msk [vmem:[#allocation2 + $0x18] sm:$0xff] %vm1064, %v1589
      %1625 = vst.msk [vmem:[#allocation2 + $0x20] sm:$0xff] %vm1064, %v1592
      %1626 = vst.msk [vmem:[#allocation2 + $0x28] sm:$0xff] %vm1064, %v1594
      %1627 = vst.msk [vmem:[#allocation2 + $0x30] sm:$0xff] %vm1064, %v1597
      %1628 = vst.msk [vmem:[#allocation2 + $0x38] sm:$0xff] %vm1064, %v1599
      %1629 = vst.msk [vmem:[#allocation2 + $0x40] sm:$0xff] %vm1064, %v1602
      %1630 = vst.msk [vmem:[#allocation2 + $0x48] sm:$0xff] %vm1064, %v1604
      %1631 = vst.msk [vmem:[#allocation2 + $0x50] sm:$0xff] %vm1064, %v1607
      %1632 = vst.msk [vmem:[#allocation2 + $0x58] sm:$0xff] %vm1064, %v1609
      %1633 = vst.msk [vmem:[#allocation2 + $0x60] sm:$0xff] %vm1064, %v1612
      %1634 = vst.msk [vmem:[#allocation2 + $0x68] sm:$0xff] %vm1064, %v1614
      %1635 = vst.msk [vmem:[#allocation2 + $0x70] sm:$0xff] %vm1064, %v1617
      %1636 = vst.msk [vmem:[#allocation2 + $0x78] sm:$0xff] %vm1064, %v1619
      %1645 = vrot.lane.b32.xlu0 %v1024, 120
      %v1646 = vpop.permute.xlu0 %1645
      %1647 = vrot.lane.b32.xlu0 %v1025, 120
      %v1648 = vpop.permute.xlu0 %1647
      %1649 = vrot.lane.b32.xlu0 %v1026, 120
      %v1650 = vpop.permute.xlu0 %1649
      %1651 = vrot.lane.b32.xlu0 %v1027, 120
      %v1652 = vpop.permute.xlu0 %1651
      %1653 = vrot.lane.b32.xlu0 %v1028, 120
      %v1654 = vpop.permute.xlu0 %1653
      %1655 = vrot.lane.b32.xlu0 %v1029, 120
      %v1656 = vpop.permute.xlu0 %1655
      %1657 = vrot.lane.b32.xlu0 %v1030, 120
      %v1658 = vpop.permute.xlu0 %1657
      %1659 = vrot.lane.b32.xlu0 %v1031, 120
      %v1660 = vpop.permute.xlu0 %1659
      %1677 = vrot.lane.b32.xlu0 %v1032, 120
      %v1678 = vpop.permute.xlu0 %1677
      %1679 = vrot.lane.b32.xlu0 %v1033, 120
      %v1680 = vpop.permute.xlu0 %1679
      %1681 = vrot.lane.b32.xlu0 %v1034, 120
      %v1682 = vpop.permute.xlu0 %1681
      %1683 = vrot.lane.b32.xlu0 %v1035, 120
      %v1684 = vpop.permute.xlu0 %1683
      %1685 = vrot.lane.b32.xlu0 %v1036, 120
      %v1686 = vpop.permute.xlu0 %1685
      %1687 = vrot.lane.b32.xlu0 %v1037, 120
      %v1688 = vpop.permute.xlu0 %1687
      %1689 = vrot.lane.b32.xlu0 %v1038, 120
      %v1690 = vpop.permute.xlu0 %1689
      %1691 = vrot.lane.b32.xlu0 %v1039, 120
      %v1692 = vpop.permute.xlu0 %1691
      %1693 = vrot.lane.b32.xlu0 %v1040, 120
      %v1694 = vpop.permute.xlu0 %1693
      %1695 = vrot.lane.b32.xlu0 %v1041, 120
      %v1696 = vpop.permute.xlu0 %1695
      %1697 = vrot.lane.b32.xlu0 %v1042, 120
      %v1698 = vpop.permute.xlu0 %1697
      %1699 = vrot.lane.b32.xlu0 %v1043, 120
      %v1700 = vpop.permute.xlu0 %1699
      %1701 = vrot.lane.b32.xlu0 %v1044, 120
      %v1702 = vpop.permute.xlu0 %1701
      %1703 = vrot.lane.b32.xlu0 %v1045, 120
      %v1704 = vpop.permute.xlu0 %1703
      %1705 = vrot.lane.b32.xlu0 %v1046, 120
      %v1706 = vpop.permute.xlu0 %1705
      %1707 = vrot.lane.b32.xlu0 %v1047, 120
      %v1708 = vpop.permute.xlu0 %1707
      %v1710 = vsel %vm1064, %v1646, 0
      %v1713 = vsel %vm1064, %v1648, 0
      %v1716 = vsel %vm1064, %v1650, 0
      %v1719 = vsel %vm1064, %v1652, 0
      %v1722 = vsel %vm1064, %v1654, 0
      %v1725 = vsel %vm1064, %v1656, 0
      %v1728 = vsel %vm1064, %v1658, 0
      %v1731 = vsel %vm1064, %v1660, 0
      %v1734 = vsel %vm1064, %v1678, 0
      %v1737 = vsel %vm1064, %v1680, 0
      %v1740 = vsel %vm1064, %v1682, 0
      %v1743 = vsel %vm1064, %v1684, 0
      %v1746 = vsel %vm1064, %v1686, 0
      %v1749 = vsel %vm1064, %v1688, 0
      %v1752 = vsel %vm1064, %v1690, 0
      %v1755 = vsel %vm1064, %v1692, 0
      %v1758 = vsel %vm1064, %v1694, 0
      %v1761 = vsel %vm1064, %v1696, 0
      %v1764 = vsel %vm1064, %v1698, 0
      %v1767 = vsel %vm1064, %v1700, 0
      %v1770 = vsel %vm1064, %v1702, 0
      %v1773 = vsel %vm1064, %v1704, 0
      %v1776 = vsel %vm1064, %v1706, 0
      %v1779 = vsel %vm1064, %v1708, 0
      %1781 = vmatpush.bf16.xpose.msra.mxu0 %v1755
      %1782 = vmatpush.bf16.xpose.msra.mxu0 %v1752
      %1783 = vmatpush.bf16.xpose.msra.mxu0 %v1749
      %1784 = vmatpush.bf16.xpose.msra.mxu0 %v1746
      %1785 = vmatpush.bf16.xpose.msra.mxu0 %v1743
      %1786 = vmatpush.bf16.xpose.msra.mxu0 %v1740
      %1787 = vmatpush.bf16.xpose.msra.mxu0 %v1737
      %1788 = vmatpush.bf16.xpose.msra.mxu0 %v1734
      %1789 = vmatmul.bf16.gmra.mxu0 %v1710
      %v1790 = vpop.f32.mrf.mxu0
      %v1791 = vadd.f32 0.0, %v1790
      %v1792 = vpop.f32.mrf.mxu0
      %v1793 = vadd.f32 0.0, %v1792
      %1794 = vmatmul.bf16.gmra.mxu0 %v1713
      %v1795 = vpop.f32.mrf.mxu0
      %v1796 = vadd.f32 0.0, %v1795
      %v1797 = vpop.f32.mrf.mxu0
      %v1798 = vadd.f32 0.0, %v1797
      %1799 = vmatmul.bf16.gmra.mxu0 %v1716
      %v1800 = vpop.f32.mrf.mxu0
      %v1801 = vadd.f32 0.0, %v1800
      %v1802 = vpop.f32.mrf.mxu0
      %v1803 = vadd.f32 0.0, %v1802
      %1804 = vmatmul.bf16.gmra.mxu0 %v1719
      %v1805 = vpop.f32.mrf.mxu0
      %v1806 = vadd.f32 0.0, %v1805
      %v1807 = vpop.f32.mrf.mxu0
      %v1808 = vadd.f32 0.0, %v1807
      %1809 = vmatmul.bf16.gmra.mxu0 %v1722
      %v1810 = vpop.f32.mrf.mxu0
      %v1811 = vadd.f32 0.0, %v1810
      %v1812 = vpop.f32.mrf.mxu0
      %v1813 = vadd.f32 0.0, %v1812
      %1814 = vmatmul.bf16.gmra.mxu0 %v1725
      %v1815 = vpop.f32.mrf.mxu0
      %v1816 = vadd.f32 0.0, %v1815
      %v1817 = vpop.f32.mrf.mxu0
      %v1818 = vadd.f32 0.0, %v1817
      %1819 = vmatmul.bf16.gmra.mxu0 %v1728
      %v1820 = vpop.f32.mrf.mxu0
      %v1821 = vadd.f32 0.0, %v1820
      %v1822 = vpop.f32.mrf.mxu0
      %v1823 = vadd.f32 0.0, %v1822
      %1824 = vmatmul.bf16.gmra.mxu0 %v1731
      %v1825 = vpop.f32.mrf.mxu0
      %v1826 = vadd.f32 0.0, %v1825
      %v1827 = vpop.f32.mrf.mxu0
      %v1828 = vadd.f32 0.0, %v1827
      %1829 = vdwg.mxu0
      %1830 = vmatpush.bf16.xpose.msra.mxu0 %v1779
      %1831 = vmatpush.bf16.xpose.msra.mxu0 %v1776
      %1832 = vmatpush.bf16.xpose.msra.mxu0 %v1773
      %1833 = vmatpush.bf16.xpose.msra.mxu0 %v1770
      %1834 = vmatpush.bf16.xpose.msra.mxu0 %v1767
      %1835 = vmatpush.bf16.xpose.msra.mxu0 %v1764
      %1836 = vmatpush.bf16.xpose.msra.mxu0 %v1761
      %1837 = vmatpush.bf16.xpose.msra.mxu0 %v1758
      %1838 = vmatmul.bf16.gmra.mxu0 %v1710
      %v1839 = vpop.f32.mrf.mxu0
      %v1840 = vadd.f32 0.0, %v1839
      %v1841 = vpop.f32.mrf.mxu0
      %v1842 = vadd.f32 0.0, %v1841
      %1843 = vmatmul.bf16.gmra.mxu0 %v1713
      %v1844 = vpop.f32.mrf.mxu0
      %v1845 = vadd.f32 0.0, %v1844
      %v1846 = vpop.f32.mrf.mxu0
      %v1847 = vadd.f32 0.0, %v1846
      %1848 = vmatmul.bf16.gmra.mxu0 %v1716
      %v1849 = vpop.f32.mrf.mxu0
      %v1850 = vadd.f32 0.0, %v1849
      %v1851 = vpop.f32.mrf.mxu0
      %v1852 = vadd.f32 0.0, %v1851
      %1853 = vmatmul.bf16.gmra.mxu0 %v1719
      %v1854 = vpop.f32.mrf.mxu0
      %v1855 = vadd.f32 0.0, %v1854
      %v1856 = vpop.f32.mrf.mxu0
      %v1857 = vadd.f32 0.0, %v1856
      %1858 = vmatmul.bf16.gmra.mxu0 %v1722
      %v1859 = vpop.f32.mrf.mxu0
      %v1860 = vadd.f32 0.0, %v1859
      %v1861 = vpop.f32.mrf.mxu0
      %v1862 = vadd.f32 0.0, %v1861
      %1863 = vmatmul.bf16.gmra.mxu0 %v1725
      %v1864 = vpop.f32.mrf.mxu0
      %v1865 = vadd.f32 0.0, %v1864
      %v1866 = vpop.f32.mrf.mxu0
      %v1867 = vadd.f32 0.0, %v1866
      %1868 = vmatmul.bf16.gmra.mxu0 %v1728
      %v1869 = vpop.f32.mrf.mxu0
      %v1870 = vadd.f32 0.0, %v1869
      %v1871 = vpop.f32.mrf.mxu0
      %v1872 = vadd.f32 0.0, %v1871
      %1873 = vmatmul.bf16.gmra.mxu0 %v1731
      %v1874 = vpop.f32.mrf.mxu0
      %v1875 = vadd.f32 0.0, %v1874
      %v1876 = vpop.f32.mrf.mxu0
      %v1877 = vadd.f32 0.0, %v1876
      %1878 = vdwg.mxu0
      %v1879 = vmul.f32 %v1791, 0.35355338
      %v1880 = vmul.f32 %v1840, 0.35355338
      %v1881 = vmul.f32 %v1793, 0.35355338
      %v1882 = vmul.f32 %v1842, 0.35355338
      %v1883 = vmul.f32 %v1796, 0.35355338
      %v1884 = vmul.f32 %v1845, 0.35355338
      %v1885 = vmul.f32 %v1798, 0.35355338
      %v1886 = vmul.f32 %v1847, 0.35355338
      %v1887 = vmul.f32 %v1801, 0.35355338
      %v1888 = vmul.f32 %v1850, 0.35355338
      %v1889 = vmul.f32 %v1803, 0.35355338
      %v1890 = vmul.f32 %v1852, 0.35355338
      %v1891 = vmul.f32 %v1806, 0.35355338
      %v1892 = vmul.f32 %v1855, 0.35355338
      %v1893 = vmul.f32 %v1808, 0.35355338
      %v1894 = vmul.f32 %v1857, 0.35355338
      %v1895 = vmul.f32 %v1811, 0.35355338
      %v1896 = vmul.f32 %v1860, 0.35355338
      %v1897 = vmul.f32 %v1813, 0.35355338
      %v1898 = vmul.f32 %v1862, 0.35355338
      %v1899 = vmul.f32 %v1816, 0.35355338
      %v1900 = vmul.f32 %v1865, 0.35355338
      %v1901 = vmul.f32 %v1818, 0.35355338
      %v1902 = vmul.f32 %v1867, 0.35355338
      %v1903 = vmul.f32 %v1821, 0.35355338
      %v1904 = vmul.f32 %v1870, 0.35355338
      %v1905 = vmul.f32 %v1823, 0.35355338
      %v1906 = vmul.f32 %v1872, 0.35355338
      %v1907 = vmul.f32 %v1826, 0.35355338
      %v1908 = vmul.f32 %v1875, 0.35355338
      %v1909 = vmul.f32 %v1828, 0.35355338
      %v1910 = vmul.f32 %v1877, 0.35355338
      %v1911 = vmax.f32 %v1879, %v1880
      %1912 = vmax.xlane.f32.xlu0 %v1911
      %v1913 = vpop.xlane.xlu0 %1912
      %v1914 = vmax.f32 %v1881, %v1882
      %1915 = vmax.xlane.f32.xlu0 %v1914
      %v1916 = vpop.xlane.xlu0 %1915
      %v1917 = vmax.f32 %v1883, %v1884
      %1918 = vmax.xlane.f32.xlu0 %v1917
      %v1919 = vpop.xlane.xlu0 %1918
      %v1920 = vmax.f32 %v1885, %v1886
      %1921 = vmax.xlane.f32.xlu0 %v1920
      %v1922 = vpop.xlane.xlu0 %1921
      %v1923 = vmax.f32 %v1887, %v1888
      %1924 = vmax.xlane.f32.xlu0 %v1923
      %v1925 = vpop.xlane.xlu0 %1924
      %v1926 = vmax.f32 %v1889, %v1890
      %1927 = vmax.xlane.f32.xlu0 %v1926
      %v1928 = vpop.xlane.xlu0 %1927
      %v1929 = vmax.f32 %v1891, %v1892
      %1930 = vmax.xlane.f32.xlu0 %v1929
      %v1931 = vpop.xlane.xlu0 %1930
      %v1932 = vmax.f32 %v1893, %v1894
      %1933 = vmax.xlane.f32.xlu0 %v1932
      %v1934 = vpop.xlane.xlu0 %1933
      %v1935 = vmax.f32 %v1895, %v1896
      %1936 = vmax.xlane.f32.xlu0 %v1935
      %v1937 = vpop.xlane.xlu0 %1936
      %v1938 = vmax.f32 %v1897, %v1898
      %1939 = vmax.xlane.f32.xlu0 %v1938
      %v1940 = vpop.xlane.xlu0 %1939
      %v1941 = vmax.f32 %v1899, %v1900
      %1942 = vmax.xlane.f32.xlu0 %v1941
      %v1943 = vpop.xlane.xlu0 %1942
      %v1944 = vmax.f32 %v1901, %v1902
      %1945 = vmax.xlane.f32.xlu0 %v1944
      %v1946 = vpop.xlane.xlu0 %1945
      %v1947 = vmax.f32 %v1903, %v1904
      %1948 = vmax.xlane.f32.xlu0 %v1947
      %v1949 = vpop.xlane.xlu0 %1948
      %v1950 = vmax.f32 %v1905, %v1906
      %1951 = vmax.xlane.f32.xlu0 %v1950
      %v1952 = vpop.xlane.xlu0 %1951
      %v1953 = vmax.f32 %v1907, %v1908
      %1954 = vmax.xlane.f32.xlu0 %v1953
      %v1955 = vpop.xlane.xlu0 %1954
      %v1956 = vmax.f32 %v1909, %v1910
      %1957 = vmax.xlane.f32.xlu0 %v1956
      %v1958 = vpop.xlane.xlu0 %1957
      %v1959 = vsub.f32 %v1879, %v1913
      %v1960 = vsub.f32 %v1880, %v1913
      %v1961 = vsub.f32 %v1881, %v1916
      %v1962 = vsub.f32 %v1882, %v1916
      %v1963 = vsub.f32 %v1883, %v1919
      %v1964 = vsub.f32 %v1884, %v1919
      %v1965 = vsub.f32 %v1885, %v1922
      %v1966 = vsub.f32 %v1886, %v1922
      %v1967 = vsub.f32 %v1887, %v1925
      %v1968 = vsub.f32 %v1888, %v1925
      %v1969 = vsub.f32 %v1889, %v1928
      %v1970 = vsub.f32 %v1890, %v1928
      %v1971 = vsub.f32 %v1891, %v1931
      %v1972 = vsub.f32 %v1892, %v1931
      %v1973 = vsub.f32 %v1893, %v1934
      %v1974 = vsub.f32 %v1894, %v1934
      %v1975 = vsub.f32 %v1895, %v1937
      %v1976 = vsub.f32 %v1896, %v1937
      %v1977 = vsub.f32 %v1897, %v1940
      %v1978 = vsub.f32 %v1898, %v1940
      %v1979 = vsub.f32 %v1899, %v1943
      %v1980 = vsub.f32 %v1900, %v1943
      %v1981 = vsub.f32 %v1901, %v1946
      %v1982 = vsub.f32 %v1902, %v1946
      %v1983 = vsub.f32 %v1903, %v1949
      %v1984 = vsub.f32 %v1904, %v1949
      %v1985 = vsub.f32 %v1905, %v1952
      %v1986 = vsub.f32 %v1906, %v1952
      %v1987 = vsub.f32 %v1907, %v1955
      %v1988 = vsub.f32 %v1908, %v1955
      %v1989 = vsub.f32 %v1909, %v1958
      %v1990 = vsub.f32 %v1910, %v1958
      %v1991 = vmul.f32 %v1959, 1.442695
      %v1992 = vpow.pop %v1991
      %v1993 = vmul.f32 %v1960, 1.442695
      %v1994 = vpow.pop %v1993
      %v1995 = vmul.f32 %v1961, 1.442695
      %v1996 = vpow.pop %v1995
      %v1997 = vmul.f32 %v1962, 1.442695
      %v1998 = vpow.pop %v1997
      %v1999 = vmul.f32 %v1963, 1.442695
      %v2000 = vpow.pop %v1999
      %v2001 = vmul.f32 %v1964, 1.442695
      %v2002 = vpow.pop %v2001
      %v2003 = vmul.f32 %v1965, 1.442695
      %v2004 = vpow.pop %v2003
      %v2005 = vmul.f32 %v1966, 1.442695
      %v2006 = vpow.pop %v2005
      %v2007 = vmul.f32 %v1967, 1.442695
      %v2008 = vpow.pop %v2007
      %v2009 = vmul.f32 %v1968, 1.442695
      %v2010 = vpow.pop %v2009
      %v2011 = vmul.f32 %v1969, 1.442695
      %v2012 = vpow.pop %v2011
      %v2013 = vmul.f32 %v1970, 1.442695
      %v2014 = vpow.pop %v2013
      %v2015 = vmul.f32 %v1971, 1.442695
      %v2016 = vpow.pop %v2015
      %v2017 = vmul.f32 %v1972, 1.442695
      %v2018 = vpow.pop %v2017
      %v2019 = vmul.f32 %v1973, 1.442695
      %v2020 = vpow.pop %v2019
      %v2021 = vmul.f32 %v1974, 1.442695
      %v2022 = vpow.pop %v2021
      %v2023 = vmul.f32 %v1975, 1.442695
      %v2024 = vpow.pop %v2023
      %v2025 = vmul.f32 %v1976, 1.442695
      %v2026 = vpow.pop %v2025
      %v2027 = vmul.f32 %v1977, 1.442695
      %v2028 = vpow.pop %v2027
      %v2029 = vmul.f32 %v1978, 1.442695
      %v2030 = vpow.pop %v2029
      %v2031 = vmul.f32 %v1979, 1.442695
      %v2032 = vpow.pop %v2031
      %v2033 = vmul.f32 %v1980, 1.442695
      %v2034 = vpow.pop %v2033
      %v2035 = vmul.f32 %v1981, 1.442695
      %v2036 = vpow.pop %v2035
      %v2037 = vmul.f32 %v1982, 1.442695
      %v2038 = vpow.pop %v2037
      %v2039 = vmul.f32 %v1983, 1.442695
      %v2040 = vpow.pop %v2039
      %v2041 = vmul.f32 %v1984, 1.442695
      %v2042 = vpow.pop %v2041
      %v2043 = vmul.f32 %v1985, 1.442695
      %v2044 = vpow.pop %v2043
      %v2045 = vmul.f32 %v1986, 1.442695
      %v2046 = vpow.pop %v2045
      %v2047 = vmul.f32 %v1987, 1.442695
      %v2048 = vpow.pop %v2047
      %v2049 = vmul.f32 %v1988, 1.442695
      %v2050 = vpow.pop %v2049
      %v2051 = vmul.f32 %v1989, 1.442695
      %v2052 = vpow.pop %v2051
      %v2053 = vmul.f32 %v1990, 1.442695
      %v2054 = vpow.pop %v2053
      %v2055 = vadd.f32 %v1992, %v1994
      %2056 = vadd.xlane.f32.xlu0 %v2055
      %v2057 = vpop.xlane.xlu0 %2056
      %v2058 = vadd.f32 %v1996, %v1998
      %2059 = vadd.xlane.f32.xlu0 %v2058
      %v2060 = vpop.xlane.xlu0 %2059
      %v2061 = vadd.f32 %v2000, %v2002
      %2062 = vadd.xlane.f32.xlu0 %v2061
      %v2063 = vpop.xlane.xlu0 %2062
      %v2064 = vadd.f32 %v2004, %v2006
      %2065 = vadd.xlane.f32.xlu0 %v2064
      %v2066 = vpop.xlane.xlu0 %2065
      %v2067 = vadd.f32 %v2008, %v2010
      %2068 = vadd.xlane.f32.xlu0 %v2067
      %v2069 = vpop.xlane.xlu0 %2068
      %v2070 = vadd.f32 %v2012, %v2014
      %2071 = vadd.xlane.f32.xlu0 %v2070
      %v2072 = vpop.xlane.xlu0 %2071
      %v2073 = vadd.f32 %v2016, %v2018
      %2074 = vadd.xlane.f32.xlu0 %v2073
      %v2075 = vpop.xlane.xlu0 %2074
      %v2076 = vadd.f32 %v2020, %v2022
      %2077 = vadd.xlane.f32.xlu0 %v2076
      %v2078 = vpop.xlane.xlu0 %2077
      %v2079 = vadd.f32 %v2024, %v2026
      %2080 = vadd.xlane.f32.xlu0 %v2079
      %v2081 = vpop.xlane.xlu0 %2080
      %v2082 = vadd.f32 %v2028, %v2030
      %2083 = vadd.xlane.f32.xlu0 %v2082
      %v2084 = vpop.xlane.xlu0 %2083
      %v2085 = vadd.f32 %v2032, %v2034
      %2086 = vadd.xlane.f32.xlu0 %v2085
      %v2087 = vpop.xlane.xlu0 %2086
      %v2088 = vadd.f32 %v2036, %v2038
      %2089 = vadd.xlane.f32.xlu0 %v2088
      %v2090 = vpop.xlane.xlu0 %2089
      %v2091 = vadd.f32 %v2040, %v2042
      %2092 = vadd.xlane.f32.xlu0 %v2091
      %v2093 = vpop.xlane.xlu0 %2092
      %v2094 = vadd.f32 %v2044, %v2046
      %2095 = vadd.xlane.f32.xlu0 %v2094
      %v2096 = vpop.xlane.xlu0 %2095
      %v2097 = vadd.f32 %v2048, %v2050
      %2098 = vadd.xlane.f32.xlu0 %v2097
      %v2099 = vpop.xlane.xlu0 %2098
      %v2100 = vadd.f32 %v2052, %v2054
      %2101 = vadd.xlane.f32.xlu0 %v2100
      %v2102 = vpop.xlane.xlu0 %2101
      %v2103 = vrcp.pop %v2057
      %v2104 = vrcp.pop %v2060
      %v2105 = vrcp.pop %v2063
      %v2106 = vrcp.pop %v2066
      %v2107 = vrcp.pop %v2069
      %v2108 = vrcp.pop %v2072
      %v2109 = vrcp.pop %v2075
      %v2110 = vrcp.pop %v2078
      %v2111 = vrcp.pop %v2081
      %v2112 = vrcp.pop %v2084
      %v2113 = vrcp.pop %v2087
      %v2114 = vrcp.pop %v2090
      %v2115 = vrcp.pop %v2093
      %v2116 = vrcp.pop %v2096
      %v2117 = vrcp.pop %v2099
      %v2118 = vrcp.pop %v2102
      %v2119 = vmul.f32 %v1992, %v2103
      %v2120 = vmul.f32 %v1994, %v2103
      %v2121 = vmul.f32 %v1996, %v2104
      %v2122 = vmul.f32 %v1998, %v2104
      %v2123 = vmul.f32 %v2000, %v2105
      %v2124 = vmul.f32 %v2002, %v2105
      %v2125 = vmul.f32 %v2004, %v2106
      %v2126 = vmul.f32 %v2006, %v2106
      %v2127 = vmul.f32 %v2008, %v2107
      %v2128 = vmul.f32 %v2010, %v2107
      %v2129 = vmul.f32 %v2012, %v2108
      %v2130 = vmul.f32 %v2014, %v2108
      %v2131 = vmul.f32 %v2016, %v2109
      %v2132 = vmul.f32 %v2018, %v2109
      %v2133 = vmul.f32 %v2020, %v2110
      %v2134 = vmul.f32 %v2022, %v2110
      %v2135 = vmul.f32 %v2024, %v2111
      %v2136 = vmul.f32 %v2026, %v2111
      %v2137 = vmul.f32 %v2028, %v2112
      %v2138 = vmul.f32 %v2030, %v2112
      %v2139 = vmul.f32 %v2032, %v2113
      %v2140 = vmul.f32 %v2034, %v2113
      %v2141 = vmul.f32 %v2036, %v2114
      %v2142 = vmul.f32 %v2038, %v2114
      %v2143 = vmul.f32 %v2040, %v2115
      %v2144 = vmul.f32 %v2042, %v2115
      %v2145 = vmul.f32 %v2044, %v2116
      %v2146 = vmul.f32 %v2046, %v2116
      %v2147 = vmul.f32 %v2048, %v2117
      %v2148 = vmul.f32 %v2050, %v2117
      %v2149 = vmul.f32 %v2052, %v2118
      %v2150 = vmul.f32 %v2054, %v2118
      %v2151 = vpack.c.bf16 %v2121, %v2119
      %v2152 = vpack.c.bf16 %v2122, %v2120
      %v2153 = vpack.c.bf16 %v2125, %v2123
      %v2154 = vpack.c.bf16 %v2126, %v2124
      %v2155 = vpack.c.bf16 %v2129, %v2127
      %v2156 = vpack.c.bf16 %v2130, %v2128
      %v2157 = vpack.c.bf16 %v2133, %v2131
      %v2158 = vpack.c.bf16 %v2134, %v2132
      %v2159 = vpack.c.bf16 %v2137, %v2135
      %v2160 = vpack.c.bf16 %v2138, %v2136
      %v2161 = vpack.c.bf16 %v2141, %v2139
      %v2162 = vpack.c.bf16 %v2142, %v2140
      %v2163 = vpack.c.bf16 %v2145, %v2143
      %v2164 = vpack.c.bf16 %v2146, %v2144
      %v2165 = vpack.c.bf16 %v2149, %v2147
      %v2166 = vpack.c.bf16 %v2150, %v2148
      %2183 = vrot.lane.b32.xlu0 %v1048, 120
      %v2184 = vpop.permute.xlu0 %2183
      %2185 = vrot.lane.b32.xlu0 %v1049, 120
      %v2186 = vpop.permute.xlu0 %2185
      %2187 = vrot.lane.b32.xlu0 %v1050, 120
      %v2188 = vpop.permute.xlu0 %2187
      %2189 = vrot.lane.b32.xlu0 %v1051, 120
      %v2190 = vpop.permute.xlu0 %2189
      %2191 = vrot.lane.b32.xlu0 %v1052, 120
      %v2192 = vpop.permute.xlu0 %2191
      %2193 = vrot.lane.b32.xlu0 %v1053, 120
      %v2194 = vpop.permute.xlu0 %2193
      %2195 = vrot.lane.b32.xlu0 %v1054, 120
      %v2196 = vpop.permute.xlu0 %2195
      %2197 = vrot.lane.b32.xlu0 %v1055, 120
      %v2198 = vpop.permute.xlu0 %2197
      %2199 = vrot.lane.b32.xlu0 %v1056, 120
      %v2200 = vpop.permute.xlu0 %2199
      %2201 = vrot.lane.b32.xlu0 %v1057, 120
      %v2202 = vpop.permute.xlu0 %2201
      %2203 = vrot.lane.b32.xlu0 %v1058, 120
      %v2204 = vpop.permute.xlu0 %2203
      %2205 = vrot.lane.b32.xlu0 %v1059, 120
      %v2206 = vpop.permute.xlu0 %2205
      %2207 = vrot.lane.b32.xlu0 %v1060, 120
      %v2208 = vpop.permute.xlu0 %2207
      %2209 = vrot.lane.b32.xlu0 %v1061, 120
      %v2210 = vpop.permute.xlu0 %2209
      %2211 = vrot.lane.b32.xlu0 %v1062, 120
      %v2212 = vpop.permute.xlu0 %2211
      %2213 = vrot.lane.b32.xlu0 %v1063, 120
      %v2214 = vpop.permute.xlu0 %2213
      %2231 = vmatpush.bf16.msra.mxu0 %v2198
      %2232 = vmatpush.bf16.msra.mxu0 %v2196
      %2233 = vmatpush.bf16.msra.mxu0 %v2194
      %2234 = vmatpush.bf16.msra.mxu0 %v2192
      %2235 = vmatpush.bf16.msra.mxu0 %v2190
      %2236 = vmatpush.bf16.msra.mxu0 %v2188
      %2237 = vmatpush.bf16.msra.mxu0 %v2186
      %2238 = vmatpush.bf16.msra.mxu0 %v2184
      %2239 = vmatmul.bf16.gmra.mxu0 %v2151
      %v2240 = vpop.f32.mrf.mxu0
      %v2241 = vadd.f32 0.0, %v2240
      %v2242 = vpop.f32.mrf.mxu0
      %v2243 = vadd.f32 0.0, %v2242
      %2244 = vmatmul.bf16.gmra.mxu0 %v2153
      %v2245 = vpop.f32.mrf.mxu0
      %v2246 = vadd.f32 0.0, %v2245
      %v2247 = vpop.f32.mrf.mxu0
      %v2248 = vadd.f32 0.0, %v2247
      %2249 = vmatmul.bf16.gmra.mxu0 %v2155
      %v2250 = vpop.f32.mrf.mxu0
      %v2251 = vadd.f32 0.0, %v2250
      %v2252 = vpop.f32.mrf.mxu0
      %v2253 = vadd.f32 0.0, %v2252
      %2254 = vmatmul.bf16.gmra.mxu0 %v2157
      %v2255 = vpop.f32.mrf.mxu0
      %v2256 = vadd.f32 0.0, %v2255
      %v2257 = vpop.f32.mrf.mxu0
      %v2258 = vadd.f32 0.0, %v2257
      %2259 = vmatmul.bf16.gmra.mxu0 %v2159
      %v2260 = vpop.f32.mrf.mxu0
      %v2261 = vadd.f32 0.0, %v2260
      %v2262 = vpop.f32.mrf.mxu0
      %v2263 = vadd.f32 0.0, %v2262
      %2264 = vmatmul.bf16.gmra.mxu0 %v2161
      %v2265 = vpop.f32.mrf.mxu0
      %v2266 = vadd.f32 0.0, %v2265
      %v2267 = vpop.f32.mrf.mxu0
      %v2268 = vadd.f32 0.0, %v2267
      %2269 = vmatmul.bf16.gmra.mxu0 %v2163
      %v2270 = vpop.f32.mrf.mxu0
      %v2271 = vadd.f32 0.0, %v2270
      %v2272 = vpop.f32.mrf.mxu0
      %v2273 = vadd.f32 0.0, %v2272
      %2274 = vmatmul.bf16.gmra.mxu0 %v2165
      %v2275 = vpop.f32.mrf.mxu0
      %v2276 = vadd.f32 0.0, %v2275
      %v2277 = vpop.f32.mrf.mxu0
      %v2278 = vadd.f32 0.0, %v2277
      %2279 = vdwg.mxu0
      %2280 = vmatpush.bf16.msra.mxu0 %v2214
      %2281 = vmatpush.bf16.msra.mxu0 %v2212
      %2282 = vmatpush.bf16.msra.mxu0 %v2210
      %2283 = vmatpush.bf16.msra.mxu0 %v2208
      %2284 = vmatpush.bf16.msra.mxu0 %v2206
      %2285 = vmatpush.bf16.msra.mxu0 %v2204
      %2286 = vmatpush.bf16.msra.mxu0 %v2202
      %2287 = vmatpush.bf16.msra.mxu0 %v2200
      %2288 = vmatmul.bf16.gmra.mxu0 %v2152
      %v2289 = vpop.f32.mrf.mxu0
      %v2290 = vadd.f32 %v2241, %v2289
      %v2291 = vpop.f32.mrf.mxu0
      %v2292 = vadd.f32 %v2243, %v2291
      %2293 = vmatmul.bf16.gmra.mxu0 %v2154
      %v2294 = vpop.f32.mrf.mxu0
      %v2295 = vadd.f32 %v2246, %v2294
      %v2296 = vpop.f32.mrf.mxu0
      %v2297 = vadd.f32 %v2248, %v2296
      %2298 = vmatmul.bf16.gmra.mxu0 %v2156
      %v2299 = vpop.f32.mrf.mxu0
      %v2300 = vadd.f32 %v2251, %v2299
      %v2301 = vpop.f32.mrf.mxu0
      %v2302 = vadd.f32 %v2253, %v2301
      %2303 = vmatmul.bf16.gmra.mxu0 %v2158
      %v2304 = vpop.f32.mrf.mxu0
      %v2305 = vadd.f32 %v2256, %v2304
      %v2306 = vpop.f32.mrf.mxu0
      %v2307 = vadd.f32 %v2258, %v2306
      %2308 = vmatmul.bf16.gmra.mxu0 %v2160
      %v2309 = vpop.f32.mrf.mxu0
      %v2310 = vadd.f32 %v2261, %v2309
      %v2311 = vpop.f32.mrf.mxu0
      %v2312 = vadd.f32 %v2263, %v2311
      %2313 = vmatmul.bf16.gmra.mxu0 %v2162
      %v2314 = vpop.f32.mrf.mxu0
      %v2315 = vadd.f32 %v2266, %v2314
      %v2316 = vpop.f32.mrf.mxu0
      %v2317 = vadd.f32 %v2268, %v2316
      %2318 = vmatmul.bf16.gmra.mxu0 %v2164
      %v2319 = vpop.f32.mrf.mxu0
      %v2320 = vadd.f32 %v2271, %v2319
      %v2321 = vpop.f32.mrf.mxu0
      %v2322 = vadd.f32 %v2273, %v2321
      %2323 = vmatmul.bf16.gmra.mxu0 %v2166
      %v2324 = vpop.f32.mrf.mxu0
      %v2325 = vadd.f32 %v2276, %v2324
      %v2326 = vpop.f32.mrf.mxu0
      %v2327 = vadd.f32 %v2278, %v2326
      %2328 = vdwg.mxu0
      %2345 = vrot.lane.b32.xlu0 %v2290, 8
      %v2346 = vpop.permute.xlu0 %2345
      %2347 = vrot.lane.b32.xlu0 %v2292, 8
      %v2348 = vpop.permute.xlu0 %2347
      %2349 = vrot.lane.b32.xlu0 %v2295, 8
      %v2350 = vpop.permute.xlu0 %2349
      %2351 = vrot.lane.b32.xlu0 %v2297, 8
      %v2352 = vpop.permute.xlu0 %2351
      %2353 = vrot.lane.b32.xlu0 %v2300, 8
      %v2354 = vpop.permute.xlu0 %2353
      %2355 = vrot.lane.b32.xlu0 %v2302, 8
      %v2356 = vpop.permute.xlu0 %2355
      %2357 = vrot.lane.b32.xlu0 %v2305, 8
      %v2358 = vpop.permute.xlu0 %2357
      %2359 = vrot.lane.b32.xlu0 %v2307, 8
      %v2360 = vpop.permute.xlu0 %2359
      %2361 = vrot.lane.b32.xlu0 %v2310, 8
      %v2362 = vpop.permute.xlu0 %2361
      %2363 = vrot.lane.b32.xlu0 %v2312, 8
      %v2364 = vpop.permute.xlu0 %2363
      %2365 = vrot.lane.b32.xlu0 %v2315, 8
      %v2366 = vpop.permute.xlu0 %2365
      %2367 = vrot.lane.b32.xlu0 %v2317, 8
      %v2368 = vpop.permute.xlu0 %2367
      %2369 = vrot.lane.b32.xlu0 %v2320, 8
      %v2370 = vpop.permute.xlu0 %2369
      %2371 = vrot.lane.b32.xlu0 %v2322, 8
      %v2372 = vpop.permute.xlu0 %2371
      %2373 = vrot.lane.b32.xlu0 %v2325, 8
      %v2374 = vpop.permute.xlu0 %2373
      %2375 = vrot.lane.b32.xlu0 %v2327, 8
      %v2376 = vpop.permute.xlu0 %2375
      %vm2393 = vcmask 130112
      %2394 = vst.msk [vmem:[#allocation2] sm:$0xff] %vm2393, %v2346
      %2395 = vst.msk [vmem:[#allocation2 + $0x8] sm:$0xff] %vm2393, %v2348
      %2396 = vst.msk [vmem:[#allocation2 + $0x10] sm:$0xff] %vm2393, %v2350
      %2397 = vst.msk [vmem:[#allocation2 + $0x18] sm:$0xff] %vm2393, %v2352
      %2398 = vst.msk [vmem:[#allocation2 + $0x20] sm:$0xff] %vm2393, %v2354
      %2399 = vst.msk [vmem:[#allocation2 + $0x28] sm:$0xff] %vm2393, %v2356
      %2400 = vst.msk [vmem:[#allocation2 + $0x30] sm:$0xff] %vm2393, %v2358
      %2401 = vst.msk [vmem:[#allocation2 + $0x38] sm:$0xff] %vm2393, %v2360
      %2402 = vst.msk [vmem:[#allocation2 + $0x40] sm:$0xff] %vm2393, %v2362
      %2403 = vst.msk [vmem:[#allocation2 + $0x48] sm:$0xff] %vm2393, %v2364
      %2404 = vst.msk [vmem:[#allocation2 + $0x50] sm:$0xff] %vm2393, %v2366
      %2405 = vst.msk [vmem:[#allocation2 + $0x58] sm:$0xff] %vm2393, %v2368
      %2406 = vst.msk [vmem:[#allocation2 + $0x60] sm:$0xff] %vm2393, %v2370
      %2407 = vst.msk [vmem:[#allocation2 + $0x68] sm:$0xff] %vm2393, %v2372
      %2408 = vst.msk [vmem:[#allocation2 + $0x70] sm:$0xff] %vm2393, %v2374
      %2409 = vst.msk [vmem:[#allocation2 + $0x78] sm:$0xff] %vm2393, %v2376
      %2410 = vrot.lane.b32.xlu0 %v1024, 112
      %v2411 = vpop.permute.xlu0 %2410
      %2412 = vrot.lane.b32.xlu0 %v1025, 112
      %v2413 = vpop.permute.xlu0 %2412
      %2414 = vrot.lane.b32.xlu0 %v1026, 112
      %v2415 = vpop.permute.xlu0 %2414
      %2416 = vrot.lane.b32.xlu0 %v1027, 112
      %v2417 = vpop.permute.xlu0 %2416
      %2418 = vrot.lane.b32.xlu0 %v1028, 112
      %v2419 = vpop.permute.xlu0 %2418
      %2420 = vrot.lane.b32.xlu0 %v1029, 112
      %v2421 = vpop.permute.xlu0 %2420
      %2422 = vrot.lane.b32.xlu0 %v1030, 112
      %v2423 = vpop.permute.xlu0 %2422
      %2424 = vrot.lane.b32.xlu0 %v1031, 112
      %v2425 = vpop.permute.xlu0 %2424
      %2426 = vrot.lane.b32.xlu0 %v1032, 112
      %v2427 = vpop.permute.xlu0 %2426
      %2428 = vrot.lane.b32.xlu0 %v1033, 112
      %v2429 = vpop.permute.xlu0 %2428
      %2430 = vrot.lane.b32.xlu0 %v1034, 112
      %v2431 = vpop.permute.xlu0 %2430
      %2432 = vrot.lane.b32.xlu0 %v1035, 112
      %v2433 = vpop.permute.xlu0 %2432
      %2434 = vrot.lane.b32.xlu0 %v1036, 112
      %v2435 = vpop.permute.xlu0 %2434
      %2436 = vrot.lane.b32.xlu0 %v1037, 112
      %v2437 = vpop.permute.xlu0 %2436
      %2438 = vrot.lane.b32.xlu0 %v1038, 112
      %v2439 = vpop.permute.xlu0 %2438
      %2440 = vrot.lane.b32.xlu0 %v1039, 112
      %v2441 = vpop.permute.xlu0 %2440
      %2442 = vrot.lane.b32.xlu0 %v1040, 112
      %v2443 = vpop.permute.xlu0 %2442
      %2444 = vrot.lane.b32.xlu0 %v1041, 112
      %v2445 = vpop.permute.xlu0 %2444
      %2446 = vrot.lane.b32.xlu0 %v1042, 112
      %v2447 = vpop.permute.xlu0 %2446
      %2448 = vrot.lane.b32.xlu0 %v1043, 112
      %v2449 = vpop.permute.xlu0 %2448
      %2450 = vrot.lane.b32.xlu0 %v1044, 112
      %v2451 = vpop.permute.xlu0 %2450
      %2452 = vrot.lane.b32.xlu0 %v1045, 112
      %v2453 = vpop.permute.xlu0 %2452
      %2454 = vrot.lane.b32.xlu0 %v1046, 112
      %v2455 = vpop.permute.xlu0 %2454
      %2456 = vrot.lane.b32.xlu0 %v1047, 112
      %v2457 = vpop.permute.xlu0 %2456
      %v2459 = vsel %vm1064, %v2411, 0
      %v2462 = vsel %vm1064, %v2413, 0
      %v2465 = vsel %vm1064, %v2415, 0
      %v2468 = vsel %vm1064, %v2417, 0
      %v2471 = vsel %vm1064, %v2419, 0
      %v2474 = vsel %vm1064, %v2421, 0
      %v2477 = vsel %vm1064, %v2423, 0
      %v2480 = vsel %vm1064, %v2425, 0
      %v2483 = vsel %vm1064, %v2427, 0
      %v2486 = vsel %vm1064, %v2429, 0
      %v2489 = vsel %vm1064, %v2431, 0
      %v2492 = vsel %vm1064, %v2433, 0
      %v2495 = vsel %vm1064, %v2435, 0
      %v2498 = vsel %vm1064, %v2437, 0
      %v2501 = vsel %vm1064, %v2439, 0
      %v2504 = vsel %vm1064, %v2441, 0
      %v2507 = vsel %vm1064, %v2443, 0
      %v2510 = vsel %vm1064, %v2445, 0
      %v2513 = vsel %vm1064, %v2447, 0
      %v2516 = vsel %vm1064, %v2449, 0
      %v2519 = vsel %vm1064, %v2451, 0
      %v2522 = vsel %vm1064, %v2453, 0
      %v2525 = vsel %vm1064, %v2455, 0
      %v2528 = vsel %vm1064, %v2457, 0
      %2530 = vmatpush.bf16.xpose.msra.mxu0 %v2504
      %2531 = vmatpush.bf16.xpose.msra.mxu0 %v2501
      %2532 = vmatpush.bf16.xpose.msra.mxu0 %v2498
      %2533 = vmatpush.bf16.xpose.msra.mxu0 %v2495
      %2534 = vmatpush.bf16.xpose.msra.mxu0 %v2492
      %2535 = vmatpush.bf16.xpose.msra.mxu0 %v2489
      %2536 = vmatpush.bf16.xpose.msra.mxu0 %v2486
      %2537 = vmatpush.bf16.xpose.msra.mxu0 %v2483
      %2538 = vmatmul.bf16.gmra.mxu0 %v2459
      %v2539 = vpop.f32.mrf.mxu0
      %v2540 = vadd.f32 0.0, %v2539
      %v2541 = vpop.f32.mrf.mxu0
      %v2542 = vadd.f32 0.0, %v2541
      %2543 = vmatmul.bf16.gmra.mxu0 %v2462
      %v2544 = vpop.f32.mrf.mxu0
      %v2545 = vadd.f32 0.0, %v2544
      %v2546 = vpop.f32.mrf.mxu0
      %v2547 = vadd.f32 0.0, %v2546
      %2548 = vmatmul.bf16.gmra.mxu0 %v2465
      %v2549 = vpop.f32.mrf.mxu0
      %v2550 = vadd.f32 0.0, %v2549
      %v2551 = vpop.f32.mrf.mxu0
      %v2552 = vadd.f32 0.0, %v2551
      %2553 = vmatmul.bf16.gmra.mxu0 %v2468
      %v2554 = vpop.f32.mrf.mxu0
      %v2555 = vadd.f32 0.0, %v2554
      %v2556 = vpop.f32.mrf.mxu0
      %v2557 = vadd.f32 0.0, %v2556
      %2558 = vmatmul.bf16.gmra.mxu0 %v2471
      %v2559 = vpop.f32.mrf.mxu0
      %v2560 = vadd.f32 0.0, %v2559
      %v2561 = vpop.f32.mrf.mxu0
      %v2562 = vadd.f32 0.0, %v2561
      %2563 = vmatmul.bf16.gmra.mxu0 %v2474
      %v2564 = vpop.f32.mrf.mxu0
      %v2565 = vadd.f32 0.0, %v2564
      %v2566 = vpop.f32.mrf.mxu0
      %v2567 = vadd.f32 0.0, %v2566
      %2568 = vmatmul.bf16.gmra.mxu0 %v2477
      %v2569 = vpop.f32.mrf.mxu0
      %v2570 = vadd.f32 0.0, %v2569
      %v2571 = vpop.f32.mrf.mxu0
      %v2572 = vadd.f32 0.0, %v2571
      %2573 = vmatmul.bf16.gmra.mxu0 %v2480
      %v2574 = vpop.f32.mrf.mxu0
      %v2575 = vadd.f32 0.0, %v2574
      %v2576 = vpop.f32.mrf.mxu0
      %v2577 = vadd.f32 0.0, %v2576
      %2578 = vdwg.mxu0
      %2579 = vmatpush.bf16.xpose.msra.mxu0 %v2528
      %2580 = vmatpush.bf16.xpose.msra.mxu0 %v2525
      %2581 = vmatpush.bf16.xpose.msra.mxu0 %v2522
      %2582 = vmatpush.bf16.xpose.msra.mxu0 %v2519
      %2583 = vmatpush.bf16.xpose.msra.mxu0 %v2516
      %2584 = vmatpush.bf16.xpose.msra.mxu0 %v2513
      %2585 = vmatpush.bf16.xpose.msra.mxu0 %v2510
      %2586 = vmatpush.bf16.xpose.msra.mxu0 %v2507
      %2587 = vmatmul.bf16.gmra.mxu0 %v2459
      %v2588 = vpop.f32.mrf.mxu0
      %v2589 = vadd.f32 0.0, %v2588
      %v2590 = vpop.f32.mrf.mxu0
      %v2591 = vadd.f32 0.0, %v2590
      %2592 = vmatmul.bf16.gmra.mxu0 %v2462
      %v2593 = vpop.f32.mrf.mxu0
      %v2594 = vadd.f32 0.0, %v2593
      %v2595 = vpop.f32.mrf.mxu0
      %v2596 = vadd.f32 0.0, %v2595
      %2597 = vmatmul.bf16.gmra.mxu0 %v2465
      %v2598 = vpop.f32.mrf.mxu0
      %v2599 = vadd.f32 0.0, %v2598
      %v2600 = vpop.f32.mrf.mxu0
      %v2601 = vadd.f32 0.0, %v2600
      %2602 = vmatmul.bf16.gmra.mxu0 %v2468
      %v2603 = vpop.f32.mrf.mxu0
      %v2604 = vadd.f32 0.0, %v2603
      %v2605 = vpop.f32.mrf.mxu0
      %v2606 = vadd.f32 0.0, %v2605
      %2607 = vmatmul.bf16.gmra.mxu0 %v2471
      %v2608 = vpop.f32.mrf.mxu0
      %v2609 = vadd.f32 0.0, %v2608
      %v2610 = vpop.f32.mrf.mxu0
      %v2611 = vadd.f32 0.0, %v2610
      %2612 = vmatmul.bf16.gmra.mxu0 %v2474
      %v2613 = vpop.f32.mrf.mxu0
      %v2614 = vadd.f32 0.0, %v2613
      %v2615 = vpop.f32.mrf.mxu0
      %v2616 = vadd.f32 0.0, %v2615
      %2617 = vmatmul.bf16.gmra.mxu0 %v2477
      %v2618 = vpop.f32.mrf.mxu0
      %v2619 = vadd.f32 0.0, %v2618
      %v2620 = vpop.f32.mrf.mxu0
      %v2621 = vadd.f32 0.0, %v2620
      %2622 = vmatmul.bf16.gmra.mxu0 %v2480
      %v2623 = vpop.f32.mrf.mxu0
      %v2624 = vadd.f32 0.0, %v2623
      %v2625 = vpop.f32.mrf.mxu0
      %v2626 = vadd.f32 0.0, %v2625
      %2627 = vdwg.mxu0
      %v2628 = vmul.f32 %v2540, 0.35355338
      %v2629 = vmul.f32 %v2589, 0.35355338
      %v2630 = vmul.f32 %v2542, 0.35355338
      %v2631 = vmul.f32 %v2591, 0.35355338
      %v2632 = vmul.f32 %v2545, 0.35355338
      %v2633 = vmul.f32 %v2594, 0.35355338
      %v2634 = vmul.f32 %v2547, 0.35355338
      %v2635 = vmul.f32 %v2596, 0.35355338
      %v2636 = vmul.f32 %v2550, 0.35355338
      %v2637 = vmul.f32 %v2599, 0.35355338
      %v2638 = vmul.f32 %v2552, 0.35355338
      %v2639 = vmul.f32 %v2601, 0.35355338
      %v2640 = vmul.f32 %v2555, 0.35355338
      %v2641 = vmul.f32 %v2604, 0.35355338
      %v2642 = vmul.f32 %v2557, 0.35355338
      %v2643 = vmul.f32 %v2606, 0.35355338
      %v2644 = vmul.f32 %v2560, 0.35355338
      %v2645 = vmul.f32 %v2609, 0.35355338
      %v2646 = vmul.f32 %v2562, 0.35355338
      %v2647 = vmul.f32 %v2611, 0.35355338
      %v2648 = vmul.f32 %v2565, 0.35355338
      %v2649 = vmul.f32 %v2614, 0.35355338
      %v2650 = vmul.f32 %v2567, 0.35355338
      %v2651 = vmul.f32 %v2616, 0.35355338
      %v2652 = vmul.f32 %v2570, 0.35355338
      %v2653 = vmul.f32 %v2619, 0.35355338
      %v2654 = vmul.f32 %v2572, 0.35355338
      %v2655 = vmul.f32 %v2621, 0.35355338
      %v2656 = vmul.f32 %v2575, 0.35355338
      %v2657 = vmul.f32 %v2624, 0.35355338
      %v2658 = vmul.f32 %v2577, 0.35355338
      %v2659 = vmul.f32 %v2626, 0.35355338
      %v2660 = vmax.f32 %v2628, %v2629
      %2661 = vmax.xlane.f32.xlu0 %v2660
      %v2662 = vpop.xlane.xlu0 %2661
      %v2663 = vmax.f32 %v2630, %v2631
      %2664 = vmax.xlane.f32.xlu0 %v2663
      %v2665 = vpop.xlane.xlu0 %2664
      %v2666 = vmax.f32 %v2632, %v2633
      %2667 = vmax.xlane.f32.xlu0 %v2666
      %v2668 = vpop.xlane.xlu0 %2667
      %v2669 = vmax.f32 %v2634, %v2635
      %2670 = vmax.xlane.f32.xlu0 %v2669
      %v2671 = vpop.xlane.xlu0 %2670
      %v2672 = vmax.f32 %v2636, %v2637
      %2673 = vmax.xlane.f32.xlu0 %v2672
      %v2674 = vpop.xlane.xlu0 %2673
      %v2675 = vmax.f32 %v2638, %v2639
      %2676 = vmax.xlane.f32.xlu0 %v2675
      %v2677 = vpop.xlane.xlu0 %2676
      %v2678 = vmax.f32 %v2640, %v2641
      %2679 = vmax.xlane.f32.xlu0 %v2678
      %v2680 = vpop.xlane.xlu0 %2679
      %v2681 = vmax.f32 %v2642, %v2643
      %2682 = vmax.xlane.f32.xlu0 %v2681
      %v2683 = vpop.xlane.xlu0 %2682
      %v2684 = vmax.f32 %v2644, %v2645
      %2685 = vmax.xlane.f32.xlu0 %v2684
      %v2686 = vpop.xlane.xlu0 %2685
      %v2687 = vmax.f32 %v2646, %v2647
      %2688 = vmax.xlane.f32.xlu0 %v2687
      %v2689 = vpop.xlane.xlu0 %2688
      %v2690 = vmax.f32 %v2648, %v2649
      %2691 = vmax.xlane.f32.xlu0 %v2690
      %v2692 = vpop.xlane.xlu0 %2691
      %v2693 = vmax.f32 %v2650, %v2651
      %2694 = vmax.xlane.f32.xlu0 %v2693
      %v2695 = vpop.xlane.xlu0 %2694
      %v2696 = vmax.f32 %v2652, %v2653
      %2697 = vmax.xlane.f32.xlu0 %v2696
      %v2698 = vpop.xlane.xlu0 %2697
      %v2699 = vmax.f32 %v2654, %v2655
      %2700 = vmax.xlane.f32.xlu0 %v2699
      %v2701 = vpop.xlane.xlu0 %2700
      %v2702 = vmax.f32 %v2656, %v2657
      %2703 = vmax.xlane.f32.xlu0 %v2702
      %v2704 = vpop.xlane.xlu0 %2703
      %v2705 = vmax.f32 %v2658, %v2659
      %2706 = vmax.xlane.f32.xlu0 %v2705
      %v2707 = vpop.xlane.xlu0 %2706
      %v2708 = vsub.f32 %v2628, %v2662
      %v2709 = vsub.f32 %v2629, %v2662
      %v2710 = vsub.f32 %v2630, %v2665
      %v2711 = vsub.f32 %v2631, %v2665
      %v2712 = vsub.f32 %v2632, %v2668
      %v2713 = vsub.f32 %v2633, %v2668
      %v2714 = vsub.f32 %v2634, %v2671
      %v2715 = vsub.f32 %v2635, %v2671
      %v2716 = vsub.f32 %v2636, %v2674
      %v2717 = vsub.f32 %v2637, %v2674
      %v2718 = vsub.f32 %v2638, %v2677
      %v2719 = vsub.f32 %v2639, %v2677
      %v2720 = vsub.f32 %v2640, %v2680
      %v2721 = vsub.f32 %v2641, %v2680
      %v2722 = vsub.f32 %v2642, %v2683
      %v2723 = vsub.f32 %v2643, %v2683
      %v2724 = vsub.f32 %v2644, %v2686
      %v2725 = vsub.f32 %v2645, %v2686
      %v2726 = vsub.f32 %v2646, %v2689
      %v2727 = vsub.f32 %v2647, %v2689
      %v2728 = vsub.f32 %v2648, %v2692
      %v2729 = vsub.f32 %v2649, %v2692
      %v2730 = vsub.f32 %v2650, %v2695
      %v2731 = vsub.f32 %v2651, %v2695
      %v2732 = vsub.f32 %v2652, %v2698
      %v2733 = vsub.f32 %v2653, %v2698
      %v2734 = vsub.f32 %v2654, %v2701
      %v2735 = vsub.f32 %v2655, %v2701
      %v2736 = vsub.f32 %v2656, %v2704
      %v2737 = vsub.f32 %v2657, %v2704
      %v2738 = vsub.f32 %v2658, %v2707
      %v2739 = vsub.f32 %v2659, %v2707
      %v2740 = vmul.f32 %v2708, 1.442695
      %v2741 = vpow.pop %v2740
      %v2742 = vmul.f32 %v2709, 1.442695
      %v2743 = vpow.pop %v2742
      %v2744 = vmul.f32 %v2710, 1.442695
      %v2745 = vpow.pop %v2744
      %v2746 = vmul.f32 %v2711, 1.442695
      %v2747 = vpow.pop %v2746
      %v2748 = vmul.f32 %v2712, 1.442695
      %v2749 = vpow.pop %v2748
      %v2750 = vmul.f32 %v2713, 1.442695
      %v2751 = vpow.pop %v2750
      %v2752 = vmul.f32 %v2714, 1.442695
      %v2753 = vpow.pop %v2752
      %v2754 = vmul.f32 %v2715, 1.442695
      %v2755 = vpow.pop %v2754
      %v2756 = vmul.f32 %v2716, 1.442695
      %v2757 = vpow.pop %v2756
      %v2758 = vmul.f32 %v2717, 1.442695
      %v2759 = vpow.pop %v2758
      %v2760 = vmul.f32 %v2718, 1.442695
      %v2761 = vpow.pop %v2760
      %v2762 = vmul.f32 %v2719, 1.442695
      %v2763 = vpow.pop %v2762
      %v2764 = vmul.f32 %v2720, 1.442695
      %v2765 = vpow.pop %v2764
      %v2766 = vmul.f32 %v2721, 1.442695
      %v2767 = vpow.pop %v2766
      %v2768 = vmul.f32 %v2722, 1.442695
      %v2769 = vpow.pop %v2768
      %v2770 = vmul.f32 %v2723, 1.442695
      %v2771 = vpow.pop %v2770
      %v2772 = vmul.f32 %v2724, 1.442695
      %v2773 = vpow.pop %v2772
      %v2774 = vmul.f32 %v2725, 1.442695
      %v2775 = vpow.pop %v2774
      %v2776 = vmul.f32 %v2726, 1.442695
      %v2777 = vpow.pop %v2776
      %v2778 = vmul.f32 %v2727, 1.442695
      %v2779 = vpow.pop %v2778
      %v2780 = vmul.f32 %v2728, 1.442695
      %v2781 = vpow.pop %v2780
      %v2782 = vmul.f32 %v2729, 1.442695
      %v2783 = vpow.pop %v2782
      %v2784 = vmul.f32 %v2730, 1.442695
      %v2785 = vpow.pop %v2784
      %v2786 = vmul.f32 %v2731, 1.442695
      %v2787 = vpow.pop %v2786
      %v2788 = vmul.f32 %v2732, 1.442695
      %v2789 = vpow.pop %v2788
      %v2790 = vmul.f32 %v2733, 1.442695
      %v2791 = vpow.pop %v2790
      %v2792 = vmul.f32 %v2734, 1.442695
      %v2793 = vpow.pop %v2792
      %v2794 = vmul.f32 %v2735, 1.442695
      %v2795 = vpow.pop %v2794
      %v2796 = vmul.f32 %v2736, 1.442695
      %v2797 = vpow.pop %v2796
      %v2798 = vmul.f32 %v2737, 1.442695
      %v2799 = vpow.pop %v2798
      %v2800 = vmul.f32 %v2738, 1.442695
      %v2801 = vpow.pop %v2800
      %v2802 = vmul.f32 %v2739, 1.442695
      %v2803 = vpow.pop %v2802
      %v2804 = vadd.f32 %v2741, %v2743
      %2805 = vadd.xlane.f32.xlu0 %v2804
      %v2806 = vpop.xlane.xlu0 %2805
      %v2807 = vadd.f32 %v2745, %v2747
      %2808 = vadd.xlane.f32.xlu0 %v2807
      %v2809 = vpop.xlane.xlu0 %2808
      %v2810 = vadd.f32 %v2749, %v2751
      %2811 = vadd.xlane.f32.xlu0 %v2810
      %v2812 = vpop.xlane.xlu0 %2811
      %v2813 = vadd.f32 %v2753, %v2755
      %2814 = vadd.xlane.f32.xlu0 %v2813
      %v2815 = vpop.xlane.xlu0 %2814
      %v2816 = vadd.f32 %v2757, %v2759
      %2817 = vadd.xlane.f32.xlu0 %v2816
      %v2818 = vpop.xlane.xlu0 %2817
      %v2819 = vadd.f32 %v2761, %v2763
      %2820 = vadd.xlane.f32.xlu0 %v2819
      %v2821 = vpop.xlane.xlu0 %2820
      %v2822 = vadd.f32 %v2765, %v2767
      %2823 = vadd.xlane.f32.xlu0 %v2822
      %v2824 = vpop.xlane.xlu0 %2823
      %v2825 = vadd.f32 %v2769, %v2771
      %2826 = vadd.xlane.f32.xlu0 %v2825
      %v2827 = vpop.xlane.xlu0 %2826
      %v2828 = vadd.f32 %v2773, %v2775
      %2829 = vadd.xlane.f32.xlu0 %v2828
      %v2830 = vpop.xlane.xlu0 %2829
      %v2831 = vadd.f32 %v2777, %v2779
      %2832 = vadd.xlane.f32.xlu0 %v2831
      %v2833 = vpop.xlane.xlu0 %2832
      %v2834 = vadd.f32 %v2781, %v2783
      %2835 = vadd.xlane.f32.xlu0 %v2834
      %v2836 = vpop.xlane.xlu0 %2835
      %v2837 = vadd.f32 %v2785, %v2787
      %2838 = vadd.xlane.f32.xlu0 %v2837
      %v2839 = vpop.xlane.xlu0 %2838
      %v2840 = vadd.f32 %v2789, %v2791
      %2841 = vadd.xlane.f32.xlu0 %v2840
      %v2842 = vpop.xlane.xlu0 %2841
      %v2843 = vadd.f32 %v2793, %v2795
      %2844 = vadd.xlane.f32.xlu0 %v2843
      %v2845 = vpop.xlane.xlu0 %2844
      %v2846 = vadd.f32 %v2797, %v2799
      %2847 = vadd.xlane.f32.xlu0 %v2846
      %v2848 = vpop.xlane.xlu0 %2847
      %v2849 = vadd.f32 %v2801, %v2803
      %2850 = vadd.xlane.f32.xlu0 %v2849
      %v2851 = vpop.xlane.xlu0 %2850
      %v2852 = vrcp.pop %v2806
      %v2853 = vrcp.pop %v2809
      %v2854 = vrcp.pop %v2812
      %v2855 = vrcp.pop %v2815
      %v2856 = vrcp.pop %v2818
      %v2857 = vrcp.pop %v2821
      %v2858 = vrcp.pop %v2824
      %v2859 = vrcp.pop %v2827
      %v2860 = vrcp.pop %v2830
      %v2861 = vrcp.pop %v2833
      %v2862 = vrcp.pop %v2836
      %v2863 = vrcp.pop %v2839
      %v2864 = vrcp.pop %v2842
      %v2865 = vrcp.pop %v2845
      %v2866 = vrcp.pop %v2848
      %v2867 = vrcp.pop %v2851
      %v2868 = vmul.f32 %v2741, %v2852
      %v2869 = vmul.f32 %v2743, %v2852
      %v2870 = vmul.f32 %v2745, %v2853
      %v2871 = vmul.f32 %v2747, %v2853
      %v2872 = vmul.f32 %v2749, %v2854
      %v2873 = vmul.f32 %v2751, %v2854
      %v2874 = vmul.f32 %v2753, %v2855
      %v2875 = vmul.f32 %v2755, %v2855
      %v2876 = vmul.f32 %v2757, %v2856
      %v2877 = vmul.f32 %v2759, %v2856
      %v2878 = vmul.f32 %v2761, %v2857
      %v2879 = vmul.f32 %v2763, %v2857
      %v2880 = vmul.f32 %v2765, %v2858
      %v2881 = vmul.f32 %v2767, %v2858
      %v2882 = vmul.f32 %v2769, %v2859
      %v2883 = vmul.f32 %v2771, %v2859
      %v2884 = vmul.f32 %v2773, %v2860
      %v2885 = vmul.f32 %v2775, %v2860
      %v2886 = vmul.f32 %v2777, %v2861
      %v2887 = vmul.f32 %v2779, %v2861
      %v2888 = vmul.f32 %v2781, %v2862
      %v2889 = vmul.f32 %v2783, %v2862
      %v2890 = vmul.f32 %v2785, %v2863
      %v2891 = vmul.f32 %v2787, %v2863
      %v2892 = vmul.f32 %v2789, %v2864
      %v2893 = vmul.f32 %v2791, %v2864
      %v2894 = vmul.f32 %v2793, %v2865
      %v2895 = vmul.f32 %v2795, %v2865
      %v2896 = vmul.f32 %v2797, %v2866
      %v2897 = vmul.f32 %v2799, %v2866
      %v2898 = vmul.f32 %v2801, %v2867
      %v2899 = vmul.f32 %v2803, %v2867
      %v2900 = vpack.c.bf16 %v2870, %v2868
      %v2901 = vpack.c.bf16 %v2871, %v2869
      %v2902 = vpack.c.bf16 %v2874, %v2872
      %v2903 = vpack.c.bf16 %v2875, %v2873
      %v2904 = vpack.c.bf16 %v2878, %v2876
      %v2905 = vpack.c.bf16 %v2879, %v2877
      %v2906 = vpack.c.bf16 %v2882, %v2880
      %v2907 = vpack.c.bf16 %v2883, %v2881
      %v2908 = vpack.c.bf16 %v2886, %v2884
      %v2909 = vpack.c.bf16 %v2887, %v2885
      %v2910 = vpack.c.bf16 %v2890, %v2888
      %v2911 = vpack.c.bf16 %v2891, %v2889
      %v2912 = vpack.c.bf16 %v2894, %v2892
      %v2913 = vpack.c.bf16 %v2895, %v2893
      %v2914 = vpack.c.bf16 %v2898, %v2896
      %v2915 = vpack.c.bf16 %v2899, %v2897
      %2916 = vrot.lane.b32.xlu0 %v1048, 112
      %v2917 = vpop.permute.xlu0 %2916
      %2918 = vrot.lane.b32.xlu0 %v1049, 112
      %v2919 = vpop.permute.xlu0 %2918
      %2920 = vrot.lane.b32.xlu0 %v1050, 112
      %v2921 = vpop.permute.xlu0 %2920
      %2922 = vrot.lane.b32.xlu0 %v1051, 112
      %v2923 = vpop.permute.xlu0 %2922
      %2924 = vrot.lane.b32.xlu0 %v1052, 112
      %v2925 = vpop.permute.xlu0 %2924
      %2926 = vrot.lane.b32.xlu0 %v1053, 112
      %v2927 = vpop.permute.xlu0 %2926
      %2928 = vrot.lane.b32.xlu0 %v1054, 112
      %v2929 = vpop.permute.xlu0 %2928
      %2930 = vrot.lane.b32.xlu0 %v1055, 112
      %v2931 = vpop.permute.xlu0 %2930
      %2932 = vrot.lane.b32.xlu0 %v1056, 112
      %v2933 = vpop.permute.xlu0 %2932
      %2934 = vrot.lane.b32.xlu0 %v1057, 112
      %v2935 = vpop.permute.xlu0 %2934
      %2936 = vrot.lane.b32.xlu0 %v1058, 112
      %v2937 = vpop.permute.xlu0 %2936
      %2938 = vrot.lane.b32.xlu0 %v1059, 112
      %v2939 = vpop.permute.xlu0 %2938
      %2940 = vrot.lane.b32.xlu0 %v1060, 112
      %v2941 = vpop.permute.xlu0 %2940
      %2942 = vrot.lane.b32.xlu0 %v1061, 112
      %v2943 = vpop.permute.xlu0 %2942
      %2944 = vrot.lane.b32.xlu0 %v1062, 112
      %v2945 = vpop.permute.xlu0 %2944
      %2946 = vrot.lane.b32.xlu0 %v1063, 112
      %v2947 = vpop.permute.xlu0 %2946
      %2964 = vmatpush.bf16.msra.mxu0 %v2931
      %2965 = vmatpush.bf16.msra.mxu0 %v2929
      %2966 = vmatpush.bf16.msra.mxu0 %v2927
      %2967 = vmatpush.bf16.msra.mxu0 %v2925
      %2968 = vmatpush.bf16.msra.mxu0 %v2923
      %2969 = vmatpush.bf16.msra.mxu0 %v2921
      %2970 = vmatpush.bf16.msra.mxu0 %v2919
      %2971 = vmatpush.bf16.msra.mxu0 %v2917
      %2972 = vmatmul.bf16.gmra.mxu0 %v2900
      %v2973 = vpop.f32.mrf.mxu0
      %v2974 = vadd.f32 0.0, %v2973
      %v2975 = vpop.f32.mrf.mxu0
      %v2976 = vadd.f32 0.0, %v2975
      %2977 = vmatmul.bf16.gmra.mxu0 %v2902
      %v2978 = vpop.f32.mrf.mxu0
      %v2979 = vadd.f32 0.0, %v2978
      %v2980 = vpop.f32.mrf.mxu0
      %v2981 = vadd.f32 0.0, %v2980
      %2982 = vmatmul.bf16.gmra.mxu0 %v2904
      %v2983 = vpop.f32.mrf.mxu0
      %v2984 = vadd.f32 0.0, %v2983
      %v2985 = vpop.f32.mrf.mxu0
      %v2986 = vadd.f32 0.0, %v2985
      %2987 = vmatmul.bf16.gmra.mxu0 %v2906
      %v2988 = vpop.f32.mrf.mxu0
      %v2989 = vadd.f32 0.0, %v2988
      %v2990 = vpop.f32.mrf.mxu0
      %v2991 = vadd.f32 0.0, %v2990
      %2992 = vmatmul.bf16.gmra.mxu0 %v2908
      %v2993 = vpop.f32.mrf.mxu0
      %v2994 = vadd.f32 0.0, %v2993
      %v2995 = vpop.f32.mrf.mxu0
      %v2996 = vadd.f32 0.0, %v2995
      %2997 = vmatmul.bf16.gmra.mxu0 %v2910
      %v2998 = vpop.f32.mrf.mxu0
      %v2999 = vadd.f32 0.0, %v2998
      %v3000 = vpop.f32.mrf.mxu0
      %v3001 = vadd.f32 0.0, %v3000
      %3002 = vmatmul.bf16.gmra.mxu0 %v2912
      %v3003 = vpop.f32.mrf.mxu0
      %v3004 = vadd.f32 0.0, %v3003
      %v3005 = vpop.f32.mrf.mxu0
      %v3006 = vadd.f32 0.0, %v3005
      %3007 = vmatmul.bf16.gmra.mxu0 %v2914
      %v3008 = vpop.f32.mrf.mxu0
      %v3009 = vadd.f32 0.0, %v3008
      %v3010 = vpop.f32.mrf.mxu0
      %v3011 = vadd.f32 0.0, %v3010
      %3012 = vdwg.mxu0
      %3013 = vmatpush.bf16.msra.mxu0 %v2947
      %3014 = vmatpush.bf16.msra.mxu0 %v2945
      %3015 = vmatpush.bf16.msra.mxu0 %v2943
      %3016 = vmatpush.bf16.msra.mxu0 %v2941
      %3017 = vmatpush.bf16.msra.mxu0 %v2939
      %3018 = vmatpush.bf16.msra.mxu0 %v2937
      %3019 = vmatpush.bf16.msra.mxu0 %v2935
      %3020 = vmatpush.bf16.msra.mxu0 %v2933
      %3021 = vmatmul.bf16.gmra.mxu0 %v2901
      %v3022 = vpop.f32.mrf.mxu0
      %v3023 = vadd.f32 %v2974, %v3022
      %v3024 = vpop.f32.mrf.mxu0
      %v3025 = vadd.f32 %v2976, %v3024
      %3026 = vmatmul.bf16.gmra.mxu0 %v2903
      %v3027 = vpop.f32.mrf.mxu0
      %v3028 = vadd.f32 %v2979, %v3027
      %v3029 = vpop.f32.mrf.mxu0
      %v3030 = vadd.f32 %v2981, %v3029
      %3031 = vmatmul.bf16.gmra.mxu0 %v2905
      %v3032 = vpop.f32.mrf.mxu0
      %v3033 = vadd.f32 %v2984, %v3032
      %v3034 = vpop.f32.mrf.mxu0
      %v3035 = vadd.f32 %v2986, %v3034
      %3036 = vmatmul.bf16.gmra.mxu0 %v2907
      %v3037 = vpop.f32.mrf.mxu0
      %v3038 = vadd.f32 %v2989, %v3037
      %v3039 = vpop.f32.mrf.mxu0
      %v3040 = vadd.f32 %v2991, %v3039
      %3041 = vmatmul.bf16.gmra.mxu0 %v2909
      %v3042 = vpop.f32.mrf.mxu0
      %v3043 = vadd.f32 %v2994, %v3042
      %v3044 = vpop.f32.mrf.mxu0
      %v3045 = vadd.f32 %v2996, %v3044
      %3046 = vmatmul.bf16.gmra.mxu0 %v2911
      %v3047 = vpop.f32.mrf.mxu0
      %v3048 = vadd.f32 %v2999, %v3047
      %v3049 = vpop.f32.mrf.mxu0
      %v3050 = vadd.f32 %v3001, %v3049
      %3051 = vmatmul.bf16.gmra.mxu0 %v2913
      %v3052 = vpop.f32.mrf.mxu0
      %v3053 = vadd.f32 %v3004, %v3052
      %v3054 = vpop.f32.mrf.mxu0
      %v3055 = vadd.f32 %v3006, %v3054
      %3056 = vmatmul.bf16.gmra.mxu0 %v2915
      %v3057 = vpop.f32.mrf.mxu0
      %v3058 = vadd.f32 %v3009, %v3057
      %v3059 = vpop.f32.mrf.mxu0
      %v3060 = vadd.f32 %v3011, %v3059
      %3061 = vdwg.mxu0
      %3078 = vrot.lane.b32.xlu0 %v3023, 16
      %v3079 = vpop.permute.xlu0 %3078
      %3080 = vrot.lane.b32.xlu0 %v3025, 16
      %v3081 = vpop.permute.xlu0 %3080
      %3082 = vrot.lane.b32.xlu0 %v3028, 16
      %v3083 = vpop.permute.xlu0 %3082
      %3084 = vrot.lane.b32.xlu0 %v3030, 16
      %v3085 = vpop.permute.xlu0 %3084
      %3086 = vrot.lane.b32.xlu0 %v3033, 16
      %v3087 = vpop.permute.xlu0 %3086
      %3088 = vrot.lane.b32.xlu0 %v3035, 16
      %v3089 = vpop.permute.xlu0 %3088
      %3090 = vrot.lane.b32.xlu0 %v3038, 16
      %v3091 = vpop.permute.xlu0 %3090
      %3092 = vrot.lane.b32.xlu0 %v3040, 16
      %v3093 = vpop.permute.xlu0 %3092
      %3094 = vrot.lane.b32.xlu0 %v3043, 16
      %v3095 = vpop.permute.xlu0 %3094
      %3096 = vrot.lane.b32.xlu0 %v3045, 16
      %v3097 = vpop.permute.xlu0 %3096
      %3098 = vrot.lane.b32.xlu0 %v3048, 16
      %v3099 = vpop.permute.xlu0 %3098
      %3100 = vrot.lane.b32.xlu0 %v3050, 16
      %v3101 = vpop.permute.xlu0 %3100
      %3102 = vrot.lane.b32.xlu0 %v3053, 16
      %v3103 = vpop.permute.xlu0 %3102
      %3104 = vrot.lane.b32.xlu0 %v3055, 16
      %v3105 = vpop.permute.xlu0 %3104
      %3106 = vrot.lane.b32.xlu0 %v3058, 16
      %v3107 = vpop.permute.xlu0 %3106
      %3108 = vrot.lane.b32.xlu0 %v3060, 16
      %v3109 = vpop.permute.xlu0 %3108
      %vm3126 = vcmask 195712
      %3127 = vst.msk [vmem:[#allocation2] sm:$0xff] %vm3126, %v3079
      %3128 = vst.msk [vmem:[#allocation2 + $0x8] sm:$0xff] %vm3126, %v3081
      %3129 = vst.msk [vmem:[#allocation2 + $0x10] sm:$0xff] %vm3126, %v3083
      %3130 = vst.msk [vmem:[#allocation2 + $0x18] sm:$0xff] %vm3126, %v3085
      %3131 = vst.msk [vmem:[#allocation2 + $0x20] sm:$0xff] %vm3126, %v3087
      %3132 = vst.msk [vmem:[#allocation2 + $0x28] sm:$0xff] %vm3126, %v3089
      %3133 = vst.msk [vmem:[#allocation2 + $0x30] sm:$0xff] %vm3126, %v3091
      %3134 = vst.msk [vmem:[#allocation2 + $0x38] sm:$0xff] %vm3126, %v3093
      %3135 = vst.msk [vmem:[#allocation2 + $0x40] sm:$0xff] %vm3126, %v3095
      %3136 = vst.msk [vmem:[#allocation2 + $0x48] sm:$0xff] %vm3126, %v3097
      %3137 = vst.msk [vmem:[#allocation2 + $0x50] sm:$0xff] %vm3126, %v3099
      %3138 = vst.msk [vmem:[#allocation2 + $0x58] sm:$0xff] %vm3126, %v3101
      %3139 = vst.msk [vmem:[#allocation2 + $0x60] sm:$0xff] %vm3126, %v3103
      %3140 = vst.msk [vmem:[#allocation2 + $0x68] sm:$0xff] %vm3126, %v3105
      %3141 = vst.msk [vmem:[#allocation2 + $0x70] sm:$0xff] %vm3126, %v3107
      %3142 = vst.msk [vmem:[#allocation2 + $0x78] sm:$0xff] %vm3126, %v3109
      %3143 = vrot.lane.b32.xlu0 %v1024, 104
      %v3144 = vpop.permute.xlu0 %3143
      %3145 = vrot.lane.b32.xlu0 %v1025, 104
      %v3146 = vpop.permute.xlu0 %3145
      %3147 = vrot.lane.b32.xlu0 %v1026, 104
      %v3148 = vpop.permute.xlu0 %3147
      %3149 = vrot.lane.b32.xlu0 %v1027, 104
      %v3150 = vpop.permute.xlu0 %3149
      %3151 = vrot.lane.b32.xlu0 %v1028, 104
      %v3152 = vpop.permute.xlu0 %3151
      %3153 = vrot.lane.b32.xlu0 %v1029, 104
      %v3154 = vpop.permute.xlu0 %3153
      %3155 = vrot.lane.b32.xlu0 %v1030, 104
      %v3156 = vpop.permute.xlu0 %3155
      %3157 = vrot.lane.b32.xlu0 %v1031, 104
      %v3158 = vpop.permute.xlu0 %3157
      %3159 = vrot.lane.b32.xlu0 %v1032, 104
      %v3160 = vpop.permute.xlu0 %3159
      %3161 = vrot.lane.b32.xlu0 %v1033, 104
      %v3162 = vpop.permute.xlu0 %3161
      %3163 = vrot.lane.b32.xlu0 %v1034, 104
      %v3164 = vpop.permute.xlu0 %3163
      %3165 = vrot.lane.b32.xlu0 %v1035, 104
      %v3166 = vpop.permute.xlu0 %3165
      %3167 = vrot.lane.b32.xlu0 %v1036, 104
      %v3168 = vpop.permute.xlu0 %3167
      %3169 = vrot.lane.b32.xlu0 %v1037, 104
      %v3170 = vpop.permute.xlu0 %3169
      %3171 = vrot.lane.b32.xlu0 %v1038, 104
      %v3172 = vpop.permute.xlu0 %3171
      %3173 = vrot.lane.b32.xlu0 %v1039, 104
      %v3174 = vpop.permute.xlu0 %3173
      %3175 = vrot.lane.b32.xlu0 %v1040, 104
      %v3176 = vpop.permute.xlu0 %3175
      %3177 = vrot.lane.b32.xlu0 %v1041, 104
      %v3178 = vpop.permute.xlu0 %3177
      %3179 = vrot.lane.b32.xlu0 %v1042, 104
      %v3180 = vpop.permute.xlu0 %3179
      %3181 = vrot.lane.b32.xlu0 %v1043, 104
      %v3182 = vpop.permute.xlu0 %3181
      %3183 = vrot.lane.b32.xlu0 %v1044, 104
      %v3184 = vpop.permute.xlu0 %3183
      %3185 = vrot.lane.b32.xlu0 %v1045, 104
      %v3186 = vpop.permute.xlu0 %3185
      %3187 = vrot.lane.b32.xlu0 %v1046, 104
      %v3188 = vpop.permute.xlu0 %3187
      %3189 = vrot.lane.b32.xlu0 %v1047, 104
      %v3190 = vpop.permute.xlu0 %3189
      %v3192 = vsel %vm1064, %v3144, 0
      %v3195 = vsel %vm1064, %v3146, 0
      %v3198 = vsel %vm1064, %v3148, 0
      %v3201 = vsel %vm1064, %v3150, 0
      %v3204 = vsel %vm1064, %v3152, 0
      %v3207 = vsel %vm1064, %v3154, 0
      %v3210 = vsel %vm1064, %v3156, 0
      %v3213 = vsel %vm1064, %v3158, 0
      %v3216 = vsel %vm1064, %v3160, 0
      %v3219 = vsel %vm1064, %v3162, 0
      %v3222 = vsel %vm1064, %v3164, 0
      %v3225 = vsel %vm1064, %v3166, 0
      %v3228 = vsel %vm1064, %v3168, 0
      %v3231 = vsel %vm1064, %v3170, 0
      %v3234 = vsel %vm1064, %v3172, 0
      %v3237 = vsel %vm1064, %v3174, 0
      %v3240 = vsel %vm1064, %v3176, 0
      %v3243 = vsel %vm1064, %v3178, 0
      %v3246 = vsel %vm1064, %v3180, 0
      %v3249 = vsel %vm1064, %v3182, 0
      %v3252 = vsel %vm1064, %v3184, 0
      %v3255 = vsel %vm1064, %v3186, 0
      %v3258 = vsel %vm1064, %v3188, 0
      %v3261 = vsel %vm1064, %v3190, 0
      %3263 = vmatpush.bf16.xpose.msra.mxu0 %v3237
      %3264 = vmatpush.bf16.xpose.msra.mxu0 %v3234
      %3265 = vmatpush.bf16.xpose.msra.mxu0 %v3231
      %3266 = vmatpush.bf16.xpose.msra.mxu0 %v3228
      %3267 = vmatpush.bf16.xpose.msra.mxu0 %v3225
      %3268 = vmatpush.bf16.xpose.msra.mxu0 %v3222
      %3269 = vmatpush.bf16.xpose.msra.mxu0 %v3219
      %3270 = vmatpush.bf16.xpose.msra.mxu0 %v3216
      %3271 = vmatmul.bf16.gmra.mxu0 %v3192
      %v3272 = vpop.f32.mrf.mxu0
      %v3273 = vadd.f32 0.0, %v3272
      %v3274 = vpop.f32.mrf.mxu0
      %v3275 = vadd.f32 0.0, %v3274
      %3276 = vmatmul.bf16.gmra.mxu0 %v3195
      %v3277 = vpop.f32.mrf.mxu0
      %v3278 = vadd.f32 0.0, %v3277
      %v3279 = vpop.f32.mrf.mxu0
      %v3280 = vadd.f32 0.0, %v3279
      %3281 = vmatmul.bf16.gmra.mxu0 %v3198
      %v3282 = vpop.f32.mrf.mxu0
      %v3283 = vadd.f32 0.0, %v3282
      %v3284 = vpop.f32.mrf.mxu0
      %v3285 = vadd.f32 0.0, %v3284
      %3286 = vmatmul.bf16.gmra.mxu0 %v3201
      %v3287 = vpop.f32.mrf.mxu0
      %v3288 = vadd.f32 0.0, %v3287
      %v3289 = vpop.f32.mrf.mxu0
      %v3290 = vadd.f32 0.0, %v3289
      %3291 = vmatmul.bf16.gmra.mxu0 %v3204
      %v3292 = vpop.f32.mrf.mxu0
      %v3293 = vadd.f32 0.0, %v3292
      %v3294 = vpop.f32.mrf.mxu0
      %v3295 = vadd.f32 0.0, %v3294
      %3296 = vmatmul.bf16.gmra.mxu0 %v3207
      %v3297 = vpop.f32.mrf.mxu0
      %v3298 = vadd.f32 0.0, %v3297
      %v3299 = vpop.f32.mrf.mxu0
      %v3300 = vadd.f32 0.0, %v3299
      %3301 = vmatmul.bf16.gmra.mxu0 %v3210
      %v3302 = vpop.f32.mrf.mxu0
      %v3303 = vadd.f32 0.0, %v3302
      %v3304 = vpop.f32.mrf.mxu0
      %v3305 = vadd.f32 0.0, %v3304
      %3306 = vmatmul.bf16.gmra.mxu0 %v3213
      %v3307 = vpop.f32.mrf.mxu0
      %v3308 = vadd.f32 0.0, %v3307
      %v3309 = vpop.f32.mrf.mxu0
      %v3310 = vadd.f32 0.0, %v3309
      %3311 = vdwg.mxu0
      %3312 = vmatpush.bf16.xpose.msra.mxu0 %v3261
      %3313 = vmatpush.bf16.xpose.msra.mxu0 %v3258
      %3314 = vmatpush.bf16.xpose.msra.mxu0 %v3255
      %3315 = vmatpush.bf16.xpose.msra.mxu0 %v3252
      %3316 = vmatpush.bf16.xpose.msra.mxu0 %v3249
      %3317 = vmatpush.bf16.xpose.msra.mxu0 %v3246
      %3318 = vmatpush.bf16.xpose.msra.mxu0 %v3243
      %3319 = vmatpush.bf16.xpose.msra.mxu0 %v3240
      %3320 = vmatmul.bf16.gmra.mxu0 %v3192
      %v3321 = vpop.f32.mrf.mxu0
      %v3322 = vadd.f32 0.0, %v3321
      %v3323 = vpop.f32.mrf.mxu0
      %v3324 = vadd.f32 0.0, %v3323
      %3325 = vmatmul.bf16.gmra.mxu0 %v3195
      %v3326 = vpop.f32.mrf.mxu0
      %v3327 = vadd.f32 0.0, %v3326
      %v3328 = vpop.f32.mrf.mxu0
      %v3329 = vadd.f32 0.0, %v3328
      %3330 = vmatmul.bf16.gmra.mxu0 %v3198
      %v3331 = vpop.f32.mrf.mxu0
      %v3332 = vadd.f32 0.0, %v3331
      %v3333 = vpop.f32.mrf.mxu0
      %v3334 = vadd.f32 0.0, %v3333
      %3335 = vmatmul.bf16.gmra.mxu0 %v3201
      %v3336 = vpop.f32.mrf.mxu0
      %v3337 = vadd.f32 0.0, %v3336
      %v3338 = vpop.f32.mrf.mxu0
      %v3339 = vadd.f32 0.0, %v3338
      %3340 = vmatmul.bf16.gmra.mxu0 %v3204
      %v3341 = vpop.f32.mrf.mxu0
      %v3342 = vadd.f32 0.0, %v3341
      %v3343 = vpop.f32.mrf.mxu0
      %v3344 = vadd.f32 0.0, %v3343
      %3345 = vmatmul.bf16.gmra.mxu0 %v3207
      %v3346 = vpop.f32.mrf.mxu0
      %v3347 = vadd.f32 0.0, %v3346
      %v3348 = vpop.f32.mrf.mxu0
      %v3349 = vadd.f32 0.0, %v3348
      %3350 = vmatmul.bf16.gmra.mxu0 %v3210
      %v3351 = vpop.f32.mrf.mxu0
      %v3352 = vadd.f32 0.0, %v3351
      %v3353 = vpop.f32.mrf.mxu0
      %v3354 = vadd.f32 0.0, %v3353
      %3355 = vmatmul.bf16.gmra.mxu0 %v3213
      %v3356 = vpop.f32.mrf.mxu0
      %v3357 = vadd.f32 0.0, %v3356
      %v3358 = vpop.f32.mrf.mxu0
      %v3359 = vadd.f32 0.0, %v3358
      %3360 = vdwg.mxu0
      %v3361 = vmul.f32 %v3273, 0.35355338
      %v3362 = vmul.f32 %v3322, 0.35355338
      %v3363 = vmul.f32 %v3275, 0.35355338
      %v3364 = vmul.f32 %v3324, 0.35355338
      %v3365 = vmul.f32 %v3278, 0.35355338
      %v3366 = vmul.f32 %v3327, 0.35355338
      %v3367 = vmul.f32 %v3280, 0.35355338
      %v3368 = vmul.f32 %v3329, 0.35355338
      %v3369 = vmul.f32 %v3283, 0.35355338
      %v3370 = vmul.f32 %v3332, 0.35355338
      %v3371 = vmul.f32 %v3285, 0.35355338
      %v3372 = vmul.f32 %v3334, 0.35355338
      %v3373 = vmul.f32 %v3288, 0.35355338
      %v3374 = vmul.f32 %v3337, 0.35355338
      %v3375 = vmul.f32 %v3290, 0.35355338
      %v3376 = vmul.f32 %v3339, 0.35355338
      %v3377 = vmul.f32 %v3293, 0.35355338
      %v3378 = vmul.f32 %v3342, 0.35355338
      %v3379 = vmul.f32 %v3295, 0.35355338
      %v3380 = vmul.f32 %v3344, 0.35355338
      %v3381 = vmul.f32 %v3298, 0.35355338
      %v3382 = vmul.f32 %v3347, 0.35355338
      %v3383 = vmul.f32 %v3300, 0.35355338
      %v3384 = vmul.f32 %v3349, 0.35355338
      %v3385 = vmul.f32 %v3303, 0.35355338
      %v3386 = vmul.f32 %v3352, 0.35355338
      %v3387 = vmul.f32 %v3305, 0.35355338
      %v3388 = vmul.f32 %v3354, 0.35355338
      %v3389 = vmul.f32 %v3308, 0.35355338
      %v3390 = vmul.f32 %v3357, 0.35355338
      %v3391 = vmul.f32 %v3310, 0.35355338
      %v3392 = vmul.f32 %v3359, 0.35355338
      %v3393 = vmax.f32 %v3361, %v3362
      %3394 = vmax.xlane.f32.xlu0 %v3393
      %v3395 = vpop.xlane.xlu0 %3394
      %v3396 = vmax.f32 %v3363, %v3364
      %3397 = vmax.xlane.f32.xlu0 %v3396
      %v3398 = vpop.xlane.xlu0 %3397
      %v3399 = vmax.f32 %v3365, %v3366
      %3400 = vmax.xlane.f32.xlu0 %v3399
      %v3401 = vpop.xlane.xlu0 %3400
      %v3402 = vmax.f32 %v3367, %v3368
      %3403 = vmax.xlane.f32.xlu0 %v3402
      %v3404 = vpop.xlane.xlu0 %3403
      %v3405 = vmax.f32 %v3369, %v3370
      %3406 = vmax.xlane.f32.xlu0 %v3405
      %v3407 = vpop.xlane.xlu0 %3406
      %v3408 = vmax.f32 %v3371, %v3372
      %3409 = vmax.xlane.f32.xlu0 %v3408
      %v3410 = vpop.xlane.xlu0 %3409
      %v3411 = vmax.f32 %v3373, %v3374
      %3412 = vmax.xlane.f32.xlu0 %v3411
      %v3413 = vpop.xlane.xlu0 %3412
      %v3414 = vmax.f32 %v3375, %v3376
      %3415 = vmax.xlane.f32.xlu0 %v3414
      %v3416 = vpop.xlane.xlu0 %3415
      %v3417 = vmax.f32 %v3377, %v3378
      %3418 = vmax.xlane.f32.xlu0 %v3417
      %v3419 = vpop.xlane.xlu0 %3418
      %v3420 = vmax.f32 %v3379, %v3380
      %3421 = vmax.xlane.f32.xlu0 %v3420
      %v3422 = vpop.xlane.xlu0 %3421
      %v3423 = vmax.f32 %v3381, %v3382
      %3424 = vmax.xlane.f32.xlu0 %v3423
      %v3425 = vpop.xlane.xlu0 %3424
      %v3426 = vmax.f32 %v3383, %v3384
      %3427 = vmax.xlane.f32.xlu0 %v3426
      %v3428 = vpop.xlane.xlu0 %3427
      %v3429 = vmax.f32 %v3385, %v3386
      %3430 = vmax.xlane.f32.xlu0 %v3429
      %v3431 = vpop.xlane.xlu0 %3430
      %v3432 = vmax.f32 %v3387, %v3388
      %3433 = vmax.xlane.f32.xlu0 %v3432
      %v3434 = vpop.xlane.xlu0 %3433
      %v3435 = vmax.f32 %v3389, %v3390
      %3436 = vmax.xlane.f32.xlu0 %v3435
      %v3437 = vpop.xlane.xlu0 %3436
      %v3438 = vmax.f32 %v3391, %v3392
      %3439 = vmax.xlane.f32.xlu0 %v3438
      %v3440 = vpop.xlane.xlu0 %3439
      %v3441 = vsub.f32 %v3361, %v3395
      %v3442 = vsub.f32 %v3362, %v3395
      %v3443 = vsub.f32 %v3363, %v3398
      %v3444 = vsub.f32 %v3364, %v3398
      %v3445 = vsub.f32 %v3365, %v3401
      %v3446 = vsub.f32 %v3366, %v3401
      %v3447 = vsub.f32 %v3367, %v3404
      %v3448 = vsub.f32 %v3368, %v3404
      %v3449 = vsub.f32 %v3369, %v3407
      %v3450 = vsub.f32 %v3370, %v3407
      %v3451 = vsub.f32 %v3371, %v3410
      %v3452 = vsub.f32 %v3372, %v3410
      %v3453 = vsub.f32 %v3373, %v3413
      %v3454 = vsub.f32 %v3374, %v3413
      %v3455 = vsub.f32 %v3375, %v3416
      %v3456 = vsub.f32 %v3376, %v3416
      %v3457 = vsub.f32 %v3377, %v3419
      %v3458 = vsub.f32 %v3378, %v3419
      %v3459 = vsub.f32 %v3379, %v3422
      %v3460 = vsub.f32 %v3380, %v3422
      %v3461 = vsub.f32 %v3381, %v3425
      %v3462 = vsub.f32 %v3382, %v3425
      %v3463 = vsub.f32 %v3383, %v3428
      %v3464 = vsub.f32 %v3384, %v3428
      %v3465 = vsub.f32 %v3385, %v3431
      %v3466 = vsub.f32 %v3386, %v3431
      %v3467 = vsub.f32 %v3387, %v3434
      %v3468 = vsub.f32 %v3388, %v3434
      %v3469 = vsub.f32 %v3389, %v3437
      %v3470 = vsub.f32 %v3390, %v3437
      %v3471 = vsub.f32 %v3391, %v3440
      %v3472 = vsub.f32 %v3392, %v3440
      %v3473 = vmul.f32 %v3441, 1.442695
      %v3474 = vpow.pop %v3473
      %v3475 = vmul.f32 %v3442, 1.442695
      %v3476 = vpow.pop %v3475
      %v3477 = vmul.f32 %v3443, 1.442695
      %v3478 = vpow.pop %v3477
      %v3479 = vmul.f32 %v3444, 1.442695
      %v3480 = vpow.pop %v3479
      %v3481 = vmul.f32 %v3445, 1.442695
      %v3482 = vpow.pop %v3481
      %v3483 = vmul.f32 %v3446, 1.442695
      %v3484 = vpow.pop %v3483
      %v3485 = vmul.f32 %v3447, 1.442695
      %v3486 = vpow.pop %v3485
      %v3487 = vmul.f32 %v3448, 1.442695
      %v3488 = vpow.pop %v3487
      %v3489 = vmul.f32 %v3449, 1.442695
      %v3490 = vpow.pop %v3489
      %v3491 = vmul.f32 %v3450, 1.442695
      %v3492 = vpow.pop %v3491
      %v3493 = vmul.f32 %v3451, 1.442695
      %v3494 = vpow.pop %v3493
      %v3495 = vmul.f32 %v3452, 1.442695
      %v3496 = vpow.pop %v3495
      %v3497 = vmul.f32 %v3453, 1.442695
      %v3498 = vpow.pop %v3497
      %v3499 = vmul.f32 %v3454, 1.442695
      %v3500 = vpow.pop %v3499
      %v3501 = vmul.f32 %v3455, 1.442695
      %v3502 = vpow.pop %v3501
      %v3503 = vmul.f32 %v3456, 1.442695
      %v3504 = vpow.pop %v3503
      %v3505 = vmul.f32 %v3457, 1.442695
      %v3506 = vpow.pop %v3505
      %v3507 = vmul.f32 %v3458, 1.442695
      %v3508 = vpow.pop %v3507
      %v3509 = vmul.f32 %v3459, 1.442695
      %v3510 = vpow.pop %v3509
      %v3511 = vmul.f32 %v3460, 1.442695
      %v3512 = vpow.pop %v3511
      %v3513 = vmul.f32 %v3461, 1.442695
      %v3514 = vpow.pop %v3513
      %v3515 = vmul.f32 %v3462, 1.442695
      %v3516 = vpow.pop %v3515
      %v3517 = vmul.f32 %v3463, 1.442695
      %v3518 = vpow.pop %v3517
      %v3519 = vmul.f32 %v3464, 1.442695
      %v3520 = vpow.pop %v3519
      %v3521 = vmul.f32 %v3465, 1.442695
      %v3522 = vpow.pop %v3521
      %v3523 = vmul.f32 %v3466, 1.442695
      %v3524 = vpow.pop %v3523
      %v3525 = vmul.f32 %v3467, 1.442695
      %v3526 = vpow.pop %v3525
      %v3527 = vmul.f32 %v3468, 1.442695
      %v3528 = vpow.pop %v3527
      %v3529 = vmul.f32 %v3469, 1.442695
      %v3530 = vpow.pop %v3529
      %v3531 = vmul.f32 %v3470, 1.442695
      %v3532 = vpow.pop %v3531
      %v3533 = vmul.f32 %v3471, 1.442695
      %v3534 = vpow.pop %v3533
      %v3535 = vmul.f32 %v3472, 1.442695
      %v3536 = vpow.pop %v3535
      %v3537 = vadd.f32 %v3474, %v3476
      %3538 = vadd.xlane.f32.xlu0 %v3537
      %v3539 = vpop.xlane.xlu0 %3538
      %v3540 = vadd.f32 %v3478, %v3480
      %3541 = vadd.xlane.f32.xlu0 %v3540
      %v3542 = vpop.xlane.xlu0 %3541
      %v3543 = vadd.f32 %v3482, %v3484
      %3544 = vadd.xlane.f32.xlu0 %v3543
      %v3545 = vpop.xlane.xlu0 %3544
      %v3546 = vadd.f32 %v3486, %v3488
      %3547 = vadd.xlane.f32.xlu0 %v3546
      %v3548 = vpop.xlane.xlu0 %3547
      %v3549 = vadd.f32 %v3490, %v3492
      %3550 = vadd.xlane.f32.xlu0 %v3549
      %v3551 = vpop.xlane.xlu0 %3550
      %v3552 = vadd.f32 %v3494, %v3496
      %3553 = vadd.xlane.f32.xlu0 %v3552
      %v3554 = vpop.xlane.xlu0 %3553
      %v3555 = vadd.f32 %v3498, %v3500
      %3556 = vadd.xlane.f32.xlu0 %v3555
      %v3557 = vpop.xlane.xlu0 %3556
      %v3558 = vadd.f32 %v3502, %v3504
      %3559 = vadd.xlane.f32.xlu0 %v3558
      %v3560 = vpop.xlane.xlu0 %3559
      %v3561 = vadd.f32 %v3506, %v3508
      %3562 = vadd.xlane.f32.xlu0 %v3561
      %v3563 = vpop.xlane.xlu0 %3562
      %v3564 = vadd.f32 %v3510, %v3512
      %3565 = vadd.xlane.f32.xlu0 %v3564
      %v3566 = vpop.xlane.xlu0 %3565
      %v3567 = vadd.f32 %v3514, %v3516
      %3568 = vadd.xlane.f32.xlu0 %v3567
      %v3569 = vpop.xlane.xlu0 %3568
      %v3570 = vadd.f32 %v3518, %v3520
      %3571 = vadd.xlane.f32.xlu0 %v3570
      %v3572 = vpop.xlane.xlu0 %3571
      %v3573 = vadd.f32 %v3522, %v3524
      %3574 = vadd.xlane.f32.xlu0 %v3573
      %v3575 = vpop.xlane.xlu0 %3574
      %v3576 = vadd.f32 %v3526, %v3528
      %3577 = vadd.xlane.f32.xlu0 %v3576
      %v3578 = vpop.xlane.xlu0 %3577
      %v3579 = vadd.f32 %v3530, %v3532
      %3580 = vadd.xlane.f32.xlu0 %v3579
      %v3581 = vpop.xlane.xlu0 %3580
      %v3582 = vadd.f32 %v3534, %v3536
      %3583 = vadd.xlane.f32.xlu0 %v3582
      %v3584 = vpop.xlane.xlu0 %3583
      %v3585 = vrcp.pop %v3539
      %v3586 = vrcp.pop %v3542
      %v3587 = vrcp.pop %v3545
      %v3588 = vrcp.pop %v3548
      %v3589 = vrcp.pop %v3551
      %v3590 = vrcp.pop %v3554
      %v3591 = vrcp.pop %v3557
      %v3592 = vrcp.pop %v3560
      %v3593 = vrcp.pop %v3563
      %v3594 = vrcp.pop %v3566
      %v3595 = vrcp.pop %v3569
      %v3596 = vrcp.pop %v3572
      %v3597 = vrcp.pop %v3575
      %v3598 = vrcp.pop %v3578
      %v3599 = vrcp.pop %v3581
      %v3600 = vrcp.pop %v3584
      %v3601 = vmul.f32 %v3474, %v3585
      %v3602 = vmul.f32 %v3476, %v3585
      %v3603 = vmul.f32 %v3478, %v3586
      %v3604 = vmul.f32 %v3480, %v3586
      %v3605 = vmul.f32 %v3482, %v3587
      %v3606 = vmul.f32 %v3484, %v3587
      %v3607 = vmul.f32 %v3486, %v3588
      %v3608 = vmul.f32 %v3488, %v3588
      %v3609 = vmul.f32 %v3490, %v3589
      %v3610 = vmul.f32 %v3492, %v3589
      %v3611 = vmul.f32 %v3494, %v3590
      %v3612 = vmul.f32 %v3496, %v3590
      %v3613 = vmul.f32 %v3498, %v3591
      %v3614 = vmul.f32 %v3500, %v3591
      %v3615 = vmul.f32 %v3502, %v3592
      %v3616 = vmul.f32 %v3504, %v3592
      %v3617 = vmul.f32 %v3506, %v3593
      %v3618 = vmul.f32 %v3508, %v3593
      %v3619 = vmul.f32 %v3510, %v3594
      %v3620 = vmul.f32 %v3512, %v3594
      %v3621 = vmul.f32 %v3514, %v3595
      %v3622 = vmul.f32 %v3516, %v3595
      %v3623 = vmul.f32 %v3518, %v3596
      %v3624 = vmul.f32 %v3520, %v3596
      %v3625 = vmul.f32 %v3522, %v3597
      %v3626 = vmul.f32 %v3524, %v3597
      %v3627 = vmul.f32 %v3526, %v3598
      %v3628 = vmul.f32 %v3528, %v3598
      %v3629 = vmul.f32 %v3530, %v3599
      %v3630 = vmul.f32 %v3532, %v3599
      %v3631 = vmul.f32 %v3534, %v3600
      %v3632 = vmul.f32 %v3536, %v3600
      %v3633 = vpack.c.bf16 %v3603, %v3601
      %v3634 = vpack.c.bf16 %v3604, %v3602
      %v3635 = vpack.c.bf16 %v3607, %v3605
      %v3636 = vpack.c.bf16 %v3608, %v3606
      %v3637 = vpack.c.bf16 %v3611, %v3609
      %v3638 = vpack.c.bf16 %v3612, %v3610
      %v3639 = vpack.c.bf16 %v3615, %v3613
      %v3640 = vpack.c.bf16 %v3616, %v3614
      %v3641 = vpack.c.bf16 %v3619, %v3617
      %v3642 = vpack.c.bf16 %v3620, %v3618
      %v3643 = vpack.c.bf16 %v3623, %v3621
      %v3644 = vpack.c.bf16 %v3624, %v3622
      %v3645 = vpack.c.bf16 %v3627, %v3625
      %v3646 = vpack.c.bf16 %v3628, %v3626
      %v3647 = vpack.c.bf16 %v3631, %v3629
      %v3648 = vpack.c.bf16 %v3632, %v3630
      %3649 = vrot.lane.b32.xlu0 %v1048, 104
      %v3650 = vpop.permute.xlu0 %3649
      %3651 = vrot.lane.b32.xlu0 %v1049, 104
      %v3652 = vpop.permute.xlu0 %3651
      %3653 = vrot.lane.b32.xlu0 %v1050, 104
      %v3654 = vpop.permute.xlu0 %3653
      %3655 = vrot.lane.b32.xlu0 %v1051, 104
      %v3656 = vpop.permute.xlu0 %3655
      %3657 = vrot.lane.b32.xlu0 %v1052, 104
      %v3658 = vpop.permute.xlu0 %3657
      %3659 = vrot.lane.b32.xlu0 %v1053, 104
      %v3660 = vpop.permute.xlu0 %3659
      %3661 = vrot.lane.b32.xlu0 %v1054, 104
      %v3662 = vpop.permute.xlu0 %3661
      %3663 = vrot.lane.b32.xlu0 %v1055, 104
      %v3664 = vpop.permute.xlu0 %3663
      %3665 = vrot.lane.b32.xlu0 %v1056, 104
      %v3666 = vpop.permute.xlu0 %3665
      %3667 = vrot.lane.b32.xlu0 %v1057, 104
      %v3668 = vpop.permute.xlu0 %3667
      %3669 = vrot.lane.b32.xlu0 %v1058, 104
      %v3670 = vpop.permute.xlu0 %3669
      %3671 = vrot.lane.b32.xlu0 %v1059, 104
      %v3672 = vpop.permute.xlu0 %3671
      %3673 = vrot.lane.b32.xlu0 %v1060, 104
      %v3674 = vpop.permute.xlu0 %3673
      %3675 = vrot.lane.b32.xlu0 %v1061, 104
      %v3676 = vpop.permute.xlu0 %3675
      %3677 = vrot.lane.b32.xlu0 %v1062, 104
      %v3678 = vpop.permute.xlu0 %3677
      %3679 = vrot.lane.b32.xlu0 %v1063, 104
      %v3680 = vpop.permute.xlu0 %3679
      %3697 = vmatpush.bf16.msra.mxu0 %v3664
      %3698 = vmatpush.bf16.msra.mxu0 %v3662
      %3699 = vmatpush.bf16.msra.mxu0 %v3660
      %3700 = vmatpush.bf16.msra.mxu0 %v3658
      %3701 = vmatpush.bf16.msra.mxu0 %v3656
      %3702 = vmatpush.bf16.msra.mxu0 %v3654
      %3703 = vmatpush.bf16.msra.mxu0 %v3652
      %3704 = vmatpush.bf16.msra.mxu0 %v3650
      %3705 = vmatmul.bf16.gmra.mxu0 %v3633
      %v3706 = vpop.f32.mrf.mxu0
      %v3707 = vadd.f32 0.0, %v3706
      %v3708 = vpop.f32.mrf.mxu0
      %v3709 = vadd.f32 0.0, %v3708
      %3710 = vmatmul.bf16.gmra.mxu0 %v3635
      %v3711 = vpop.f32.mrf.mxu0
      %v3712 = vadd.f32 0.0, %v3711
      %v3713 = vpop.f32.mrf.mxu0
      %v3714 = vadd.f32 0.0, %v3713
      %3715 = vmatmul.bf16.gmra.mxu0 %v3637
      %v3716 = vpop.f32.mrf.mxu0
      %v3717 = vadd.f32 0.0, %v3716
      %v3718 = vpop.f32.mrf.mxu0
      %v3719 = vadd.f32 0.0, %v3718
      %3720 = vmatmul.bf16.gmra.mxu0 %v3639
      %v3721 = vpop.f32.mrf.mxu0
      %v3722 = vadd.f32 0.0, %v3721
      %v3723 = vpop.f32.mrf.mxu0
      %v3724 = vadd.f32 0.0, %v3723
      %3725 = vmatmul.bf16.gmra.mxu0 %v3641
      %v3726 = vpop.f32.mrf.mxu0
      %v3727 = vadd.f32 0.0, %v3726
      %v3728 = vpop.f32.mrf.mxu0
      %v3729 = vadd.f32 0.0, %v3728
      %3730 = vmatmul.bf16.gmra.mxu0 %v3643
      %v3731 = vpop.f32.mrf.mxu0
      %v3732 = vadd.f32 0.0, %v3731
      %v3733 = vpop.f32.mrf.mxu0
      %v3734 = vadd.f32 0.0, %v3733
      %3735 = vmatmul.bf16.gmra.mxu0 %v3645
      %v3736 = vpop.f32.mrf.mxu0
      %v3737 = vadd.f32 0.0, %v3736
      %v3738 = vpop.f32.mrf.mxu0
      %v3739 = vadd.f32 0.0, %v3738
      %3740 = vmatmul.bf16.gmra.mxu0 %v3647
      %v3741 = vpop.f32.mrf.mxu0
      %v3742 = vadd.f32 0.0, %v3741
      %v3743 = vpop.f32.mrf.mxu0
      %v3744 = vadd.f32 0.0, %v3743
      %3745 = vdwg.mxu0
      %3746 = vmatpush.bf16.msra.mxu0 %v3680
      %3747 = vmatpush.bf16.msra.mxu0 %v3678
      %3748 = vmatpush.bf16.msra.mxu0 %v3676
      %3749 = vmatpush.bf16.msra.mxu0 %v3674
      %3750 = vmatpush.bf16.msra.mxu0 %v3672
      %3751 = vmatpush.bf16.msra.mxu0 %v3670
      %3752 = vmatpush.bf16.msra.mxu0 %v3668
      %3753 = vmatpush.bf16.msra.mxu0 %v3666
      %3754 = vmatmul.bf16.gmra.mxu0 %v3634
      %v3755 = vpop.f32.mrf.mxu0
      %v3756 = vadd.f32 %v3707, %v3755
      %v3757 = vpop.f32.mrf.mxu0
      %v3758 = vadd.f32 %v3709, %v3757
      %3759 = vmatmul.bf16.gmra.mxu0 %v3636
      %v3760 = vpop.f32.mrf.mxu0
      %v3761 = vadd.f32 %v3712, %v3760
      %v3762 = vpop.f32.mrf.mxu0
      %v3763 = vadd.f32 %v3714, %v3762
      %3764 = vmatmul.bf16.gmra.mxu0 %v3638
      %v3765 = vpop.f32.mrf.mxu0
      %v3766 = vadd.f32 %v3717, %v3765
      %v3767 = vpop.f32.mrf.mxu0
      %v3768 = vadd.f32 %v3719, %v3767
      %3769 = vmatmul.bf16.gmra.mxu0 %v3640
      %v3770 = vpop.f32.mrf.mxu0
      %v3771 = vadd.f32 %v3722, %v3770
      %v3772 = vpop.f32.mrf.mxu0
      %v3773 = vadd.f32 %v3724, %v3772
      %3774 = vmatmul.bf16.gmra.mxu0 %v3642
      %v3775 = vpop.f32.mrf.mxu0
      %v3776 = vadd.f32 %v3727, %v3775
      %v3777 = vpop.f32.mrf.mxu0
      %v3778 = vadd.f32 %v3729, %v3777
      %3779 = vmatmul.bf16.gmra.mxu0 %v3644
      %v3780 = vpop.f32.mrf.mxu0
      %v3781 = vadd.f32 %v3732, %v3780
      %v3782 = vpop.f32.mrf.mxu0
      %v3783 = vadd.f32 %v3734, %v3782
      %3784 = vmatmul.bf16.gmra.mxu0 %v3646
      %v3785 = vpop.f32.mrf.mxu0
      %v3786 = vadd.f32 %v3737, %v3785
      %v3787 = vpop.f32.mrf.mxu0
      %v3788 = vadd.f32 %v3739, %v3787
      %3789 = vmatmul.bf16.gmra.mxu0 %v3648
      %v3790 = vpop.f32.mrf.mxu0
      %v3791 = vadd.f32 %v3742, %v3790
      %v3792 = vpop.f32.mrf.mxu0
      %v3793 = vadd.f32 %v3744, %v3792
      %3794 = vdwg.mxu0
      %3811 = vrot.lane.b32.xlu0 %v3756, 24
      %v3812 = vpop.permute.xlu0 %3811
      %3813 = vrot.lane.b32.xlu0 %v3758, 24
      %v3814 = vpop.permute.xlu0 %3813
      %3815 = vrot.lane.b32.xlu0 %v3761, 24
      %v3816 = vpop.permute.xlu0 %3815
      %3817 = vrot.lane.b32.xlu0 %v3763, 24
      %v3818 = vpop.permute.xlu0 %3817
      %3819 = vrot.lane.b32.xlu0 %v3766, 24
      %v3820 = vpop.permute.xlu0 %3819
      %3821 = vrot.lane.b32.xlu0 %v3768, 24
      %v3822 = vpop.permute.xlu0 %3821
      %3823 = vrot.lane.b32.xlu0 %v3771, 24
      %v3824 = vpop.permute.xlu0 %3823
      %3825 = vrot.lane.b32.xlu0 %v3773, 24
      %v3826 = vpop.permute.xlu0 %3825
      %3827 = vrot.lane.b32.xlu0 %v3776, 24
      %v3828 = vpop.permute.xlu0 %3827
      %3829 = vrot.lane.b32.xlu0 %v3778, 24
      %v3830 = vpop.permute.xlu0 %3829
      %3831 = vrot.lane.b32.xlu0 %v3781, 24
      %v3832 = vpop.permute.xlu0 %3831
      %3833 = vrot.lane.b32.xlu0 %v3783, 24
      %v3834 = vpop.permute.xlu0 %3833
      %3835 = vrot.lane.b32.xlu0 %v3786, 24
      %v3836 = vpop.permute.xlu0 %3835
      %3837 = vrot.lane.b32.xlu0 %v3788, 24
      %v3838 = vpop.permute.xlu0 %3837
      %3839 = vrot.lane.b32.xlu0 %v3791, 24
      %v3840 = vpop.permute.xlu0 %3839
      %3841 = vrot.lane.b32.xlu0 %v3793, 24
      %v3842 = vpop.permute.xlu0 %3841
      %vm3859 = vcmask 261312
      %3860 = vst.msk [vmem:[#allocation2] sm:$0xff] %vm3859, %v3812
      %3861 = vst.msk [vmem:[#allocation2 + $0x8] sm:$0xff] %vm3859, %v3814
      %3862 = vst.msk [vmem:[#allocation2 + $0x10] sm:$0xff] %vm3859, %v3816
      %3863 = vst.msk [vmem:[#allocation2 + $0x18] sm:$0xff] %vm3859, %v3818
      %3864 = vst.msk [vmem:[#allocation2 + $0x20] sm:$0xff] %vm3859, %v3820
      %3865 = vst.msk [vmem:[#allocation2 + $0x28] sm:$0xff] %vm3859, %v3822
      %3866 = vst.msk [vmem:[#allocation2 + $0x30] sm:$0xff] %vm3859, %v3824
      %3867 = vst.msk [vmem:[#allocation2 + $0x38] sm:$0xff] %vm3859, %v3826
      %3868 = vst.msk [vmem:[#allocation2 + $0x40] sm:$0xff] %vm3859, %v3828
      %3869 = vst.msk [vmem:[#allocation2 + $0x48] sm:$0xff] %vm3859, %v3830
      %3870 = vst.msk [vmem:[#allocation2 + $0x50] sm:$0xff] %vm3859, %v3832
      %3871 = vst.msk [vmem:[#allocation2 + $0x58] sm:$0xff] %vm3859, %v3834
      %3872 = vst.msk [vmem:[#allocation2 + $0x60] sm:$0xff] %vm3859, %v3836
      %3873 = vst.msk [vmem:[#allocation2 + $0x68] sm:$0xff] %vm3859, %v3838
      %3874 = vst.msk [vmem:[#allocation2 + $0x70] sm:$0xff] %vm3859, %v3840
      %3875 = vst.msk [vmem:[#allocation2 + $0x78] sm:$0xff] %vm3859, %v3842
      %v3876 = vld [vmem:[#allocation2] sm:$0xff]
      %v3877 = vld [vmem:[#allocation2 + $0x8] sm:$0xff]
      %v3878 = vld [vmem:[#allocation2 + $0x10] sm:$0xff]
      %v3879 = vld [vmem:[#allocation2 + $0x18] sm:$0xff]
      %v3880 = vld [vmem:[#allocation2 + $0x20] sm:$0xff]
      %v3881 = vld [vmem:[#allocation2 + $0x28] sm:$0xff]
      %v3882 = vld [vmem:[#allocation2 + $0x30] sm:$0xff]
      %v3883 = vld [vmem:[#allocation2 + $0x38] sm:$0xff]
      %v3884 = vld [vmem:[#allocation2 + $0x40] sm:$0xff]
      %v3885 = vld [vmem:[#allocation2 + $0x48] sm:$0xff]
      %v3886 = vld [vmem:[#allocation2 + $0x50] sm:$0xff]
      %v3887 = vld [vmem:[#allocation2 + $0x58] sm:$0xff]
      %v3888 = vld [vmem:[#allocation2 + $0x60] sm:$0xff]
      %v3889 = vld [vmem:[#allocation2 + $0x68] sm:$0xff]
      %v3890 = vld [vmem:[#allocation2 + $0x70] sm:$0xff]
      %v3891 = vld [vmem:[#allocation2 + $0x78] sm:$0xff]
      %v3892 = vpack.c.bf16 %v3877, %v3876
      %v3893 = vpack.c.bf16 %v3879, %v3878
      %v3894 = vpack.c.bf16 %v3881, %v3880
      %v3895 = vpack.c.bf16 %v3883, %v3882
      %v3896 = vpack.c.bf16 %v3885, %v3884
      %v3897 = vpack.c.bf16 %v3887, %v3886
      %v3898 = vpack.c.bf16 %v3889, %v3888
      %v3899 = vpack.c.bf16 %v3891, %v3890
      %v3900 = vld [vmem:[%s10] sm:$0xf]
      %v3901 = vld [vmem:[%s10 + $0x4] sm:$0xf]
      %v3902 = vld [vmem:[%s10 + $0x8] sm:$0xf]
      %v3903 = vld [vmem:[%s10 + $0xc] sm:$0xf]
      %v3904 = vld [vmem:[%s11] sm:$0x1]
      %v3906 = vperm.slane %v3904, 0
      %v3912 = vunpack.c.l.b16 %v3900
      %v3913 = vunpack.c.l.b16 %v3901
      %v3914 = vunpack.c.l.b16 %v3902
      %v3915 = vunpack.c.l.b16 %v3903
      %v3916 = vpack.c.b16 %v3913, %v3912
      %v3917 = vpack.c.b16 %v3915, %v3914
      %v3921 = vsel %vm684, %v3892, 0
      %v3924 = vsel %vm684, %v3893, 0
      %v3927 = vsel %vm684, %v3894, 0
      %v3930 = vsel %vm684, %v3895, 0
      %v3933 = vsel %vm684, %v3896, 0
      %v3936 = vsel %vm684, %v3897, 0
      %v3939 = vsel %vm684, %v3898, 0
      %v3942 = vsel %vm684, %v3899, 0
      %3944 = vmatpush.bf16.msra.mxu0 0
      %3945 = vmatpush.bf16.msra.mxu0 0
      %3946 = vmatpush.bf16.msra.mxu0 0
      %3947 = vmatpush.bf16.msra.mxu0 0
      %3948 = vmatpush.bf16.msra.mxu0 0
      %3949 = vmatpush.bf16.msra.mxu0 0
      %3950 = vmatpush.bf16.msra.mxu0 %v3917
      %3951 = vmatpush.bf16.msra.mxu0 %v3916
      %3952 = vmatmul.bf16.gmra.mxu0 %v3921
      %v3953 = vpop.f32.mrf.mxu0
      %v3954 = vadd.f32 %v3906, %v3953
      %v3955 = vpop.f32.mrf.mxu0
      %v3956 = vadd.f32 %v3906, %v3955
      %3957 = vmatmul.bf16.gmra.mxu0 %v3924
      %v3958 = vpop.f32.mrf.mxu0
      %v3959 = vadd.f32 %v3906, %v3958
      %v3960 = vpop.f32.mrf.mxu0
      %v3961 = vadd.f32 %v3906, %v3960
      %3962 = vmatmul.bf16.gmra.mxu0 %v3927
      %v3963 = vpop.f32.mrf.mxu0
      %v3964 = vadd.f32 %v3906, %v3963
      %v3965 = vpop.f32.mrf.mxu0
      %v3966 = vadd.f32 %v3906, %v3965
      %3967 = vmatmul.bf16.gmra.mxu0 %v3930
      %v3968 = vpop.f32.mrf.mxu0
      %v3969 = vadd.f32 %v3906, %v3968
      %v3970 = vpop.f32.mrf.mxu0
      %v3971 = vadd.f32 %v3906, %v3970
      %3972 = vmatmul.bf16.gmra.mxu0 %v3933
      %v3973 = vpop.f32.mrf.mxu0
      %v3974 = vadd.f32 %v3906, %v3973
      %v3975 = vpop.f32.mrf.mxu0
      %v3976 = vadd.f32 %v3906, %v3975
      %3977 = vmatmul.bf16.gmra.mxu0 %v3936
      %v3978 = vpop.f32.mrf.mxu0
      %v3979 = vadd.f32 %v3906, %v3978
      %v3980 = vpop.f32.mrf.mxu0
      %v3981 = vadd.f32 %v3906, %v3980
      %3982 = vmatmul.bf16.gmra.mxu0 %v3939
      %v3983 = vpop.f32.mrf.mxu0
      %v3984 = vadd.f32 %v3906, %v3983
      %v3985 = vpop.f32.mrf.mxu0
      %v3986 = vadd.f32 %v3906, %v3985
      %3987 = vmatmul.bf16.gmra.mxu0 %v3942
      %v3988 = vpop.f32.mrf.mxu0
      %v3989 = vadd.f32 %v3906, %v3988
      %v3990 = vpop.f32.mrf.mxu0
      %v3991 = vadd.f32 %v3906, %v3990
      %3992 = vdwg.mxu0
      %3993 = vst.msk [vmem:[%s493] sm:$0xff] %vm684, %v3954
      %3994 = vst.msk [vmem:[%s493 + $0x8] sm:$0xff] %vm684, %v3956
      %3995 = vst.msk [vmem:[%s493 + $0x10] sm:$0xff] %vm684, %v3959
      %3996 = vst.msk [vmem:[%s493 + $0x18] sm:$0xff] %vm684, %v3961
      %3997 = vst.msk [vmem:[%s493 + $0x20] sm:$0xff] %vm684, %v3964
      %3998 = vst.msk [vmem:[%s493 + $0x28] sm:$0xff] %vm684, %v3966
      %3999 = vst.msk [vmem:[%s493 + $0x30] sm:$0xff] %vm684, %v3969
      %4000 = vst.msk [vmem:[%s493 + $0x38] sm:$0xff] %vm684, %v3971
      %4001 = vst.msk [vmem:[%s493 + $0x40] sm:$0xff] %vm684, %v3974
      %4002 = vst.msk [vmem:[%s493 + $0x48] sm:$0xff] %vm684, %v3976
      %4003 = vst.msk [vmem:[%s493 + $0x50] sm:$0xff] %vm684, %v3979
      %4004 = vst.msk [vmem:[%s493 + $0x58] sm:$0xff] %vm684, %v3981
      %4005 = vst.msk [vmem:[%s493 + $0x60] sm:$0xff] %vm684, %v3984
      %4006 = vst.msk [vmem:[%s493 + $0x68] sm:$0xff] %vm684, %v3986
      %4007 = vst.msk [vmem:[%s493 + $0x70] sm:$0xff] %vm684, %v3989
      %4008 = vst.msk [vmem:[%s493 + $0x78] sm:$0xff] %vm684, %v3991
      %s4009 = smul.u32 16, %s28
      %p4010 = scmp.lt.s32.totalorder %s27, 1
      %s4011 = scalar_select %p4010, %s27, 1
      %p4012 = scmp.lt.s32.totalorder %s4009, 31
      %s4013 = scalar_select %p4012, %s4009, 31
      %s4014 = smul.addr %s4011, 32
      %s4015 = sadd.s32 %s4013, %s4014
      %s4016 = smul.addr %s4015, 8
      %s4017 = scalar_lea.vmem %s12, %s4016
      // Predicated region
      $region69: #{tpu_custom_call.1} parent=67 // pred_check
        %p4018 = pneg %p324
      $region70: #{tpu_custom_call.1} parent=67 // pred_check_branch
        %4020 = sbr.rel (%p4018) target = $region72
      $region71: #{tpu_custom_call.1} parent=67 // pred_region
        %s4021 = smul.u32 16, %s28
      $region72: #{tpu_custom_call.1} parent=67 // pred_fallthru
        _
    $region68: #{tpu_custom_call.1} parent=5 // pred_fallthru
      _
    %p4022 = scmp.le.s32.totalorder 2, %s18
    // Predicated region
    $region73: #{tpu_custom_call.1} parent=5 // pred_check
      %p4023 = pneg %p4022
    $region74: #{tpu_custom_call.1} parent=5 // pred_check_branch
      %4025 = sbr.rel (%p4023) target = $region76
    $region75: #{tpu_custom_call.1} parent=5 // pred_region
      %s4026 = ssub.s32 %s18, 2
      // Predicated region
      $region77: #{tpu_custom_call.1} parent=75 // pred_check
        %p4027 = pneg %p330
      $region78: #{tpu_custom_call.1} parent=75 // pred_check_branch
        %4029 = sbr.rel (%p4027) target = $region80
      $region79: #{tpu_custom_call.1} parent=75 // pred_region
        %s4030 = smul.u32 16, %s30
        %p4031 = scmp.lt.s32.totalorder %s29, 1
        %s4032 = scalar_select %p4031, %s29, 1
        %p4033 = scmp.lt.s32.totalorder %s4030, 31
        %s4034 = scalar_select %p4033, %s4030, 31
        %s4035 = smul.addr %s4032, 32
        %s4036 = sadd.s32 %s4034, %s4035
        %s4037 = smul.addr %s4036, 8
        %s4038 = scalar_lea.vmem %s12, %s4037
      $region80: #{tpu_custom_call.1} parent=75 // pred_fallthru
        _
    $region76: #{tpu_custom_call.1} parent=5 // pred_fallthru
      _
  $region6: #{tpu_custom_call.1} parent=0 // loop_footer
    %s22 = sadd.s32 1, %s18
  $region7: #{tpu_custom_call.1} parent=0 // loop_footer_branch
    %17 = sbr.rel target = $region3
  $region8: #{tpu_custom_call.1} parent=0 // loop_exit
    _

</llo_original>
